<compile_context>
chip_gen: v7x
topology: tpu7x:2x2x1
jax: 0.10.0
libtpu: 0.0.40
codegen_flags: <defaults>
</compile_context>

<pallas_src>
import functools

import jax
import jax.numpy as jnp
from jax.experimental import pallas as pl
from jax.experimental.pallas import tpu as pltpu


_NEG_INF = -1e30            # additive mask value (kept in f32 end-to-end)
_VMEM_CAP = 56 << 20        # <= 56 MiB: safe on v5e/v6e (128 MiB) and v7x (64 MiB)
_RESIDENT_FFN_WEIGHT_BYTES = 24 << 20   # keep FFN weights fully resident below this


# ----------------------------------------------------------------------------
# Small helpers
# ----------------------------------------------------------------------------
def _round_up(x, m):
    return ((x + m - 1) // m) * m


def _token_tiling(n, target=512):
    """Token tile size and padded token count (tile-aligned, (8, .)-friendly)."""
    if n >= target:
        return target, _round_up(n, target)
    t = _round_up(max(n, 8), 8)
    return t, t


def _q_tile(s, target=256):
    for t in (target, 128, 64, 32, 16, 8):
        if t <= s and s % t == 0:
            return t
    return s


def _kv_tile(s, target=256):
    # tk is the lane dim of the mask / padding-bias blocks -> multiple of 128 or S.
    for t in (target, 128):
        if t <= s and s % t == 0:
            return t
    return s


def _f_tile(f, target=512):
    for t in (target, 256, 128):
        if t <= f and f % t == 0:
            return t
    return f


def _compiler_params(semantics, est_bytes):
    limit = int(min(max(est_bytes * 3 // 2 + (8 << 20), 32 << 20), _VMEM_CAP))
    return pltpu.CompilerParams(dimension_semantics=semantics,
                                vmem_limit_bytes=limit)


# Single-buffering for constant-index (resident) blocks, probed once so the
# script still runs on JAX builds without BlockSpec.pipeline_mode support.
_SINGLE_BUFFER = None


def _resident_mode():
    global _SINGLE_BUFFER
    if _SINGLE_BUFFER is None:
        def _copy(x_ref, o_ref):
            o_ref[...] = x_ref[...]
        try:
            spec = pl.BlockSpec((8, 128), lambda i: (0, 0),
                                pipeline_mode=pl.Buffered(1))
            jax.block_until_ready(pl.pallas_call(
                _copy,
                out_shape=jax.ShapeDtypeStruct((8, 128), jnp.float32),
                grid=(1,),
                in_specs=[spec],
                out_specs=pl.BlockSpec((8, 128), lambda i: (0, 0)),
            )(jnp.zeros((8, 128), jnp.float32)))
            _SINGLE_BUFFER = pl.Buffered(1)
        except Exception:  # pragma: no cover - capability fallback
            _SINGLE_BUFFER = False
    return _SINGLE_BUFFER or None


def _block_spec(shape, index_map, resident=False):
    mode = _resident_mode() if resident else None
    if mode is not None:
        return pl.BlockSpec(shape, index_map, pipeline_mode=mode)
    return pl.BlockSpec(shape, index_map)


def _rep(shape):
    """Constant-index block: whole array VMEM-resident, single-buffered if possible."""
    return _block_spec(shape, lambda *_: (0,) * len(shape), resident=True)


# ----------------------------------------------------------------------------
# Kernels
# ----------------------------------------------------------------------------
def _qkv_kernel(src_ref, pos_ref, wqk_ref, wv_ref, bqk_ref, bv_ref,
                q_ref, k_ref, v_ref):
    cdt = wqk_ref.dtype                                   # bf16 compute dtype
    x = src_ref[...]                                      # f32 tokens
    xqk = (x + pos_ref[...]).astype(cdt)                  # fused src + pos
    qk = jnp.dot(xqk, wqk_ref[...],
                 preferred_element_type=jnp.float32) + bqk_ref[...]
    v = jnp.dot(x.astype(cdt), wv_ref[...],
                preferred_element_type=jnp.float32) + bv_ref[...]
    e = q_ref.shape[-1]
    q_ref[...] = qk[:, :e].astype(q_ref.dtype)            # softmax scale pre-folded
    k_ref[...] = qk[:, e:].astype(k_ref.dtype)
    v_ref[...] = v.astype(v_ref.dtype)


def _flash_attn_kernel(mask_ref, kp_ref, q_ref, k_ref, v_ref, o_ref,
                       m_sc, l_sc, acc_sc, *, num_heads):
    ki = pl.program_id(2)

    @pl.when(ki == 0)
    def _init():
        m_sc[...] = jnp.full_like(m_sc, -jnp.inf)
        l_sc[...] = jnp.zeros_like(l_sc)
        acc_sc[...] = jnp.zeros_like(acc_sc)

    e = q_ref.shape[-1]
    dh = e // num_heads
    q = q_ref[0]                                          # (tq, E) bf16, pre-scaled
    k = k_ref[0]                                          # (tk, E) bf16
    v = v_ref[0]                                          # (tk, E) bf16
    bias = mask_ref[...] + kp_ref[0]                      # single combined additive mask

    for h in range(num_heads):                            # static unroll, 2-D ops only
        lo, hi = h * dh, (h + 1) * dh
        s = jax.lax.dot_general(q[:, lo:hi], k[:, lo:hi],
                                (((1,), (1,)), ((), ())),
                                preferred_element_type=jnp.float32)   # (tq, tk)
        s = s + bias
        m_prev = m_sc[h]                                  # (tq, 1)
        m_new = jnp.maximum(m_prev, jnp.max(s, axis=-1, keepdims=True))
        alpha = jnp.exp(m_prev - m_new)
        p = jnp.exp(s - m_new)
        l_sc[h] = alpha * l_sc[h] + jnp.sum(p, axis=-1, keepdims=True)
        acc_sc[h] = alpha * acc_sc[h] + jax.lax.dot_general(
            p.astype(v.dtype), v[:, lo:hi], (((1,), (0,)), ((), ())),
            preferred_element_type=jnp.float32)           # (tq, dh)
        m_sc[h] = m_new

    @pl.when(ki == pl.num_programs(2) - 1)
    def _finalize():
        for h in range(num_heads):
            inv = pl.reciprocal(jnp.maximum(l_sc[h], 1e-20), approx=True)
            o_ref[0, :, pl.ds(h * dh, dh)] = (acc_sc[h] * inv).astype(o_ref.dtype)


def _proj_add_ln_kernel(x_ref, res_ref, w_ref, b_ref, g_ref, bt_ref, o_ref, *, eps):
    y = jnp.dot(x_ref[...].astype(w_ref.dtype), w_ref[...],
                preferred_element_type=jnp.float32) + b_ref[...]
    z = res_ref[...].astype(jnp.float32) + y
    mean = jnp.mean(z, axis=-1, keepdims=True)
    var = jnp.mean(jnp.square(z - mean), axis=-1, keepdims=True)
    zn = (z - mean) * jax.lax.rsqrt(var + eps)
    o_ref[...] = (zn * g_ref[...] + bt_ref[...]).astype(o_ref.dtype)


def _ffn_add_ln_kernel(h_ref, w1_ref, b1_ref, w2_ref, b2_ref, g_ref, bt_ref,
                       o_ref, acc_ref, *, eps):
    f = pl.program_id(1)

    @pl.when(f == 0)
    def _init():
        acc_ref[...] = jnp.zeros_like(acc_ref)

    cdt = w1_ref.dtype
    h = h_ref[...]                                        # bf16 (tn, E)
    y1 = jnp.dot(h.astype(cdt), w1_ref[...],
                 preferred_element_type=jnp.float32) + b1_ref[...]
    y1 = jnp.maximum(y1, 0.0)
    acc_ref[...] += jnp.dot(y1.astype(cdt), w2_ref[...],
                            preferred_element_type=jnp.float32)

    @pl.when(f == pl.num_programs(1) - 1)
    def _finalize():
        z = h.astype(jnp.float32) + acc_ref[...] + b2_ref[...]
        mean = jnp.mean(z, axis=-1, keepdims=True)
        var = jnp.mean(jnp.square(z - mean), axis=-1, keepdims=True)
        zn = (z - mean) * jax.lax.rsqrt(var + eps)
        o_ref[...] = (zn * g_ref[...] + bt_ref[...]).astype(o_ref.dtype)


# ----------------------------------------------------------------------------
# pallas_call wrappers
# ----------------------------------------------------------------------------
def qkv_projection(x_src, x_pos, w_qk_t, w_v_t, b_qk, b_v, *, tn):
    n, e = x_src.shape
    tok = lambda d: pl.BlockSpec((tn, d), lambda i: (i, 0))
    if x_pos is None:
        x_pos = jnp.zeros((1, e), jnp.float32)
        pos_spec = _rep((1, e))
    else:
        pos_spec = tok(e)

    est = ((w_qk_t.size + w_v_t.size) * 2 + (b_qk.size + b_v.size) * 4
           + 4 * tn * e * 4                 # src + pos f32, double-buffered
           + 6 * tn * e * 2                 # q/k/v bf16, double-buffered
           + 4 * tn * e * 4)                # in-kernel f32 temporaries
    return pl.pallas_call(
        _qkv_kernel,
        out_shape=(jax.ShapeDtypeStruct((n, e), jnp.bfloat16),
                   jax.ShapeDtypeStruct((n, e), jnp.bfloat16),
                   jax.ShapeDtypeStruct((n, e), jnp.bfloat16)),
        grid=(n // tn,),
        in_specs=[tok(e), pos_spec,
                  _rep(w_qk_t.shape), _rep(w_v_t.shape),
                  _rep(b_qk.shape), _rep(b_v.shape)],
        out_specs=(tok(e), tok(e), tok(e)),
        compiler_params=_compiler_params(("parallel",), est),
    )(x_src, x_pos, w_qk_t, w_v_t, b_qk, b_v)


def attention(q, k, v, mask, kp_bias, num_heads):
    b, s_len, e = q.shape
    dh = e // num_heads
    tq = _q_tile(s_len)
    tk = _kv_tile(s_len)

    qo_spec = pl.BlockSpec((1, tq, e), lambda bi, qi, ki: (bi, qi, 0))
    kv_spec = pl.BlockSpec((1, tk, e), lambda bi, qi, ki: (bi, ki, 0))

    if mask is None:
        mask = jnp.zeros((1, 1), jnp.float32)
        mask_spec = _rep((1, 1))
    else:
        mask = mask.astype(jnp.float32)
        mask_spec = pl.BlockSpec((tq, tk), lambda bi, qi, ki: (qi, ki))

    if kp_bias is None:
        kp_bias = jnp.zeros((1, 1, 1), jnp.float32)
        kp_spec = _rep((1, 1, 1))
    else:
        kp_spec = pl.BlockSpec((1, 1, tk), lambda bi, qi, ki: (bi, 0, ki))

    est = (2 * (tq + 2 * tk) * e * 2            # q/k/v blocks, bf16 double-buffered
           + 2 * tq * e * 2                     # output block
           + 2 * (tq * tk + tk) * 4             # mask + padding-bias blocks
           + num_heads * tq * (dh + 2 * 128) * 4   # acc / m / l scratch (padded)
           + 3 * tq * tk * 4)                   # per-head score / prob temporaries
    return pl.pallas_call(
        functools.partial(_flash_attn_kernel, num_heads=num_heads),
        out_shape=jax.ShapeDtypeStruct((b, s_len, e), jnp.bfloat16),
        grid=(b, s_len // tq, s_len // tk),
        in_specs=[mask_spec, kp_spec, qo_spec, kv_spec, kv_spec],
        out_specs=qo_spec,
        scratch_shapes=[pltpu.VMEM((num_heads, tq, 1), jnp.float32),
                        pltpu.VMEM((num_heads, tq, 1), jnp.float32),
                        pltpu.VMEM((num_heads, tq, dh), jnp.float32)],
        compiler_params=_compiler_params(("parallel", "parallel", "arbitrary"), est),
    )(mask, kp_bias, q, k, v)


def proj_add_ln(x, residual, w_t, b, gamma, beta, *, tn, eps=1e-5):
    n, e_in = x.shape
    e_out = w_t.shape[1]
    tok_in = pl.BlockSpec((tn, e_in), lambda i: (i, 0))
    tok_out = pl.BlockSpec((tn, e_out), lambda i: (i, 0))
    est = (w_t.size * 2 + 2 * tn * e_in * 2 + 2 * tn * e_out * 4
           + 2 * tn * e_out * 2 + 3 * tn * e_out * 4)
    return pl.pallas_call(
        functools.partial(_proj_add_ln_kernel, eps=eps),
        out_shape=jax.ShapeDtypeStruct((n, e_out), jnp.bfloat16),
        grid=(n // tn,),
        in_specs=[tok_in, tok_out, _rep(w_t.shape), _rep(b.shape),
                  _rep(gamma.shape), _rep(beta.shape)],
        out_specs=tok_out,
        compiler_params=_compiler_params(("parallel",), est),
    )(x, residual, w_t, b, gamma, beta)


def ffn_add_ln(h, w1_t, b1, w2_t, b2, gamma, beta, out_dtype, *, tn, eps=1e-5):
    n, e = h.shape
    f_dim = w1_t.shape[1]
    w_bytes = (w1_t.size + w2_t.size) * w1_t.dtype.itemsize
    resident = w_bytes <= _RESIDENT_FFN_WEIGHT_BYTES
    tf = f_dim if resident else _f_tile(f_dim)
    nf = f_dim // tf

    tok = pl.BlockSpec((tn, e), lambda i, f: (i, 0))
    if resident:        # whole FFN weights stay in VMEM, single-buffered
        w1_spec = _block_spec((e, tf), lambda i, f: (0, 0), resident=True)
        b1_spec = _block_spec((1, tf), lambda i, f: (0, 0), resident=True)
        w2_spec = _block_spec((tf, e), lambda i, f: (0, 0), resident=True)
        w_buf = 1
    else:               # stream F-tiles (v7x-safe), accumulate in f32 scratch
        w1_spec = pl.BlockSpec((e, tf), lambda i, f: (0, f))
        b1_spec = pl.BlockSpec((1, tf), lambda i, f: (0, f))
        w2_spec = pl.BlockSpec((tf, e), lambda i, f: (f, 0))
        w_buf = 2

    est = (w_buf * 2 * e * tf * 2 + tf * 4      # weights + b1
           + 2 * tn * e * 2                     # h blocks (bf16)
           + 2 * tn * e * 4                     # output blocks
           + tn * e * 4                         # accumulator scratch
           + 2 * tn * tf * 4)                   # y1 intermediate
    return pl.pallas_call(
        functools.partial(_ffn_add_ln_kernel, eps=eps),
        out_shape=jax.ShapeDtypeStruct((n, e), out_dtype),
        grid=(n // tn, nf),
        in_specs=[tok, w1_spec, b1_spec, w2_spec,
                  _rep(b2.shape), _rep(gamma.shape), _rep(beta.shape)],
        out_specs=tok,
        scratch_shapes=[pltpu.VMEM((tn, e), jnp.float32)],
        compiler_params=_compiler_params(("parallel", "arbitrary"), est),
    )(h, w1_t, b1, w2_t, b2, gamma, beta)


# ----------------------------------------------------------------------------
# Parameter preparation (once, outside the hot path)
# ----------------------------------------------------------------------------
def prepare_params(params, hidden_dim, num_heads, compute_dtype=jnp.bfloat16):
    e = hidden_dim
    dh = e // num_heads
    scale = 1.0 / (dh ** 0.5)
    w_in = params["in_proj_weight"]        # torch layout (3E, E) = [wq; wk; wv]
    b_in = params["in_proj_bias"]
    # Fold the softmax scale into the Q projection (done once, not per step).
    wq_t = w_in[:e].T * scale
    wk_t = w_in[e:2 * e].T
    return {
        "w_qk_t": jnp.concatenate([wq_t, wk_t], axis=1).astype(compute_dtype),  # (E, 2E)
        "b_qk": jnp.concatenate([b_in[:e] * scale, b_in[e:2 * e]]
                                ).reshape(1, 2 * e).astype(jnp.float32),
        "w_v_t": w_in[2 * e:].T.astype(compute_dtype),                          # (E, E)
        "b_v": b_in[2 * e:].reshape(1, e).astype(jnp.float32),
        "w_o_t": params["out_proj_weight"].T.astype(compute_dtype),
        "b_o": params["out_proj_bias"].reshape(1, e).astype(jnp.float32),
        "w1_t": params["w1"].T.astype(compute_dtype),                           # (E, F)
        "b1": params["b1"].reshape(1, -1).astype(jnp.float32),
        "w2_t": params["w2"].T.astype(compute_dtype),                           # (F, E)
        "b2": params["b2"].reshape(1, e).astype(jnp.float32),
        "ln1_g": params["ln1_gamma"].reshape(1, e).astype(jnp.float32),
        "ln1_b": params["ln1_beta"].reshape(1, e).astype(jnp.float32),
        "ln2_g": params["ln2_gamma"].reshape(1, e).astype(jnp.float32),
        "ln2_b": params["ln2_beta"].reshape(1, e).astype(jnp.float32),
    }


# ----------------------------------------------------------------------------
# Encoder-layer forward (glue in plain JAX, hot paths in Pallas)
# ----------------------------------------------------------------------------
def transformer_encoder_layer(src, src_mask, src_key_padding_mask, pos, kparams,
                              num_heads, *, eps=1e-5):
    S, B, E = src.shape
    N = B * S

    # Batch-major token layout (row = b*S + s): attention blocks then index
    # contiguous per-batch sequences and the output needs no head transpose.
    x_src = src.transpose(1, 0, 2).reshape(N, E)
    x_pos = None if pos is None else pos.transpose(1, 0, 2).reshape(N, E)

    tn, n_pad = _token_tiling(N)
    if n_pad != N:
        padw = ((0, n_pad - N), (0, 0))
        x_src = jnp.pad(x_src, padw)
        if x_pos is not None:
            x_pos = jnp.pad(x_pos, padw)

    # --- fused (src+pos) -> Q/K + V projections (bf16 activations) ----------
    q, k, v = qkv_projection(x_src, x_pos, kparams["w_qk_t"], kparams["w_v_t"],
                             kparams["b_qk"], kparams["b_v"], tn=tn)

    def seqs(t):                           # (n_pad, E) -> (B, S, E)
        return (t[:N] if n_pad != N else t).reshape(B, S, E)

    kp_bias = None
    if src_key_padding_mask is not None:
        kp_bias = jnp.where(src_key_padding_mask, _NEG_INF, 0.0).astype(
            jnp.float32).reshape(B, 1, S)

    # --- blocked flash attention (bf16 output) -------------------------------
    attn = attention(seqs(q), seqs(k), seqs(v), src_mask, kp_bias, num_heads)
    attn_tok = attn.reshape(N, E)
    if n_pad != N:
        attn_tok = jnp.pad(attn_tok, ((0, n_pad - N), (0, 0)))

    # --- out_proj + residual + LayerNorm1 (fused) ----------------------------
    h = proj_add_ln(attn_tok, x_src, kparams["w_o_t"], kparams["b_o"],
                    kparams["ln1_g"], kparams["ln1_b"], tn=tn, eps=eps)

    # --- FFN + residual + LayerNorm2 (fused) ---------------------------------
    out = ffn_add_ln(h, kparams["w1_t"], kparams["b1"], kparams["w2_t"],
                     kparams["b2"], kparams["ln2_g"], kparams["ln2_b"],
                     src.dtype, tn=tn, eps=eps)

    out = out[:N] if n_pad != N else out
    return out.reshape(B, S, E).transpose(1, 0, 2)


# ----------------------------------------------------------------------------
# Pure-JAX f32 reference (same math as the PyTorch module, eval mode)
# ----------------------------------------------------------------------------
def reference(src, src_mask, src_key_padding_mask, pos, params, num_heads):
    S, B, E = src.shape
    dh = E // num_heads
    scale = 1.0 / (dh ** 0.5)
    lin = lambda x, w, b: x @ w.T + b

    qk_in = src + pos if pos is not None else src
    wq, wk, wv = jnp.split(params["in_proj_weight"], 3, axis=0)
    bq, bk, bv = jnp.split(params["in_proj_bias"], 3, axis=0)
    q, k, v = lin(qk_in, wq, bq), lin(qk_in, wk, bk), lin(src, wv, bv)

    def heads(t):
        return t.reshape(S, B, num_heads, dh).transpose(1, 2, 0, 3)

    qh, kh, vh = heads(q), heads(k), heads(v)
    s = jnp.einsum("bhqd,bhkd->bhqk", qh, kh) * scale
    if src_mask is not None:
        s = s + src_mask[None, None]
    if src_key_padding_mask is not None:
        s = s + jnp.where(src_key_padding_mask[:, None, None, :], _NEG_INF, 0.0)
    p = jax.nn.softmax(s, axis=-1)
    attn = jnp.einsum("bhqk,bhkd->bhqd", p, vh).transpose(2, 0, 1, 3).reshape(S, B, E)
    attn = lin(attn, params["out_proj_weight"], params["out_proj_bias"])

    def ln(x, g, b):
        mu = x.mean(-1, keepdims=True)
        var = ((x - mu) ** 2).mean(-1, keepdims=True)
        return (x - mu) * jax.lax.rsqrt(var + 1e-5) * g + b

    h = ln(src + attn, params["ln1_gamma"], params["ln1_beta"])
    ff = lin(jnp.maximum(lin(h, params["w1"], params["b1"]), 0.0),
             params["w2"], params["b2"])
    return ln(h + ff, params["ln2_gamma"], params["ln2_beta"])


# ----------------------------------------------------------------------------
# Deterministic parameter / input construction and a single run
# ----------------------------------------------------------------------------
def make_params(key, hidden_dim, num_heads, ffn_dim):
    ks = jax.random.split(key, 8)
    sd = 0.05
    return {
        "in_proj_weight": sd * jax.random.normal(ks[0], (3 * hidden_dim, hidden_dim), jnp.float32),
        "in_proj_bias": sd * jax.random.normal(ks[1], (3 * hidden_dim,), jnp.float32),
        "out_proj_weight": sd * jax.random.normal(ks[2], (hidden_dim, hidden_dim), jnp.float32),
        "out_proj_bias": sd * jax.random.normal(ks[3], (hidden_dim,), jnp.float32),
        "w1": sd * jax.random.normal(ks[4], (ffn_dim, hidden_dim), jnp.float32),
        "b1": sd * jax.random.normal(ks[5], (ffn_dim,), jnp.float32),
        "w2": sd * jax.random.normal(ks[6], (hidden_dim, ffn_dim), jnp.float32),
        "b2": sd * jax.random.normal(ks[7], (hidden_dim,), jnp.float32),
        "ln1_gamma": jnp.ones((hidden_dim,), jnp.float32),
        "ln1_beta": jnp.zeros((hidden_dim,), jnp.float32),
        "ln2_gamma": jnp.ones((hidden_dim,), jnp.float32),
        "ln2_beta": jnp.zeros((hidden_dim,), jnp.float32),
    }


if __name__ == "__main__":
    S, B, E, H, F = 8, 2, 32, 4, 64       # seq, batch, hidden, heads, ffn

    key = jax.random.PRNGKey(0)
    k_src, k_pos, k_mask, k_par = jax.random.split(key, 4)

    src = jax.random.normal(k_src, (S, B, E), jnp.float32)
    pos = 0.1 * jax.random.normal(k_pos, (S, B, E), jnp.float32)
    src_mask = 0.1 * jax.random.normal(k_mask, (S, S), jnp.float32)   # additive mask
    src_key_padding_mask = jnp.zeros((B, S), jnp.bool_).at[1, S - 1].set(True)

    params = make_params(k_par, E, H, F)
    kparams = prepare_params(params, E, H)     # pre-transpose / pre-cast / scale-fold once

    _resident_mode()                           # probe single-buffer support eagerly

    fwd = jax.jit(functools.partial(transformer_encoder_layer, num_heads=H))
    out = jax.block_until_ready(fwd(src, src_mask, src_key_padding_mask, pos, kparams))

    ref = reference(src, src_mask, src_key_padding_mask, pos, params, num_heads=H)
    assert out.shape == (S, B, E)
    # bf16 activation streams + bf16 MXU operands + approx reciprocal -> loose tolerance
    assert jnp.allclose(out, ref, atol=3e-2, rtol=3e-2), "mismatch vs reference"

    print("KERNEL_OK")
</pallas_src>

<mosaic_0001>
module attributes {stable_mosaic.version = 11 : i64} {
  func.func @_copy(%arg0: i32, %arg1: memref<8x128xf32, #tpu.memory_space<vmem>>, %arg2: memref<8x128xf32, #tpu.memory_space<vmem>>) attributes {dimension_semantics = [#tpu.dimension_semantics<arbitrary>], iteration_bounds = array<i64: 1>, scalar_prefetch = 0 : i64, scratch_operands = 0 : i64, tpu.core_type = #tpu.core_type<tc>, window_params = [{pipeline_mode = #tpu.pipeline_mode<synchronous>, transform_indices = @transform_0, window_bounds = array<i64: 8, 128>}, {pipeline_mode = #tpu.pipeline_mode<synchronous>, transform_indices = @transform_1, window_bounds = array<i64: 8, 128>}]} {
    %c0 = arith.constant 0 : index
    %c0_0 = arith.constant 0 : index
    %0 = vector.load %arg1[%c0, %c0_0] : memref<8x128xf32, #tpu.memory_space<vmem>>, vector<8x128xf32>
    %c0_1 = arith.constant 0 : index
    %c0_2 = arith.constant 0 : index
    %1 = vector.load %arg2[%c0_1, %c0_2] : memref<8x128xf32, #tpu.memory_space<vmem>>, vector<8x128xf32>
    tpu.vector_store %arg2[%c0_1, %c0_2], %0 {strides = array<i32>} : memref<8x128xf32, #tpu.memory_space<vmem>>, vector<8x128xf32>,
    return
  }
  func.func @transform_0(%arg0: i32) -> (i32, i32) {
    %c0_i32 = arith.constant 0 : i32
    %c0_i32_0 = arith.constant 0 : i32
    %c0_i32_1 = arith.constant 0 : i32
    return %c0_i32, %c0_i32_0 : i32, i32
  }
  func.func @transform_1(%arg0: i32) -> (i32, i32) {
    %c0_i32 = arith.constant 0 : i32
    %c0_i32_0 = arith.constant 0 : i32
    %c0_i32_1 = arith.constant 0 : i32
    return %c0_i32, %c0_i32_0 : i32, i32
  }
}

module attributes {stable_mosaic.version = 11 : i64} {
  func.func @_flash_attn_kernel(%arg0: i32, %arg1: i32, %arg2: i32, %arg3: memref<8x8xf32, #tpu.memory_space<vmem>>, %arg4: memref<1x1x8xf32, #tpu.memory_space<vmem>>, %arg5: memref<1x8x32xbf16, #tpu.memory_space<vmem>>, %arg6: memref<1x8x32xbf16, #tpu.memory_space<vmem>>, %arg7: memref<1x8x32xbf16, #tpu.memory_space<vmem>>, %arg8: memref<1x8x32xbf16, #tpu.memory_space<vmem>>, %arg9: memref<4x8x1xf32, #tpu.memory_space<vmem>>, %arg10: memref<4x8x1xf32, #tpu.memory_space<vmem>>, %arg11: memref<4x8x8xf32, #tpu.memory_space<vmem>>) attributes {dimension_semantics = [#tpu.dimension_semantics<parallel>, #tpu.dimension_semantics<parallel>, #tpu.dimension_semantics<arbitrary>], iteration_bounds = array<i64: 2, 1, 1>, scalar_prefetch = 0 : i64, scratch_operands = 3 : i64, tpu.core_type = #tpu.core_type<tc>, window_params = [{transform_indices = @transform_0, window_bounds = array<i64: 8, 8>}, {transform_indices = @transform_1, window_bounds = array<i64: 1, 1, 8>}, {transform_indices = @transform_2, window_bounds = array<i64: 1, 8, 32>}, {transform_indices = @transform_3, window_bounds = array<i64: 1, 8, 32>}, {transform_indices = @transform_4, window_bounds = array<i64: 1, 8, 32>}, {transform_indices = @transform_5, window_bounds = array<i64: 1, 8, 32>}]} {
    %c0_i32 = arith.constant 0 : i32
    %0 = arith.cmpi eq, %arg2, %c0_i32 : i32
    %1 = arith.extui %0 : i1 to i32
    %c0_i32_0 = arith.constant 0 : i32
    %2 = arith.cmpi ne, %1, %c0_i32_0 : i32
    scf.if %2 {
      %cst_100 = arith.constant 0xFF800000 : f32
      %165 = vector.broadcast %cst_100 : f32 to vector<4x8x1xf32>
      %c0_101 = arith.constant 0 : index
      %c0_102 = arith.constant 0 : index
      %c0_103 = arith.constant 0 : index
      %166 = vector.load %arg9[%c0_101, %c0_102, %c0_103] : memref<4x8x1xf32, #tpu.memory_space<vmem>>, vector<4x8x1xf32>
      tpu.vector_store %arg9[%c0_101, %c0_102, %c0_103], %165 {strides = array<i32>} : memref<4x8x1xf32, #tpu.memory_space<vmem>>, vector<4x8x1xf32>,
      %cst_104 = arith.constant 0.000000e+00 : f32
      %167 = vector.broadcast %cst_104 : f32 to vector<4x8x1xf32>
      %c0_105 = arith.constant 0 : index
      %c0_106 = arith.constant 0 : index
      %c0_107 = arith.constant 0 : index
      %168 = vector.load %arg10[%c0_105, %c0_106, %c0_107] : memref<4x8x1xf32, #tpu.memory_space<vmem>>, vector<4x8x1xf32>
      tpu.vector_store %arg10[%c0_105, %c0_106, %c0_107], %167 {strides = array<i32>} : memref<4x8x1xf32, #tpu.memory_space<vmem>>, vector<4x8x1xf32>,
      %cst_108 = arith.constant 0.000000e+00 : f32
      %169 = vector.broadcast %cst_108 : f32 to vector<4x8x8xf32>
      %c0_109 = arith.constant 0 : index
      %c0_110 = arith.constant 0 : index
      %c0_111 = arith.constant 0 : index
      %170 = vector.load %arg11[%c0_109, %c0_110, %c0_111] : memref<4x8x8xf32, #tpu.memory_space<vmem>>, vector<4x8x8xf32>
      tpu.vector_store %arg11[%c0_109, %c0_110, %c0_111], %169 {strides = array<i32>} : memref<4x8x8xf32, #tpu.memory_space<vmem>>, vector<4x8x8xf32>,
    } else {
    }
    %c0 = arith.constant 0 : index
    %c0_1 = arith.constant 0 : index
    %c0_2 = arith.constant 0 : index
    %3 = vector.load %arg5[%c0, %c0_1, %c0_2] : memref<1x8x32xbf16, #tpu.memory_space<vmem>>, vector<1x8x32xbf16>
    %4 = vector.shape_cast %3 : vector<1x8x32xbf16> to vector<8x32xbf16>
    %c0_3 = arith.constant 0 : index
    %c0_4 = arith.constant 0 : index
    %c0_5 = arith.constant 0 : index
    %5 = vector.load %arg6[%c0_3, %c0_4, %c0_5] : memref<1x8x32xbf16, #tpu.memory_space<vmem>>, vector<1x8x32xbf16>
    %6 = vector.shape_cast %5 : vector<1x8x32xbf16> to vector<8x32xbf16>
    %c0_6 = arith.constant 0 : index
    %c0_7 = arith.constant 0 : index
    %c0_8 = arith.constant 0 : index
    %7 = vector.load %arg7[%c0_6, %c0_7, %c0_8] : memref<1x8x32xbf16, #tpu.memory_space<vmem>>, vector<1x8x32xbf16>
    %8 = vector.shape_cast %7 : vector<1x8x32xbf16> to vector<8x32xbf16>
    %c0_9 = arith.constant 0 : index
    %c0_10 = arith.constant 0 : index
    %9 = vector.load %arg3[%c0_9, %c0_10] : memref<8x8xf32, #tpu.memory_space<vmem>>, vector<8x8xf32>
    %c0_11 = arith.constant 0 : index
    %c0_12 = arith.constant 0 : index
    %c0_13 = arith.constant 0 : index
    %10 = vector.load %arg4[%c0_11, %c0_12, %c0_13] : memref<1x1x8xf32, #tpu.memory_space<vmem>>, vector<1x1x8xf32>
    %11 = vector.shape_cast %10 : vector<1x1x8xf32> to vector<1x8xf32>
    %12 = vector.broadcast %11 : vector<1x8xf32> to vector<8x8xf32>
    %13 = arith.addf %9, %12 : vector<8x8xf32>
    %14 = vector.extract_strided_slice %4 {offsets = [0, 0], sizes = [8, 8], strides = [1, 1]} : vector<8x32xbf16> to vector<8x8xbf16>
    %15 = vector.extract_strided_slice %6 {offsets = [0, 0], sizes = [8, 8], strides = [1, 1]} : vector<8x32xbf16> to vector<8x8xbf16>
    %cst = arith.constant dense<0.000000e+00> : vector<8x8xf32>
    %16 = tpu.matmul %14, %15, %cst {dimension_numbers = #tpu.dot_dimension_numbers<[1], [1], [0], [0], [0, 0, 1, 0], [], []>} : vector<8x8xbf16>, vector<8x8xbf16>, vector<8x8xf32> -> vector<8x8xf32>
    %17 = arith.addf %16, %13 : vector<8x8xf32>
    %c0_14 = arith.constant 0 : index
    %c0_15 = arith.constant 0 : index
    %c0_16 = arith.constant 0 : index
    %18 = vector.load %arg9[%c0_14, %c0_15, %c0_16] : memref<4x8x1xf32, #tpu.memory_space<vmem>>, vector<1x8x1xf32>
    %19 = vector.shape_cast %18 : vector<1x8x1xf32> to vector<8x1xf32>
    %cst_17 = arith.constant dense<0xFF800000> : vector<8xf32>
    %20 = vector.multi_reduction <maximumf>, %17, %cst_17 [1] : vector<8x8xf32> to vector<8xf32>
    %21 = vector.shape_cast %20 : vector<8xf32> to vector<8x1xf32>
    %22 = arith.maximumf %19, %21 : vector<8x1xf32>
    %23 = arith.subf %19, %22 : vector<8x1xf32>
    %24 = math.exp %23 : vector<8x1xf32>
    %25 = vector.broadcast %22 : vector<8x1xf32> to vector<8x8xf32>
    %26 = arith.subf %17, %25 : vector<8x8xf32>
    %27 = math.exp %26 : vector<8x8xf32>
    %c0_18 = arith.constant 0 : index
    %c0_19 = arith.constant 0 : index
    %c0_20 = arith.constant 0 : index
    %28 = vector.load %arg10[%c0_18, %c0_19, %c0_20] : memref<4x8x1xf32, #tpu.memory_space<vmem>>, vector<1x8x1xf32>
    %29 = vector.shape_cast %28 : vector<1x8x1xf32> to vector<8x1xf32>
    %30 = arith.mulf %24, %29 : vector<8x1xf32>
    %cst_21 = arith.constant dense<0.000000e+00> : vector<8xf32>
    %31 = vector.multi_reduction <add>, %27, %cst_21 [1] : vector<8x8xf32> to vector<8xf32>
    %32 = vector.shape_cast %31 : vector<8xf32> to vector<8x1xf32>
    %33 = arith.addf %30, %32 : vector<8x1xf32>
    %c0_22 = arith.constant 0 : index
    %c0_23 = arith.constant 0 : index
    %c0_24 = arith.constant 0 : index
    %34 = vector.load %arg10[%c0_22, %c0_23, %c0_24] : memref<4x8x1xf32, #tpu.memory_space<vmem>>, vector<1x8x1xf32>
    %35 = vector.shape_cast %34 : vector<1x8x1xf32> to vector<8x1xf32>
    %36 = vector.shape_cast %33 : vector<8x1xf32> to vector<1x8x1xf32>
    tpu.vector_store %arg10[%c0_22, %c0_23, %c0_24], %36 {strides = array<i32>} : memref<4x8x1xf32, #tpu.memory_space<vmem>>, vector<1x8x1xf32>,
    %c0_25 = arith.constant 0 : index
    %c0_26 = arith.constant 0 : index
    %c0_27 = arith.constant 0 : index
    %37 = vector.load %arg11[%c0_25, %c0_26, %c0_27] : memref<4x8x8xf32, #tpu.memory_space<vmem>>, vector<1x8x8xf32>
    %38 = vector.shape_cast %37 : vector<1x8x8xf32> to vector<8x8xf32>
    %39 = vector.broadcast %24 : vector<8x1xf32> to vector<8x8xf32>
    %40 = arith.mulf %39, %38 : vector<8x8xf32>
    %41 = arith.truncf %27 : vector<8x8xf32> to vector<8x8xbf16>
    %42 = vector.extract_strided_slice %8 {offsets = [0, 0], sizes = [8, 8], strides = [1, 1]} : vector<8x32xbf16> to vector<8x8xbf16>
    %cst_28 = arith.constant dense<0.000000e+00> : vector<8x8xf32>
    %43 = tpu.matmul %41, %42, %cst_28 {dimension_numbers = #tpu.dot_dimension_numbers<[1], [0], [0], [1], [0, 0, 1, 1], [], []>} : vector<8x8xbf16>, vector<8x8xbf16>, vector<8x8xf32> -> vector<8x8xf32>
    %44 = arith.addf %40, %43 : vector<8x8xf32>
    %c0_29 = arith.constant 0 : index
    %c0_30 = arith.constant 0 : index
    %c0_31 = arith.constant 0 : index
    %45 = vector.load %arg11[%c0_29, %c0_30, %c0_31] : memref<4x8x8xf32, #tpu.memory_space<vmem>>, vector<1x8x8xf32>
    %46 = vector.shape_cast %45 : vector<1x8x8xf32> to vector<8x8xf32>
    %47 = vector.shape_cast %44 : vector<8x8xf32> to vector<1x8x8xf32>
    tpu.vector_store %arg11[%c0_29, %c0_30, %c0_31], %47 {strides = array<i32>} : memref<4x8x8xf32, #tpu.memory_space<vmem>>, vector<1x8x8xf32>,
    %c0_32 = arith.constant 0 : index
    %c0_33 = arith.constant 0 : index
    %c0_34 = arith.constant 0 : index
    %48 = vector.load %arg9[%c0_32, %c0_33, %c0_34] : memref<4x8x1xf32, #tpu.memory_space<vmem>>, vector<1x8x1xf32>
    %49 = vector.shape_cast %48 : vector<1x8x1xf32> to vector<8x1xf32>
    %50 = vector.shape_cast %22 : vector<8x1xf32> to vector<1x8x1xf32>
    tpu.vector_store %arg9[%c0_32, %c0_33, %c0_34], %50 {strides = array<i32>} : memref<4x8x1xf32, #tpu.memory_space<vmem>>, vector<1x8x1xf32>,
    %51 = vector.extract_strided_slice %4 {offsets = [0, 8], sizes = [8, 8], strides = [1, 1]} : vector<8x32xbf16> to vector<8x8xbf16>
    %52 = vector.extract_strided_slice %6 {offsets = [0, 8], sizes = [8, 8], strides = [1, 1]} : vector<8x32xbf16> to vector<8x8xbf16>
    %cst_35 = arith.constant dense<0.000000e+00> : vector<8x8xf32>
    %53 = tpu.matmul %51, %52, %cst_35 {dimension_numbers = #tpu.dot_dimension_numbers<[1], [1], [0], [0], [0, 0, 1, 0], [], []>} : vector<8x8xbf16>, vector<8x8xbf16>, vector<8x8xf32> -> vector<8x8xf32>
    %54 = arith.addf %53, %13 : vector<8x8xf32>
    %c1 = arith.constant 1 : index
    %c0_36 = arith.constant 0 : index
    %c0_37 = arith.constant 0 : index
    %55 = vector.load %arg9[%c1, %c0_36, %c0_37] : memref<4x8x1xf32, #tpu.memory_space<vmem>>, vector<1x8x1xf32>
    %56 = vector.shape_cast %55 : vector<1x8x1xf32> to vector<8x1xf32>
    %cst_38 = arith.constant dense<0xFF800000> : vector<8xf32>
    %57 = vector.multi_reduction <maximumf>, %54, %cst_38 [1] : vector<8x8xf32> to vector<8xf32>
    %58 = vector.shape_cast %57 : vector<8xf32> to vector<8x1xf32>
    %59 = arith.maximumf %56, %58 : vector<8x1xf32>
    %60 = arith.subf %56, %59 : vector<8x1xf32>
    %61 = math.exp %60 : vector<8x1xf32>
    %62 = vector.broadcast %59 : vector<8x1xf32> to vector<8x8xf32>
    %63 = arith.subf %54, %62 : vector<8x8xf32>
    %64 = math.exp %63 : vector<8x8xf32>
    %c1_39 = arith.constant 1 : index
    %c0_40 = arith.constant 0 : index
    %c0_41 = arith.constant 0 : index
    %65 = vector.load %arg10[%c1_39, %c0_40, %c0_41] : memref<4x8x1xf32, #tpu.memory_space<vmem>>, vector<1x8x1xf32>
    %66 = vector.shape_cast %65 : vector<1x8x1xf32> to vector<8x1xf32>
    %67 = arith.mulf %61, %66 : vector<8x1xf32>
    %cst_42 = arith.constant dense<0.000000e+00> : vector<8xf32>
    %68 = vector.multi_reduction <add>, %64, %cst_42 [1] : vector<8x8xf32> to vector<8xf32>
    %69 = vector.shape_cast %68 : vector<8xf32> to vector<8x1xf32>
    %70 = arith.addf %67, %69 : vector<8x1xf32>
    %c1_43 = arith.constant 1 : index
    %c0_44 = arith.constant 0 : index
    %c0_45 = arith.constant 0 : index
    %71 = vector.load %arg10[%c1_43, %c0_44, %c0_45] : memref<4x8x1xf32, #tpu.memory_space<vmem>>, vector<1x8x1xf32>
    %72 = vector.shape_cast %71 : vector<1x8x1xf32> to vector<8x1xf32>
    %73 = vector.shape_cast %70 : vector<8x1xf32> to vector<1x8x1xf32>
    tpu.vector_store %arg10[%c1_43, %c0_44, %c0_45], %73 {strides = array<i32>} : memref<4x8x1xf32, #tpu.memory_space<vmem>>, vector<1x8x1xf32>,
    %c1_46 = arith.constant 1 : index
    %c0_47 = arith.constant 0 : index
    %c0_48 = arith.constant 0 : index
    %74 = vector.load %arg11[%c1_46, %c0_47, %c0_48] : memref<4x8x8xf32, #tpu.memory_space<vmem>>, vector<1x8x8xf32>
    %75 = vector.shape_cast %74 : vector<1x8x8xf32> to vector<8x8xf32>
    %76 = vector.broadcast %61 : vector<8x1xf32> to vector<8x8xf32>
    %77 = arith.mulf %76, %75 : vector<8x8xf32>
    %78 = arith.truncf %64 : vector<8x8xf32> to vector<8x8xbf16>
    %79 = vector.extract_strided_slice %8 {offsets = [0, 8], sizes = [8, 8], strides = [1, 1]} : vector<8x32xbf16> to vector<8x8xbf16>
    %cst_49 = arith.constant dense<0.000000e+00> : vector<8x8xf32>
    %80 = tpu.matmul %78, %79, %cst_49 {dimension_numbers = #tpu.dot_dimension_numbers<[1], [0], [0], [1], [0, 0, 1, 1], [], []>} : vector<8x8xbf16>, vector<8x8xbf16>, vector<8x8xf32> -> vector<8x8xf32>
    %81 = arith.addf %77, %80 : vector<8x8xf32>
    %c1_50 = arith.constant 1 : index
    %c0_51 = arith.constant 0 : index
    %c0_52 = arith.constant 0 : index
    %82 = vector.load %arg11[%c1_50, %c0_51, %c0_52] : memref<4x8x8xf32, #tpu.memory_space<vmem>>, vector<1x8x8xf32>
    %83 = vector.shape_cast %82 : vector<1x8x8xf32> to vector<8x8xf32>
    %84 = vector.shape_cast %81 : vector<8x8xf32> to vector<1x8x8xf32>
    tpu.vector_store %arg11[%c1_50, %c0_51, %c0_52], %84 {strides = array<i32>} : memref<4x8x8xf32, #tpu.memory_space<vmem>>, vector<1x8x8xf32>,
    %c1_53 = arith.constant 1 : index
    %c0_54 = arith.constant 0 : index
    %c0_55 = arith.constant 0 : index
    %85 = vector.load %arg9[%c1_53, %c0_54, %c0_55] : memref<4x8x1xf32, #tpu.memory_space<vmem>>, vector<1x8x1xf32>
    %86 = vector.shape_cast %85 : vector<1x8x1xf32> to vector<8x1xf32>
    %87 = vector.shape_cast %59 : vector<8x1xf32> to vector<1x8x1xf32>
    tpu.vector_store %arg9[%c1_53, %c0_54, %c0_55], %87 {strides = array<i32>} : memref<4x8x1xf32, #tpu.memory_space<vmem>>, vector<1x8x1xf32>,
    %88 = vector.extract_strided_slice %4 {offsets = [0, 16], sizes = [8, 8], strides = [1, 1]} : vector<8x32xbf16> to vector<8x8xbf16>
    %89 = vector.extract_strided_slice %6 {offsets = [0, 16], sizes = [8, 8], strides = [1, 1]} : vector<8x32xbf16> to vector<8x8xbf16>
    %cst_56 = arith.constant dense<0.000000e+00> : vector<8x8xf32>
    %90 = tpu.matmul %88, %89, %cst_56 {dimension_numbers = #tpu.dot_dimension_numbers<[1], [1], [0], [0], [0, 0, 1, 0], [], []>} : vector<8x8xbf16>, vector<8x8xbf16>, vector<8x8xf32> -> vector<8x8xf32>
    %91 = arith.addf %90, %13 : vector<8x8xf32>
    %c2 = arith.constant 2 : index
    %c0_57 = arith.constant 0 : index
    %c0_58 = arith.constant 0 : index
    %92 = vector.load %arg9[%c2, %c0_57, %c0_58] : memref<4x8x1xf32, #tpu.memory_space<vmem>>, vector<1x8x1xf32>
    %93 = vector.shape_cast %92 : vector<1x8x1xf32> to vector<8x1xf32>
    %cst_59 = arith.constant dense<0xFF800000> : vector<8xf32>
    %94 = vector.multi_reduction <maximumf>, %91, %cst_59 [1] : vector<8x8xf32> to vector<8xf32>
    %95 = vector.shape_cast %94 : vector<8xf32> to vector<8x1xf32>
    %96 = arith.maximumf %93, %95 : vector<8x1xf32>
    %97 = arith.subf %93, %96 : vector<8x1xf32>
    %98 = math.exp %97 : vector<8x1xf32>
    %99 = vector.broadcast %96 : vector<8x1xf32> to vector<8x8xf32>
    %100 = arith.subf %91, %99 : vector<8x8xf32>
    %101 = math.exp %100 : vector<8x8xf32>
    %c2_60 = arith.constant 2 : index
    %c0_61 = arith.constant 0 : index
    %c0_62 = arith.constant 0 : index
    %102 = vector.load %arg10[%c2_60, %c0_61, %c0_62] : memref<4x8x1xf32, #tpu.memory_space<vmem>>, vector<1x8x1xf32>
    %103 = vector.shape_cast %102 : vector<1x8x1xf32> to vector<8x1xf32>
    %104 = arith.mulf %98, %103 : vector<8x1xf32>
    %cst_63 = arith.constant dense<0.000000e+00> : vector<8xf32>
    %105 = vector.multi_reduction <add>, %101, %cst_63 [1] : vector<8x8xf32> to vector<8xf32>
    %106 = vector.shape_cast %105 : vector<8xf32> to vector<8x1xf32>
    %107 = arith.addf %104, %106 : vector<8x1xf32>
    %c2_64 = arith.constant 2 : index
    %c0_65 = arith.constant 0 : index
    %c0_66 = arith.constant 0 : index
    %108 = vector.load %arg10[%c2_64, %c0_65, %c0_66] : memref<4x8x1xf32, #tpu.memory_space<vmem>>, vector<1x8x1xf32>
    %109 = vector.shape_cast %108 : vector<1x8x1xf32> to vector<8x1xf32>
    %110 = vector.shape_cast %107 : vector<8x1xf32> to vector<1x8x1xf32>
    tpu.vector_store %arg10[%c2_64, %c0_65, %c0_66], %110 {strides = array<i32>} : memref<4x8x1xf32, #tpu.memory_space<vmem>>, vector<1x8x1xf32>,
    %c2_67 = arith.constant 2 : index
    %c0_68 = arith.constant 0 : index
    %c0_69 = arith.constant 0 : index
    %111 = vector.load %arg11[%c2_67, %c0_68, %c0_69] : memref<4x8x8xf32, #tpu.memory_space<vmem>>, vector<1x8x8xf32>
    %112 = vector.shape_cast %111 : vector<1x8x8xf32> to vector<8x8xf32>
    %113 = vector.broadcast %98 : vector<8x1xf32> to vector<8x8xf32>
    %114 = arith.mulf %113, %112 : vector<8x8xf32>
    %115 = arith.truncf %101 : vector<8x8xf32> to vector<8x8xbf16>
    %116 = vector.extract_strided_slice %8 {offsets = [0, 16], sizes = [8, 8], strides = [1, 1]} : vector<8x32xbf16> to vector<8x8xbf16>
    %cst_70 = arith.constant dense<0.000000e+00> : vector<8x8xf32>
    %117 = tpu.matmul %115, %116, %cst_70 {dimension_numbers = #tpu.dot_dimension_numbers<[1], [0], [0], [1], [0, 0, 1, 1], [], []>} : vector<8x8xbf16>, vector<8x8xbf16>, vector<8x8xf32> -> vector<8x8xf32>
    %118 = arith.addf %114, %117 : vector<8x8xf32>
    %c2_71 = arith.constant 2 : index
    %c0_72 = arith.constant 0 : index
    %c0_73 = arith.constant 0 : index
    %119 = vector.load %arg11[%c2_71, %c0_72, %c0_73] : memref<4x8x8xf32, #tpu.memory_space<vmem>>, vector<1x8x8xf32>
    %120 = vector.shape_cast %119 : vector<1x8x8xf32> to vector<8x8xf32>
    %121 = vector.shape_cast %118 : vector<8x8xf32> to vector<1x8x8xf32>
    tpu.vector_store %arg11[%c2_71, %c0_72, %c0_73], %121 {strides = array<i32>} : memref<4x8x8xf32, #tpu.memory_space<vmem>>, vector<1x8x8xf32>,
    %c2_74 = arith.constant 2 : index
    %c0_75 = arith.constant 0 : index
    %c0_76 = arith.constant 0 : index
    %122 = vector.load %arg9[%c2_74, %c0_75, %c0_76] : memref<4x8x1xf32, #tpu.memory_space<vmem>>, vector<1x8x1xf32>
    %123 = vector.shape_cast %122 : vector<1x8x1xf32> to vector<8x1xf32>
    %124 = vector.shape_cast %96 : vector<8x1xf32> to vector<1x8x1xf32>
    tpu.vector_store %arg9[%c2_74, %c0_75, %c0_76], %124 {strides = array<i32>} : memref<4x8x1xf32, #tpu.memory_space<vmem>>, vector<1x8x1xf32>,
    %125 = vector.extract_strided_slice %4 {offsets = [0, 24], sizes = [8, 8], strides = [1, 1]} : vector<8x32xbf16> to vector<8x8xbf16>
    %126 = vector.extract_strided_slice %6 {offsets = [0, 24], sizes = [8, 8], strides = [1, 1]} : vector<8x32xbf16> to vector<8x8xbf16>
    %cst_77 = arith.constant dense<0.000000e+00> : vector<8x8xf32>
    %127 = tpu.matmul %125, %126, %cst_77 {dimension_numbers = #tpu.dot_dimension_numbers<[1], [1], [0], [0], [0, 0, 1, 0], [], []>} : vector<8x8xbf16>, vector<8x8xbf16>, vector<8x8xf32> -> vector<8x8xf32>
    %128 = arith.addf %127, %13 : vector<8x8xf32>
    %c3 = arith.constant 3 : index
    %c0_78 = arith.constant 0 : index
    %c0_79 = arith.constant 0 : index
    %129 = vector.load %arg9[%c3, %c0_78, %c0_79] : memref<4x8x1xf32, #tpu.memory_space<vmem>>, vector<1x8x1xf32>
    %130 = vector.shape_cast %129 : vector<1x8x1xf32> to vector<8x1xf32>
    %cst_80 = arith.constant dense<0xFF800000> : vector<8xf32>
    %131 = vector.multi_reduction <maximumf>, %128, %cst_80 [1] : vector<8x8xf32> to vector<8xf32>
    %132 = vector.shape_cast %131 : vector<8xf32> to vector<8x1xf32>
    %133 = arith.maximumf %130, %132 : vector<8x1xf32>
    %134 = arith.subf %130, %133 : vector<8x1xf32>
    %135 = math.exp %134 : vector<8x1xf32>
    %136 = vector.broadcast %133 : vector<8x1xf32> to vector<8x8xf32>
    %137 = arith.subf %128, %136 : vector<8x8xf32>
    %138 = math.exp %137 : vector<8x8xf32>
    %c3_81 = arith.constant 3 : index
    %c0_82 = arith.constant 0 : index
    %c0_83 = arith.constant 0 : index
    %139 = vector.load %arg10[%c3_81, %c0_82, %c0_83] : memref<4x8x1xf32, #tpu.memory_space<vmem>>, vector<1x8x1xf32>
    %140 = vector.shape_cast %139 : vector<1x8x1xf32> to vector<8x1xf32>
    %141 = arith.mulf %135, %140 : vector<8x1xf32>
    %cst_84 = arith.constant dense<0.000000e+00> : vector<8xf32>
    %142 = vector.multi_reduction <add>, %138, %cst_84 [1] : vector<8x8xf32> to vector<8xf32>
    %143 = vector.shape_cast %142 : vector<8xf32> to vector<8x1xf32>
    %144 = arith.addf %141, %143 : vector<8x1xf32>
    %c3_85 = arith.constant 3 : index
    %c0_86 = arith.constant 0 : index
    %c0_87 = arith.constant 0 : index
    %145 = vector.load %arg10[%c3_85, %c0_86, %c0_87] : memref<4x8x1xf32, #tpu.memory_space<vmem>>, vector<1x8x1xf32>
    %146 = vector.shape_cast %145 : vector<1x8x1xf32> to vector<8x1xf32>
    %147 = vector.shape_cast %144 : vector<8x1xf32> to vector<1x8x1xf32>
    tpu.vector_store %arg10[%c3_85, %c0_86, %c0_87], %147 {strides = array<i32>} : memref<4x8x1xf32, #tpu.memory_space<vmem>>, vector<1x8x1xf32>,
    %c3_88 = arith.constant 3 : index
    %c0_89 = arith.constant 0 : index
    %c0_90 = arith.constant 0 : index
    %148 = vector.load %arg11[%c3_88, %c0_89, %c0_90] : memref<4x8x8xf32, #tpu.memory_space<vmem>>, vector<1x8x8xf32>
    %149 = vector.shape_cast %148 : vector<1x8x8xf32> to vector<8x8xf32>
    %150 = vector.broadcast %135 : vector<8x1xf32> to vector<8x8xf32>
    %151 = arith.mulf %150, %149 : vector<8x8xf32>
    %152 = arith.truncf %138 : vector<8x8xf32> to vector<8x8xbf16>
    %153 = vector.extract_strided_slice %8 {offsets = [0, 24], sizes = [8, 8], strides = [1, 1]} : vector<8x32xbf16> to vector<8x8xbf16>
    %cst_91 = arith.constant dense<0.000000e+00> : vector<8x8xf32>
    %154 = tpu.matmul %152, %153, %cst_91 {dimension_numbers = #tpu.dot_dimension_numbers<[1], [0], [0], [1], [0, 0, 1, 1], [], []>} : vector<8x8xbf16>, vector<8x8xbf16>, vector<8x8xf32> -> vector<8x8xf32>
    %155 = arith.addf %151, %154 : vector<8x8xf32>
    %c3_92 = arith.constant 3 : index
    %c0_93 = arith.constant 0 : index
    %c0_94 = arith.constant 0 : index
    %156 = vector.load %arg11[%c3_92, %c0_93, %c0_94] : memref<4x8x8xf32, #tpu.memory_space<vmem>>, vector<1x8x8xf32>
    %157 = vector.shape_cast %156 : vector<1x8x8xf32> to vector<8x8xf32>
    %158 = vector.shape_cast %155 : vector<8x8xf32> to vector<1x8x8xf32>
    tpu.vector_store %arg11[%c3_92, %c0_93, %c0_94], %158 {strides = array<i32>} : memref<4x8x8xf32, #tpu.memory_space<vmem>>, vector<1x8x8xf32>,
    %c3_95 = arith.constant 3 : index
    %c0_96 = arith.constant 0 : index
    %c0_97 = arith.constant 0 : index
    %159 = vector.load %arg9[%c3_95, %c0_96, %c0_97] : memref<4x8x1xf32, #tpu.memory_space<vmem>>, vector<1x8x1xf32>
    %160 = vector.shape_cast %159 : vector<1x8x1xf32> to vector<8x1xf32>
    %161 = vector.shape_cast %133 : vector<8x1xf32> to vector<1x8x1xf32>
    tpu.vector_store %arg9[%c3_95, %c0_96, %c0_97], %161 {strides = array<i32>} : memref<4x8x1xf32, #tpu.memory_space<vmem>>, vector<1x8x1xf32>,
    %c0_i32_98 = arith.constant 0 : i32
    %162 = arith.cmpi eq, %arg2, %c0_i32_98 : i32
    %163 = arith.extui %162 : i1 to i32
    %c0_i32_99 = arith.constant 0 : i32
    %164 = arith.cmpi ne, %163, %c0_i32_99 : i32
    scf.if %164 {
      %c0_100 = arith.constant 0 : index
      %c0_101 = arith.constant 0 : index
      %c0_102 = arith.constant 0 : index
      %165 = vector.load %arg10[%c0_100, %c0_101, %c0_102] : memref<4x8x1xf32, #tpu.memory_space<vmem>>, vector<1x8x1xf32>
      %166 = vector.shape_cast %165 : vector<1x8x1xf32> to vector<8x1xf32>
      %cst_103 = arith.constant 9.99999968E-21 : f32
      %167 = vector.broadcast %cst_103 : f32 to vector<8x1xf32>
      %168 = arith.maximumf %166, %167 : vector<8x1xf32>
      %169 = tpu.reciprocal %168 {approx = true} : vector<8x1xf32> -> vector<8x1xf32>
      %c0_104 = arith.constant 0 : index
      %c0_105 = arith.constant 0 : index
      %c0_106 = arith.constant 0 : index
      %170 = vector.load %arg11[%c0_104, %c0_105, %c0_106] : memref<4x8x8xf32, #tpu.memory_space<vmem>>, vector<1x8x8xf32>
      %171 = vector.shape_cast %170 : vector<1x8x8xf32> to vector<8x8xf32>
      %172 = vector.broadcast %169 : vector<8x1xf32> to vector<8x8xf32>
      %173 = arith.mulf %171, %172 : vector<8x8xf32>
      %174 = arith.truncf %173 : vector<8x8xf32> to vector<8x8xbf16>
      %c0_107 = arith.constant 0 : index
      %c0_108 = arith.constant 0 : index
      %c0_109 = arith.constant 0 : index
      %175 = vector.load %arg8[%c0_107, %c0_108, %c0_109] : memref<1x8x32xbf16, #tpu.memory_space<vmem>>, vector<1x8x8xbf16>
      %176 = vector.shape_cast %175 : vector<1x8x8xbf16> to vector<8x8xbf16>
      %177 = vector.shape_cast %174 : vector<8x8xbf16> to vector<1x8x8xbf16>
      tpu.vector_store %arg8[%c0_107, %c0_108, %c0_109], %177 {strides = array<i32>} : memref<1x8x32xbf16, #tpu.memory_space<vmem>>, vector<1x8x8xbf16>,
      %c1_110 = arith.constant 1 : index
      %c0_111 = arith.constant 0 : index
      %c0_112 = arith.constant 0 : index
      %178 = vector.load %arg10[%c1_110, %c0_111, %c0_112] : memref<4x8x1xf32, #tpu.memory_space<vmem>>, vector<1x8x1xf32>
      %179 = vector.shape_cast %178 : vector<1x8x1xf32> to vector<8x1xf32>
      %cst_113 = arith.constant 9.99999968E-21 : f32
      %180 = vector.broadcast %cst_113 : f32 to vector<8x1xf32>
      %181 = arith.maximumf %179, %180 : vector<8x1xf32>
      %182 = tpu.reciprocal %181 {approx = true} : vector<8x1xf32> -> vector<8x1xf32>
      %c1_114 = arith.constant 1 : index
      %c0_115 = arith.constant 0 : index
      %c0_116 = arith.constant 0 : index
      %183 = vector.load %arg11[%c1_114, %c0_115, %c0_116] : memref<4x8x8xf32, #tpu.memory_space<vmem>>, vector<1x8x8xf32>
      %184 = vector.shape_cast %183 : vector<1x8x8xf32> to vector<8x8xf32>
      %185 = vector.broadcast %182 : vector<8x1xf32> to vector<8x8xf32>
      %186 = arith.mulf %184, %185 : vector<8x8xf32>
      %187 = arith.truncf %186 : vector<8x8xf32> to vector<8x8xbf16>
      %c0_117 = arith.constant 0 : index
      %c0_118 = arith.constant 0 : index
      %c8 = arith.constant 8 : index
      %188 = vector.load %arg8[%c0_117, %c0_118, %c8] : memref<1x8x32xbf16, #tpu.memory_space<vmem>>, vector<1x8x8xbf16>
      %189 = vector.shape_cast %188 : vector<1x8x8xbf16> to vector<8x8xbf16>
      %190 = vector.shape_cast %187 : vector<8x8xbf16> to vector<1x8x8xbf16>
      tpu.vector_store %arg8[%c0_117, %c0_118, %c8], %190 {strides = array<i32>} : memref<1x8x32xbf16, #tpu.memory_space<vmem>>, vector<1x8x8xbf16>,
      %c2_119 = arith.constant 2 : index
      %c0_120 = arith.constant 0 : index
      %c0_121 = arith.constant 0 : index
      %191 = vector.load %arg10[%c2_119, %c0_120, %c0_121] : memref<4x8x1xf32, #tpu.memory_space<vmem>>, vector<1x8x1xf32>
      %192 = vector.shape_cast %191 : vector<1x8x1xf32> to vector<8x1xf32>
      %cst_122 = arith.constant 9.99999968E-21 : f32
      %193 = vector.broadcast %cst_122 : f32 to vector<8x1xf32>
      %194 = arith.maximumf %192, %193 : vector<8x1xf32>
      %195 = tpu.reciprocal %194 {approx = true} : vector<8x1xf32> -> vector<8x1xf32>
      %c2_123 = arith.constant 2 : index
      %c0_124 = arith.constant 0 : index
      %c0_125 = arith.constant 0 : index
      %196 = vector.load %arg11[%c2_123, %c0_124, %c0_125] : memref<4x8x8xf32, #tpu.memory_space<vmem>>, vector<1x8x8xf32>
      %197 = vector.shape_cast %196 : vector<1x8x8xf32> to vector<8x8xf32>
      %198 = vector.broadcast %195 : vector<8x1xf32> to vector<8x8xf32>
      %199 = arith.mulf %197, %198 : vector<8x8xf32>
      %200 = arith.truncf %199 : vector<8x8xf32> to vector<8x8xbf16>
      %c0_126 = arith.constant 0 : index
      %c0_127 = arith.constant 0 : index
      %c16 = arith.constant 16 : index
      %201 = vector.load %arg8[%c0_126, %c0_127, %c16] : memref<1x8x32xbf16, #tpu.memory_space<vmem>>, vector<1x8x8xbf16>
      %202 = vector.shape_cast %201 : vector<1x8x8xbf16> to vector<8x8xbf16>
      %203 = vector.shape_cast %200 : vector<8x8xbf16> to vector<1x8x8xbf16>
      tpu.vector_store %arg8[%c0_126, %c0_127, %c16], %203 {strides = array<i32>} : memref<1x8x32xbf16, #tpu.memory_space<vmem>>, vector<1x8x8xbf16>,
      %c3_128 = arith.constant 3 : index
      %c0_129 = arith.constant 0 : index
      %c0_130 = arith.constant 0 : index
      %204 = vector.load %arg10[%c3_128, %c0_129, %c0_130] : memref<4x8x1xf32, #tpu.memory_space<vmem>>, vector<1x8x1xf32>
      %205 = vector.shape_cast %204 : vector<1x8x1xf32> to vector<8x1xf32>
      %cst_131 = arith.constant 9.99999968E-21 : f32
      %206 = vector.broadcast %cst_131 : f32 to vector<8x1xf32>
      %207 = arith.maximumf %205, %206 : vector<8x1xf32>
      %208 = tpu.reciprocal %207 {approx = true} : vector<8x1xf32> -> vector<8x1xf32>
      %c3_132 = arith.constant 3 : index
      %c0_133 = arith.constant 0 : index
      %c0_134 = arith.constant 0 : index
      %209 = vector.load %arg11[%c3_132, %c0_133, %c0_134] : memref<4x8x8xf32, #tpu.memory_space<vmem>>, vector<1x8x8xf32>
      %210 = vector.shape_cast %209 : vector<1x8x8xf32> to vector<8x8xf32>
      %211 = vector.broadcast %208 : vector<8x1xf32> to vector<8x8xf32>
      %212 = arith.mulf %210, %211 : vector<8x8xf32>
      %213 = arith.truncf %212 : vector<8x8xf32> to vector<8x8xbf16>
      %c0_135 = arith.constant 0 : index
      %c0_136 = arith.constant 0 : index
      %c24 = arith.constant 24 : index
      %214 = vector.load %arg8[%c0_135, %c0_136, %c24] : memref<1x8x32xbf16, #tpu.memory_space<vmem>>, vector<1x8x8xbf16>
      %215 = vector.shape_cast %214 : vector<1x8x8xbf16> to vector<8x8xbf16>
      %216 = vector.shape_cast %213 : vector<8x8xbf16> to vector<1x8x8xbf16>
      tpu.vector_store %arg8[%c0_135, %c0_136, %c24], %216 {strides = array<i32>} : memref<1x8x32xbf16, #tpu.memory_space<vmem>>, vector<1x8x8xbf16>,
    } else {
    }
    return
  }
  func.func @transform_0(%arg0: i32, %arg1: i32, %arg2: i32) -> (i32, i32) {
    %c0_i32 = arith.constant 0 : i32
    return %arg1, %arg2 : i32, i32
  }
  func.func @transform_1(%arg0: i32, %arg1: i32, %arg2: i32) -> (i32, i32, i32) {
    %c0_i32 = arith.constant 0 : i32
    %c0_i32_0 = arith.constant 0 : i32
    return %arg0, %c0_i32, %arg2 : i32, i32, i32
  }
  func.func @transform_2(%arg0: i32, %arg1: i32, %arg2: i32) -> (i32, i32, i32) {
    %c0_i32 = arith.constant 0 : i32
    %c0_i32_0 = arith.constant 0 : i32
    return %arg0, %arg1, %c0_i32 : i32, i32, i32
  }
  func.func @transform_3(%arg0: i32, %arg1: i32, %arg2: i32) -> (i32, i32, i32) {
    %c0_i32 = arith.constant 0 : i32
    %c0_i32_0 = arith.constant 0 : i32
    return %arg0, %arg2, %c0_i32 : i32, i32, i32
  }
  func.func @transform_4(%arg0: i32, %arg1: i32, %arg2: i32) -> (i32, i32, i32) {
    %c0_i32 = arith.constant 0 : i32
    %c0_i32_0 = arith.constant 0 : i32
    return %arg0, %arg2, %c0_i32 : i32, i32, i32
  }
  func.func @transform_5(%arg0: i32, %arg1: i32, %arg2: i32) -> (i32, i32, i32) {
    %c0_i32 = arith.constant 0 : i32
    %c0_i32_0 = arith.constant 0 : i32
    return %arg0, %arg1, %c0_i32 : i32, i32, i32
  }
}

module attributes {stable_mosaic.version = 11 : i64} {
  func.func @_qkv_kernel(%arg0: i32, %arg1: memref<16x32xf32, #tpu.memory_space<vmem>>, %arg2: memref<16x32xf32, #tpu.memory_space<vmem>>, %arg3: memref<32x64xbf16, #tpu.memory_space<vmem>>, %arg4: memref<32x32xbf16, #tpu.memory_space<vmem>>, %arg5: memref<1x64xf32, #tpu.memory_space<vmem>>, %arg6: memref<1x32xf32, #tpu.memory_space<vmem>>, %arg7: memref<16x32xbf16, #tpu.memory_space<vmem>>, %arg8: memref<16x32xbf16, #tpu.memory_space<vmem>>, %arg9: memref<16x32xbf16, #tpu.memory_space<vmem>>) attributes {dimension_semantics = [#tpu.dimension_semantics<parallel>], iteration_bounds = array<i64: 1>, scalar_prefetch = 0 : i64, scratch_operands = 0 : i64, tpu.core_type = #tpu.core_type<tc>, window_params = [{transform_indices = @transform_0, window_bounds = array<i64: 16, 32>}, {transform_indices = @transform_1, window_bounds = array<i64: 16, 32>}, {pipeline_mode = #tpu.pipeline_mode<synchronous>, transform_indices = @transform_2, window_bounds = array<i64: 32, 64>}, {pipeline_mode = #tpu.pipeline_mode<synchronous>, transform_indices = @transform_3, window_bounds = array<i64: 32, 32>}, {pipeline_mode = #tpu.pipeline_mode<synchronous>, transform_indices = @transform_4, window_bounds = array<i64: 1, 64>}, {pipeline_mode = #tpu.pipeline_mode<synchronous>, transform_indices = @transform_5, window_bounds = array<i64: 1, 32>}, {transform_indices = @transform_6, window_bounds = array<i64: 16, 32>}, {transform_indices = @transform_7, window_bounds = array<i64: 16, 32>}, {transform_indices = @transform_8, window_bounds = array<i64: 16, 32>}]} {
    %c0 = arith.constant 0 : index
    %c0_0 = arith.constant 0 : index
    %0 = vector.load %arg1[%c0, %c0_0] : memref<16x32xf32, #tpu.memory_space<vmem>>, vector<16x32xf32>
    %c0_1 = arith.constant 0 : index
    %c0_2 = arith.constant 0 : index
    %1 = vector.load %arg2[%c0_1, %c0_2] : memref<16x32xf32, #tpu.memory_space<vmem>>, vector<16x32xf32>
    %2 = arith.addf %0, %1 : vector<16x32xf32>
    %3 = arith.truncf %2 : vector<16x32xf32> to vector<16x32xbf16>
    %c0_3 = arith.constant 0 : index
    %c0_4 = arith.constant 0 : index
    %4 = vector.load %arg3[%c0_3, %c0_4] : memref<32x64xbf16, #tpu.memory_space<vmem>>, vector<32x64xbf16>
    %cst = arith.constant dense<0.000000e+00> : vector<16x64xf32>
    %5 = tpu.matmul %3, %4, %cst {dimension_numbers = #tpu.dot_dimension_numbers<[1], [0], [0], [1], [0, 0, 1, 1], [], []>} : vector<16x32xbf16>, vector<32x64xbf16>, vector<16x64xf32> -> vector<16x64xf32>
    %c0_5 = arith.constant 0 : index
    %c0_6 = arith.constant 0 : index
    %6 = vector.load %arg5[%c0_5, %c0_6] : memref<1x64xf32, #tpu.memory_space<vmem>>, vector<1x64xf32>
    %7 = vector.broadcast %6 : vector<1x64xf32> to vector<16x64xf32>
    %8 = arith.addf %5, %7 : vector<16x64xf32>
    %9 = arith.truncf %0 : vector<16x32xf32> to vector<16x32xbf16>
    %c0_7 = arith.constant 0 : index
    %c0_8 = arith.constant 0 : index
    %10 = vector.load %arg4[%c0_7, %c0_8] : memref<32x32xbf16, #tpu.memory_space<vmem>>, vector<32x32xbf16>
    %cst_9 = arith.constant dense<0.000000e+00> : vector<16x32xf32>
    %11 = tpu.matmul %9, %10, %cst_9 {dimension_numbers = #tpu.dot_dimension_numbers<[1], [0], [0], [1], [0, 0, 1, 1], [], []>} : vector<16x32xbf16>, vector<32x32xbf16>, vector<16x32xf32> -> vector<16x32xf32>
    %c0_10 = arith.constant 0 : index
    %c0_11 = arith.constant 0 : index
    %12 = vector.load %arg6[%c0_10, %c0_11] : memref<1x32xf32, #tpu.memory_space<vmem>>, vector<1x32xf32>
    %13 = vector.broadcast %12 : vector<1x32xf32> to vector<16x32xf32>
    %14 = arith.addf %11, %13 : vector<16x32xf32>
    %15 = vector.extract_strided_slice %8 {offsets = [0, 0], sizes = [16, 32], strides = [1, 1]} : vector<16x64xf32> to vector<16x32xf32>
    %16 = arith.truncf %15 : vector<16x32xf32> to vector<16x32xbf16>
    %c0_12 = arith.constant 0 : index
    %c0_13 = arith.constant 0 : index
    %17 = vector.load %arg7[%c0_12, %c0_13] : memref<16x32xbf16, #tpu.memory_space<vmem>>, vector<16x32xbf16>
    tpu.vector_store %arg7[%c0_12, %c0_13], %16 {strides = array<i32>} : memref<16x32xbf16, #tpu.memory_space<vmem>>, vector<16x32xbf16>,
    %18 = vector.extract_strided_slice %8 {offsets = [0, 32], sizes = [16, 32], strides = [1, 1]} : vector<16x64xf32> to vector<16x32xf32>
    %19 = arith.truncf %18 : vector<16x32xf32> to vector<16x32xbf16>
    %c0_14 = arith.constant 0 : index
    %c0_15 = arith.constant 0 : index
    %20 = vector.load %arg8[%c0_14, %c0_15] : memref<16x32xbf16, #tpu.memory_space<vmem>>, vector<16x32xbf16>
    tpu.vector_store %arg8[%c0_14, %c0_15], %19 {strides = array<i32>} : memref<16x32xbf16, #tpu.memory_space<vmem>>, vector<16x32xbf16>,
    %21 = arith.truncf %14 : vector<16x32xf32> to vector<16x32xbf16>
    %c0_16 = arith.constant 0 : index
    %c0_17 = arith.constant 0 : index
    %22 = vector.load %arg9[%c0_16, %c0_17] : memref<16x32xbf16, #tpu.memory_space<vmem>>, vector<16x32xbf16>
    tpu.vector_store %arg9[%c0_16, %c0_17], %21 {strides = array<i32>} : memref<16x32xbf16, #tpu.memory_space<vmem>>, vector<16x32xbf16>,
    return
  }
  func.func @transform_0(%arg0: i32) -> (i32, i32) {
    %c0_i32 = arith.constant 0 : i32
    %c0_i32_0 = arith.constant 0 : i32
    return %arg0, %c0_i32 : i32, i32
  }
  func.func @transform_1(%arg0: i32) -> (i32, i32) {
    %c0_i32 = arith.constant 0 : i32
    %c0_i32_0 = arith.constant 0 : i32
    return %arg0, %c0_i32 : i32, i32
  }
  func.func @transform_2(%arg0: i32) -> (i32, i32) {
    %c0_i32 = arith.constant 0 : i32
    %c0_i32_0 = arith.constant 0 : i32
    %c0_i32_1 = arith.constant 0 : i32
    return %c0_i32, %c0_i32_0 : i32, i32
  }
  func.func @transform_3(%arg0: i32) -> (i32, i32) {
    %c0_i32 = arith.constant 0 : i32
    %c0_i32_0 = arith.constant 0 : i32
    %c0_i32_1 = arith.constant 0 : i32
    return %c0_i32, %c0_i32_0 : i32, i32
  }
  func.func @transform_4(%arg0: i32) -> (i32, i32) {
    %c0_i32 = arith.constant 0 : i32
    %c0_i32_0 = arith.constant 0 : i32
    %c0_i32_1 = arith.constant 0 : i32
    return %c0_i32, %c0_i32_0 : i32, i32
  }
  func.func @transform_5(%arg0: i32) -> (i32, i32) {
    %c0_i32 = arith.constant 0 : i32
    %c0_i32_0 = arith.constant 0 : i32
    %c0_i32_1 = arith.constant 0 : i32
    return %c0_i32, %c0_i32_0 : i32, i32
  }
  func.func @transform_6(%arg0: i32) -> (i32, i32) {
    %c0_i32 = arith.constant 0 : i32
    %c0_i32_0 = arith.constant 0 : i32
    return %arg0, %c0_i32 : i32, i32
  }
  func.func @transform_7(%arg0: i32) -> (i32, i32) {
    %c0_i32 = arith.constant 0 : i32
    %c0_i32_0 = arith.constant 0 : i32
    return %arg0, %c0_i32 : i32, i32
  }
  func.func @transform_8(%arg0: i32) -> (i32, i32) {
    %c0_i32 = arith.constant 0 : i32
    %c0_i32_0 = arith.constant 0 : i32
    return %arg0, %c0_i32 : i32, i32
  }
}

module attributes {stable_mosaic.version = 11 : i64} {
  func.func @_proj_add_ln_kernel(%arg0: i32, %arg1: memref<16x32xbf16, #tpu.memory_space<vmem>>, %arg2: memref<16x32xf32, #tpu.memory_space<vmem>>, %arg3: memref<32x32xbf16, #tpu.memory_space<vmem>>, %arg4: memref<1x32xf32, #tpu.memory_space<vmem>>, %arg5: memref<1x32xf32, #tpu.memory_space<vmem>>, %arg6: memref<1x32xf32, #tpu.memory_space<vmem>>, %arg7: memref<16x32xbf16, #tpu.memory_space<vmem>>) attributes {dimension_semantics = [#tpu.dimension_semantics<parallel>], iteration_bounds = array<i64: 1>, scalar_prefetch = 0 : i64, scratch_operands = 0 : i64, tpu.core_type = #tpu.core_type<tc>, window_params = [{transform_indices = @transform_0, window_bounds = array<i64: 16, 32>}, {transform_indices = @transform_1, window_bounds = array<i64: 16, 32>}, {pipeline_mode = #tpu.pipeline_mode<synchronous>, transform_indices = @transform_2, window_bounds = array<i64: 32, 32>}, {pipeline_mode = #tpu.pipeline_mode<synchronous>, transform_indices = @transform_3, window_bounds = array<i64: 1, 32>}, {pipeline_mode = #tpu.pipeline_mode<synchronous>, transform_indices = @transform_4, window_bounds = array<i64: 1, 32>}, {pipeline_mode = #tpu.pipeline_mode<synchronous>, transform_indices = @transform_5, window_bounds = array<i64: 1, 32>}, {transform_indices = @transform_6, window_bounds = array<i64: 16, 32>}]} {
    %c0 = arith.constant 0 : index
    %c0_0 = arith.constant 0 : index
    %0 = vector.load %arg1[%c0, %c0_0] : memref<16x32xbf16, #tpu.memory_space<vmem>>, vector<16x32xbf16>
    %c0_1 = arith.constant 0 : index
    %c0_2 = arith.constant 0 : index
    %1 = vector.load %arg3[%c0_1, %c0_2] : memref<32x32xbf16, #tpu.memory_space<vmem>>, vector<32x32xbf16>
    %cst = arith.constant dense<0.000000e+00> : vector<16x32xf32>
    %2 = tpu.matmul %0, %1, %cst {dimension_numbers = #tpu.dot_dimension_numbers<[1], [0], [0], [1], [0, 0, 1, 1], [], []>} : vector<16x32xbf16>, vector<32x32xbf16>, vector<16x32xf32> -> vector<16x32xf32>
    %c0_3 = arith.constant 0 : index
    %c0_4 = arith.constant 0 : index
    %3 = vector.load %arg4[%c0_3, %c0_4] : memref<1x32xf32, #tpu.memory_space<vmem>>, vector<1x32xf32>
    %4 = vector.broadcast %3 : vector<1x32xf32> to vector<16x32xf32>
    %5 = arith.addf %2, %4 : vector<16x32xf32>
    %c0_5 = arith.constant 0 : index
    %c0_6 = arith.constant 0 : index
    %6 = vector.load %arg2[%c0_5, %c0_6] : memref<16x32xf32, #tpu.memory_space<vmem>>, vector<16x32xf32>
    %7 = arith.addf %6, %5 : vector<16x32xf32>
    %cst_7 = arith.constant dense<0.000000e+00> : vector<16xf32>
    %8 = vector.multi_reduction <add>, %7, %cst_7 [1] : vector<16x32xf32> to vector<16xf32>
    %9 = vector.shape_cast %8 : vector<16xf32> to vector<16x1xf32>
    %cst_8 = arith.constant 3.200000e+01 : f32
    %10 = vector.broadcast %cst_8 : f32 to vector<16x1xf32>
    %11 = arith.divf %9, %10 : vector<16x1xf32>
    %12 = vector.broadcast %11 : vector<16x1xf32> to vector<16x32xf32>
    %13 = arith.subf %7, %12 : vector<16x32xf32>
    %14 = arith.mulf %13, %13 : vector<16x32xf32>
    %cst_9 = arith.constant dense<0.000000e+00> : vector<16xf32>
    %15 = vector.multi_reduction <add>, %14, %cst_9 [1] : vector<16x32xf32> to vector<16xf32>
    %16 = vector.shape_cast %15 : vector<16xf32> to vector<16x1xf32>
    %cst_10 = arith.constant 3.200000e+01 : f32
    %17 = vector.broadcast %cst_10 : f32 to vector<16x1xf32>
    %18 = arith.divf %16, %17 : vector<16x1xf32>
    %19 = vector.broadcast %11 : vector<16x1xf32> to vector<16x32xf32>
    %20 = arith.subf %7, %19 : vector<16x32xf32>
    %cst_11 = arith.constant 9.99999974E-6 : f32
    %21 = vector.broadcast %cst_11 : f32 to vector<16x1xf32>
    %22 = arith.addf %18, %21 : vector<16x1xf32>
    %23 = math.rsqrt %22 : vector<16x1xf32>
    %24 = vector.broadcast %23 : vector<16x1xf32> to vector<16x32xf32>
    %25 = arith.mulf %20, %24 : vector<16x32xf32>
    %c0_12 = arith.constant 0 : index
    %c0_13 = arith.constant 0 : index
    %26 = vector.load %arg5[%c0_12, %c0_13] : memref<1x32xf32, #tpu.memory_space<vmem>>, vector<1x32xf32>
    %27 = vector.broadcast %26 : vector<1x32xf32> to vector<16x32xf32>
    %28 = arith.mulf %25, %27 : vector<16x32xf32>
    %c0_14 = arith.constant 0 : index
    %c0_15 = arith.constant 0 : index
    %29 = vector.load %arg6[%c0_14, %c0_15] : memref<1x32xf32, #tpu.memory_space<vmem>>, vector<1x32xf32>
    %30 = vector.broadcast %29 : vector<1x32xf32> to vector<16x32xf32>
    %31 = arith.addf %28, %30 : vector<16x32xf32>
    %32 = arith.truncf %31 : vector<16x32xf32> to vector<16x32xbf16>
    %c0_16 = arith.constant 0 : index
    %c0_17 = arith.constant 0 : index
    %33 = vector.load %arg7[%c0_16, %c0_17] : memref<16x32xbf16, #tpu.memory_space<vmem>>, vector<16x32xbf16>
    tpu.vector_store %arg7[%c0_16, %c0_17], %32 {strides = array<i32>} : memref<16x32xbf16, #tpu.memory_space<vmem>>, vector<16x32xbf16>,
    return
  }
  func.func @transform_0(%arg0: i32) -> (i32, i32) {
    %c0_i32 = arith.constant 0 : i32
    %c0_i32_0 = arith.constant 0 : i32
    return %arg0, %c0_i32 : i32, i32
  }
  func.func @transform_1(%arg0: i32) -> (i32, i32) {
    %c0_i32 = arith.constant 0 : i32
    %c0_i32_0 = arith.constant 0 : i32
    return %arg0, %c0_i32 : i32, i32
  }
  func.func @transform_2(%arg0: i32) -> (i32, i32) {
    %c0_i32 = arith.constant 0 : i32
    %c0_i32_0 = arith.constant 0 : i32
    %c0_i32_1 = arith.constant 0 : i32
    return %c0_i32, %c0_i32_0 : i32, i32
  }
  func.func @transform_3(%arg0: i32) -> (i32, i32) {
    %c0_i32 = arith.constant 0 : i32
    %c0_i32_0 = arith.constant 0 : i32
    %c0_i32_1 = arith.constant 0 : i32
    return %c0_i32, %c0_i32_0 : i32, i32
  }
  func.func @transform_4(%arg0: i32) -> (i32, i32) {
    %c0_i32 = arith.constant 0 : i32
    %c0_i32_0 = arith.constant 0 : i32
    %c0_i32_1 = arith.constant 0 : i32
    return %c0_i32, %c0_i32_0 : i32, i32
  }
  func.func @transform_5(%arg0: i32) -> (i32, i32) {
    %c0_i32 = arith.constant 0 : i32
    %c0_i32_0 = arith.constant 0 : i32
    %c0_i32_1 = arith.constant 0 : i32
    return %c0_i32, %c0_i32_0 : i32, i32
  }
  func.func @transform_6(%arg0: i32) -> (i32, i32) {
    %c0_i32 = arith.constant 0 : i32
    %c0_i32_0 = arith.constant 0 : i32
    return %arg0, %c0_i32 : i32, i32
  }
}

module attributes {stable_mosaic.version = 11 : i64} {
  func.func @_ffn_add_ln_kernel(%arg0: i32, %arg1: i32, %arg2: memref<16x32xbf16, #tpu.memory_space<vmem>>, %arg3: memref<32x64xbf16, #tpu.memory_space<vmem>>, %arg4: memref<1x64xf32, #tpu.memory_space<vmem>>, %arg5: memref<64x32xbf16, #tpu.memory_space<vmem>>, %arg6: memref<1x32xf32, #tpu.memory_space<vmem>>, %arg7: memref<1x32xf32, #tpu.memory_space<vmem>>, %arg8: memref<1x32xf32, #tpu.memory_space<vmem>>, %arg9: memref<16x32xf32, #tpu.memory_space<vmem>>, %arg10: memref<16x32xf32, #tpu.memory_space<vmem>>) attributes {dimension_semantics = [#tpu.dimension_semantics<parallel>, #tpu.dimension_semantics<arbitrary>], iteration_bounds = array<i64: 1, 1>, scalar_prefetch = 0 : i64, scratch_operands = 1 : i64, tpu.core_type = #tpu.core_type<tc>, window_params = [{transform_indices = @transform_0, window_bounds = array<i64: 16, 32>}, {pipeline_mode = #tpu.pipeline_mode<synchronous>, transform_indices = @transform_1, window_bounds = array<i64: 32, 64>}, {pipeline_mode = #tpu.pipeline_mode<synchronous>, transform_indices = @transform_2, window_bounds = array<i64: 1, 64>}, {pipeline_mode = #tpu.pipeline_mode<synchronous>, transform_indices = @transform_3, window_bounds = array<i64: 64, 32>}, {pipeline_mode = #tpu.pipeline_mode<synchronous>, transform_indices = @transform_4, window_bounds = array<i64: 1, 32>}, {pipeline_mode = #tpu.pipeline_mode<synchronous>, transform_indices = @transform_5, window_bounds = array<i64: 1, 32>}, {pipeline_mode = #tpu.pipeline_mode<synchronous>, transform_indices = @transform_6, window_bounds = array<i64: 1, 32>}, {transform_indices = @transform_7, window_bounds = array<i64: 16, 32>}]} {
    %c0_i32 = arith.constant 0 : i32
    %0 = arith.cmpi eq, %arg1, %c0_i32 : i32
    %1 = arith.extui %0 : i1 to i32
    %c0_i32_0 = arith.constant 0 : i32
    %2 = arith.cmpi ne, %1, %c0_i32_0 : i32
    scf.if %2 {
      %cst_16 = arith.constant 0.000000e+00 : f32
      %20 = vector.broadcast %cst_16 : f32 to vector<16x32xf32>
      %c0_17 = arith.constant 0 : index
      %c0_18 = arith.constant 0 : index
      %21 = vector.load %arg10[%c0_17, %c0_18] : memref<16x32xf32, #tpu.memory_space<vmem>>, vector<16x32xf32>
      tpu.vector_store %arg10[%c0_17, %c0_18], %20 {strides = array<i32>} : memref<16x32xf32, #tpu.memory_space<vmem>>, vector<16x32xf32>,
    } else {
    }
    %c0 = arith.constant 0 : index
    %c0_1 = arith.constant 0 : index
    %3 = vector.load %arg2[%c0, %c0_1] : memref<16x32xbf16, #tpu.memory_space<vmem>>, vector<16x32xbf16>
    %c0_2 = arith.constant 0 : index
    %c0_3 = arith.constant 0 : index
    %4 = vector.load %arg3[%c0_2, %c0_3] : memref<32x64xbf16, #tpu.memory_space<vmem>>, vector<32x64xbf16>
    %cst = arith.constant dense<0.000000e+00> : vector<16x64xf32>
    %5 = tpu.matmul %3, %4, %cst {dimension_numbers = #tpu.dot_dimension_numbers<[1], [0], [0], [1], [0, 0, 1, 1], [], []>} : vector<16x32xbf16>, vector<32x64xbf16>, vector<16x64xf32> -> vector<16x64xf32>
    %c0_4 = arith.constant 0 : index
    %c0_5 = arith.constant 0 : index
    %6 = vector.load %arg4[%c0_4, %c0_5] : memref<1x64xf32, #tpu.memory_space<vmem>>, vector<1x64xf32>
    %7 = vector.broadcast %6 : vector<1x64xf32> to vector<16x64xf32>
    %8 = arith.addf %5, %7 : vector<16x64xf32>
    %cst_6 = arith.constant 0.000000e+00 : f32
    %9 = vector.broadcast %cst_6 : f32 to vector<16x64xf32>
    %10 = arith.maximumf %8, %9 : vector<16x64xf32>
    %c0_7 = arith.constant 0 : index
    %c0_8 = arith.constant 0 : index
    %11 = vector.load %arg10[%c0_7, %c0_8] : memref<16x32xf32, #tpu.memory_space<vmem>>, vector<16x32xf32>
    %12 = arith.truncf %10 : vector<16x64xf32> to vector<16x64xbf16>
    %c0_9 = arith.constant 0 : index
    %c0_10 = arith.constant 0 : index
    %13 = vector.load %arg5[%c0_9, %c0_10] : memref<64x32xbf16, #tpu.memory_space<vmem>>, vector<64x32xbf16>
    %cst_11 = arith.constant dense<0.000000e+00> : vector<16x32xf32>
    %14 = tpu.matmul %12, %13, %cst_11 {dimension_numbers = #tpu.dot_dimension_numbers<[1], [0], [0], [1], [0, 0, 1, 1], [], []>} : vector<16x64xbf16>, vector<64x32xbf16>, vector<16x32xf32> -> vector<16x32xf32>
    %15 = arith.addf %11, %14 : vector<16x32xf32>
    %c0_12 = arith.constant 0 : index
    %c0_13 = arith.constant 0 : index
    %16 = vector.load %arg10[%c0_12, %c0_13] : memref<16x32xf32, #tpu.memory_space<vmem>>, vector<16x32xf32>
    tpu.vector_store %arg10[%c0_12, %c0_13], %15 {strides = array<i32>} : memref<16x32xf32, #tpu.memory_space<vmem>>, vector<16x32xf32>,
    %c0_i32_14 = arith.constant 0 : i32
    %17 = arith.cmpi eq, %arg1, %c0_i32_14 : i32
    %18 = arith.extui %17 : i1 to i32
    %c0_i32_15 = arith.constant 0 : i32
    %19 = arith.cmpi ne, %18, %c0_i32_15 : i32
    scf.if %19 {
      %20 = arith.extf %3 : vector<16x32xbf16> to vector<16x32xf32>
      %c0_16 = arith.constant 0 : index
      %c0_17 = arith.constant 0 : index
      %21 = vector.load %arg10[%c0_16, %c0_17] : memref<16x32xf32, #tpu.memory_space<vmem>>, vector<16x32xf32>
      %22 = arith.addf %20, %21 : vector<16x32xf32>
      %c0_18 = arith.constant 0 : index
      %c0_19 = arith.constant 0 : index
      %23 = vector.load %arg6[%c0_18, %c0_19] : memref<1x32xf32, #tpu.memory_space<vmem>>, vector<1x32xf32>
      %24 = vector.broadcast %23 : vector<1x32xf32> to vector<16x32xf32>
      %25 = arith.addf %22, %24 : vector<16x32xf32>
      %cst_20 = arith.constant dense<0.000000e+00> : vector<16xf32>
      %26 = vector.multi_reduction <add>, %25, %cst_20 [1] : vector<16x32xf32> to vector<16xf32>
      %27 = vector.shape_cast %26 : vector<16xf32> to vector<16x1xf32>
      %cst_21 = arith.constant 3.200000e+01 : f32
      %28 = vector.broadcast %cst_21 : f32 to vector<16x1xf32>
      %29 = arith.divf %27, %28 : vector<16x1xf32>
      %30 = vector.broadcast %29 : vector<16x1xf32> to vector<16x32xf32>
      %31 = arith.subf %25, %30 : vector<16x32xf32>
      %32 = arith.mulf %31, %31 : vector<16x32xf32>
      %cst_22 = arith.constant dense<0.000000e+00> : vector<16xf32>
      %33 = vector.multi_reduction <add>, %32, %cst_22 [1] : vector<16x32xf32> to vector<16xf32>
      %34 = vector.shape_cast %33 : vector<16xf32> to vector<16x1xf32>
      %cst_23 = arith.constant 3.200000e+01 : f32
      %35 = vector.broadcast %cst_23 : f32 to vector<16x1xf32>
      %36 = arith.divf %34, %35 : vector<16x1xf32>
      %37 = vector.broadcast %29 : vector<16x1xf32> to vector<16x32xf32>
      %38 = arith.subf %25, %37 : vector<16x32xf32>
      %cst_24 = arith.constant 9.99999974E-6 : f32
      %39 = vector.broadcast %cst_24 : f32 to vector<16x1xf32>
      %40 = arith.addf %36, %39 : vector<16x1xf32>
      %41 = math.rsqrt %40 : vector<16x1xf32>
      %42 = vector.broadcast %41 : vector<16x1xf32> to vector<16x32xf32>
      %43 = arith.mulf %38, %42 : vector<16x32xf32>
      %c0_25 = arith.constant 0 : index
      %c0_26 = arith.constant 0 : index
      %44 = vector.load %arg7[%c0_25, %c0_26] : memref<1x32xf32, #tpu.memory_space<vmem>>, vector<1x32xf32>
      %45 = vector.broadcast %44 : vector<1x32xf32> to vector<16x32xf32>
      %46 = arith.mulf %43, %45 : vector<16x32xf32>
      %c0_27 = arith.constant 0 : index
      %c0_28 = arith.constant 0 : index
      %47 = vector.load %arg8[%c0_27, %c0_28] : memref<1x32xf32, #tpu.memory_space<vmem>>, vector<1x32xf32>
      %48 = vector.broadcast %47 : vector<1x32xf32> to vector<16x32xf32>
      %49 = arith.addf %46, %48 : vector<16x32xf32>
      %c0_29 = arith.constant 0 : index
      %c0_30 = arith.constant 0 : index
      %50 = vector.load %arg9[%c0_29, %c0_30] : memref<16x32xf32, #tpu.memory_space<vmem>>, vector<16x32xf32>
      tpu.vector_store %arg9[%c0_29, %c0_30], %49 {strides = array<i32>} : memref<16x32xf32, #tpu.memory_space<vmem>>, vector<16x32xf32>,
    } else {
    }
    return
  }
  func.func @transform_0(%arg0: i32, %arg1: i32) -> (i32, i32) {
    %c0_i32 = arith.constant 0 : i32
    %c0_i32_0 = arith.constant 0 : i32
    return %arg0, %c0_i32 : i32, i32
  }
  func.func @transform_1(%arg0: i32, %arg1: i32) -> (i32, i32) {
    %c0_i32 = arith.constant 0 : i32
    %c0_i32_0 = arith.constant 0 : i32
    %c0_i32_1 = arith.constant 0 : i32
    return %c0_i32, %c0_i32_0 : i32, i32
  }
  func.func @transform_2(%arg0: i32, %arg1: i32) -> (i32, i32) {
    %c0_i32 = arith.constant 0 : i32
    %c0_i32_0 = arith.constant 0 : i32
    %c0_i32_1 = arith.constant 0 : i32
    return %c0_i32, %c0_i32_0 : i32, i32
  }
  func.func @transform_3(%arg0: i32, %arg1: i32) -> (i32, i32) {
    %c0_i32 = arith.constant 0 : i32
    %c0_i32_0 = arith.constant 0 : i32
    %c0_i32_1 = arith.constant 0 : i32
    return %c0_i32, %c0_i32_0 : i32, i32
  }
  func.func @transform_4(%arg0: i32, %arg1: i32) -> (i32, i32) {
    %c0_i32 = arith.constant 0 : i32
    %c0_i32_0 = arith.constant 0 : i32
    %c0_i32_1 = arith.constant 0 : i32
    return %c0_i32, %c0_i32_0 : i32, i32
  }
  func.func @transform_5(%arg0: i32, %arg1: i32) -> (i32, i32) {
    %c0_i32 = arith.constant 0 : i32
    %c0_i32_0 = arith.constant 0 : i32
    %c0_i32_1 = arith.constant 0 : i32
    return %c0_i32, %c0_i32_0 : i32, i32
  }
  func.func @transform_6(%arg0: i32, %arg1: i32) -> (i32, i32) {
    %c0_i32 = arith.constant 0 : i32
    %c0_i32_0 = arith.constant 0 : i32
    %c0_i32_1 = arith.constant 0 : i32
    return %c0_i32, %c0_i32_0 : i32, i32
  }
  func.func @transform_7(%arg0: i32, %arg1: i32) -> (i32, i32) {
    %c0_i32 = arith.constant 0 : i32
    %c0_i32_0 = arith.constant 0 : i32
    return %arg0, %c0_i32 : i32, i32
  }
}

</mosaic_0001>

<llo_original>
// kernel: tpu_custom_call.1
$region0: #{tpu_custom_call.1}
  #allocation0 [shape = 'u32[]', space=smem, size = 0x4, offset = 0x4, fixed_abs, tag = 'smem constant byte address 0x4 - core index']
  #allocation1 [shape = 'u32[144,128]{1,0:T(1,128)}', space=vmem, size = 0x12000, scoped, tag = 'internal scratch']
  %s0 = inlined_call_operand.hbm [shape: f32[8,128], index: 0, kind: input, shape index: {}]
  %s1 = inlined_call_operand.hbm [shape: f32[8,128], index: 1, kind: output, shape index: {}]
  %s2 = sld [smem:[#allocation0]]
  $region18: #{tpu_custom_call.1} parent=0
    _
  %s4 = ssub.s32 1, %s2
  %s5 = scalar_select 0, %s4, %s2
  $region1: #{tpu_custom_call.1} parent=0
    #allocation2 [shape = 'u8[4096]{0}', space=vmem, size = 0x1000, scoped, tag = 'input window, operand 0, single buffered']
    #allocation3 [shape = 's32[1]{0}', space=sflag, size = 0x4, scoped, tag = 'scoped memory for tpu_custom_call.1']
    #allocation4 [shape = 's32[1]{0}', space=sflag, size = 0x4, scoped, tag = 'scoped memory for tpu_custom_call.1']
    #allocation5 [shape = 'u8[4096]{0}', space=vmem, size = 0x1000, scoped, tag = 'output window, operand 0, single buffered']
    %6 = vsyncpa [#allocation3], 0
    %7 = vsyncpa [#allocation4], 0
    // Predicated region
    $region2: #{tpu_custom_call.1} parent=1 // pred_check
      _
    $region3: #{tpu_custom_call.1} parent=1 // pred_check_branch
      %9 = sbr.rel (0) target = $region5
    $region4: #{tpu_custom_call.1} parent=1 // pred_region
      %s11 = ssub.s32 128, 128
      %12 = vsyncadd [#allocation3], %s11
      %s14 = sshll.u32 [#allocation2], 4
      %s15 = int_to_ptr.vmem [resolvable:$true] %s14
      %17 = dma.hbm_to_vmem [thread:$0]  %s0, 128, %s15, [#allocation3]
    $region5: #{tpu_custom_call.1} parent=1 // pred_fallthru
      _
    // Predicated region
    $region6: #{tpu_custom_call.1} parent=1 // pred_check
      _
    $region7: #{tpu_custom_call.1} parent=1 // pred_check_branch
      %19 = sbr.rel (0) target = $region9
    $region8: #{tpu_custom_call.1} parent=1 // pred_region
      %20 = dma.done [#allocation3], 128
    $region9: #{tpu_custom_call.1} parent=1 // pred_fallthru
      _
    %v21 = vld [vmem:[#allocation2] sm:$0xff]
    %22 = vst [vmem:[#allocation5] sm:$0xff] %v21
    // Predicated region
    $region10: #{tpu_custom_call.1} parent=1 // pred_check
      _
    $region11: #{tpu_custom_call.1} parent=1 // pred_check_branch
      %24 = sbr.rel (0) target = $region13
    $region12: #{tpu_custom_call.1} parent=1 // pred_region
      %s26 = ssub.s32 128, 128
      %27 = vsyncadd [#allocation4], %s26
      %s29 = sshll.u32 [#allocation5], 4
      %s30 = int_to_ptr.vmem [resolvable:$true] %s29
      %32 = dma.vmem_to_hbm [thread:$0]  %s30, 128, %s1, [#allocation4]
    $region13: #{tpu_custom_call.1} parent=1 // pred_fallthru
      _
    // Predicated region
    $region14: #{tpu_custom_call.1} parent=1 // pred_check
      _
    $region15: #{tpu_custom_call.1} parent=1 // pred_check_branch
      %34 = sbr.rel (0) target = $region17
    $region16: #{tpu_custom_call.1} parent=1 // pred_region
      %35 = dma.done [#allocation4], 128
    $region17: #{tpu_custom_call.1} parent=1 // pred_fallthru
      _
    %36 = vsyncpa [#allocation3], 1
    %37 = vsyncpa [#allocation4], 1

// kernel: transformer_encoder_layer.4
$region0: #{transformer_encoder_layer.4}
  #allocation0 [shape = 'u32[]', space=smem, size = 0x4, offset = 0x4, fixed_abs, tag = 'smem constant byte address 0x4 - core index']
  #allocation1 [shape = 'u32[144,128]{1,0:T(1,128)}', space=vmem, size = 0x12000, scoped, tag = 'internal scratch']
  %s0 = inlined_call_operand.vmem [shape: f32[16,32], index: 0, kind: input, shape index: {}]
  %s1 = inlined_call_operand.vmem [shape: f32[16,32], index: 1, kind: input, shape index: {}]
  %s2 = inlined_call_operand.vmem [shape: bf16[32,64], index: 2, kind: input, shape index: {}]
  %s3 = inlined_call_operand.vmem [shape: bf16[32,32], index: 3, kind: input, shape index: {}]
  %s4 = inlined_call_operand.vmem [shape: f32[1,64], index: 4, kind: input, shape index: {}]
  %s5 = inlined_call_operand.vmem [shape: f32[1,32], index: 5, kind: input, shape index: {}]
  %s6 = inlined_call_operand.vmem [shape: bf16[16,32], index: 6, kind: output, shape index: {0}]
  %s7 = inlined_call_operand.vmem [shape: bf16[16,32], index: 7, kind: output, shape index: {1}]
  %s8 = inlined_call_operand.vmem [shape: bf16[16,32], index: 8, kind: output, shape index: {2}]
  %9 = xla_tuple %s6, %s7, %s8
  %s10 = sld [smem:[#allocation0]]
  $region50: #{transformer_encoder_layer.4} parent=0
    _
  %s12 = ssub.s32 1, %s10
  %s13 = scalar_select 0, %s12, %s10
  // Predicated region
  $region2: #{transformer_encoder_layer.4} parent=0 // pred_check
    _
  $region3: #{transformer_encoder_layer.4} parent=0 // pred_check_branch
    %15 = sbr.rel (0) target = $region5
  $region4: #{transformer_encoder_layer.4} parent=0 // pred_region
    _
  $region5: #{transformer_encoder_layer.4} parent=0 // pred_fallthru
    _
  // Predicated region
  $region6: #{transformer_encoder_layer.4} parent=0 // pred_check
    _
  $region7: #{transformer_encoder_layer.4} parent=0 // pred_check_branch
    %17 = sbr.rel (0) target = $region9
  $region8: #{transformer_encoder_layer.4} parent=0 // pred_region
    _
  $region9: #{transformer_encoder_layer.4} parent=0 // pred_fallthru
    _
  // Predicated region
  $region10: #{transformer_encoder_layer.4} parent=0 // pred_check
    _
  $region11: #{transformer_encoder_layer.4} parent=0 // pred_check_branch
    %19 = sbr.rel (0) target = $region13
  $region12: #{transformer_encoder_layer.4} parent=0 // pred_region
    _
  $region13: #{transformer_encoder_layer.4} parent=0 // pred_fallthru
    _
  // Predicated region
  $region14: #{transformer_encoder_layer.4} parent=0 // pred_check
    _
  $region15: #{transformer_encoder_layer.4} parent=0 // pred_check_branch
    %21 = sbr.rel (0) target = $region17
  $region16: #{transformer_encoder_layer.4} parent=0 // pred_region
    _
  $region17: #{transformer_encoder_layer.4} parent=0 // pred_fallthru
    _
  // Predicated region
  $region18: #{transformer_encoder_layer.4} parent=0 // pred_check
    _
  $region19: #{transformer_encoder_layer.4} parent=0 // pred_check_branch
    %23 = sbr.rel (0) target = $region21
  $region20: #{transformer_encoder_layer.4} parent=0 // pred_region
    _
  $region21: #{transformer_encoder_layer.4} parent=0 // pred_fallthru
    _
  // Predicated region
  $region22: #{transformer_encoder_layer.4} parent=0 // pred_check
    _
  $region23: #{transformer_encoder_layer.4} parent=0 // pred_check_branch
    %25 = sbr.rel (0) target = $region25
  $region24: #{transformer_encoder_layer.4} parent=0 // pred_region
    _
  $region25: #{transformer_encoder_layer.4} parent=0 // pred_fallthru
    _
  %v27 = vld [vmem:[%s0] sm:$0xff]
  %v28 = vld [vmem:[%s0 + $0x8] sm:$0xff]
  %v29 = vld [vmem:[%s1] sm:$0xff]
  %v30 = vld [vmem:[%s1 + $0x8] sm:$0xff]
  %v31 = vadd.f32 %v27, %v29
  %v32 = vadd.f32 %v28, %v30
  %v33 = vpack.c.bf16 %v32, %v31
  %v34 = vld [vmem:[%s2] sm:$0xf]
  %v35 = vld [vmem:[%s2 + $0x4] sm:$0xf]
  %v36 = vld [vmem:[%s2 + $0x8] sm:$0xf]
  %v37 = vld [vmem:[%s2 + $0xc] sm:$0xf]
  %v38 = vld [vmem:[%s4] sm:$0x1]
  %v40 = vlaneseq
  %v41 = vshrl.u32 %v40, 7
  %v42 = vsub.s32 0, %v41
  %v43 = vrot.slane %v38, %v42
  %v49 = vunpack.c.l.b16 %v34
  %v50 = vunpack.c.l.b16 %v35
  %v51 = vunpack.c.l.b16 %v36
  %v52 = vunpack.c.l.b16 %v37
  %v53 = vpack.c.b16 %v50, %v49
  %v54 = vpack.c.b16 %v52, %v51
  %vm57 = vcmask 261120
  %v59 = vsel %vm57, %v33, 0
  %61 = vmatprep.subr.bf16.mxu0 0
  %62 = vmatpush1.bf16.msra.mxu0 %v53
  %63 = vmatprep.subr.bf16.mxu0 0
  %64 = vmatpush1.bf16.msra.mxu0 %v54
  %65 = vmatprep.subr.bf16.mxu0 0
  %66 = vmatpush1.bf16.msra.mxu0 0
  %67 = vmatprep.subr.bf16.mxu0 0
  %68 = vmatpush1.bf16.msra.mxu0 0
  %69 = vmatprep.subr.bf16.mxu0 0
  %70 = vmatpush1.bf16.msra.mxu0 0
  %71 = vmatprep.subr.bf16.mxu0 0
  %72 = vmatpush1.bf16.msra.mxu0 0
  %73 = vmatprep.subr.bf16.mxu0 0
  %74 = vmatpush1.bf16.msra.mxu0 0
  %75 = vmatprep.subr.bf16.mxu0 0
  %76 = vmatpush1.bf16.msra.mxu0 0
  %77 = vmatprep.subr.bf16.mxu0 0
  %78 = vmatpush1.bf16.msra.mxu0 0
  %79 = vmatprep.subr.bf16.mxu0 0
  %80 = vmatpush1.bf16.msra.mxu0 0
  %81 = vmatprep.subr.bf16.mxu0 0
  %82 = vmatpush1.bf16.msra.mxu0 0
  %83 = vmatprep.subr.bf16.mxu0 0
  %84 = vmatpush1.bf16.msra.mxu0 0
  %85 = vmatprep.subr.bf16.mxu0 0
  %86 = vmatpush1.bf16.msra.mxu0 0
  %87 = vmatprep.subr.bf16.mxu0 0
  %88 = vmatpush1.bf16.msra.mxu0 0
  %89 = vmatprep.subr.bf16.mxu0 0
  %90 = vmatpush1.bf16.msra.mxu0 0
  %91 = vmatprep.subr.bf16.mxu0 0
  %92 = vmatpush1.bf16.msra.mxu0 0
  %93 = vmatprep.mubr.bf16.mxu0 0
  %94 = vmatmul.mubr.bf16.gmra.mrb[0].mxu0 %v59
  %v95 = vpop.f32.mrb[0].mxu0
  %v96 = vadd.f32 %v43, %v95
  %v97 = vpop.f32.mrb[0].mxu0
  %v98 = vpop.f32.mrb[0].mxu0
  %v99 = vadd.f32 %v43, %v98
  %v100 = vpop.f32.mrb[0].mxu0
  %101 = vdwg.mxu0
  %v102 = vpack.c.bf16 %v28, %v27
  %v103 = vld [vmem:[%s3] sm:$0xf]
  %v104 = vld [vmem:[%s3 + $0x4] sm:$0xf]
  %v105 = vld [vmem:[%s3 + $0x8] sm:$0xf]
  %v106 = vld [vmem:[%s3 + $0xc] sm:$0xf]
  %v107 = vld [vmem:[%s5] sm:$0x1]
  %v109 = vlaneseq
  %v110 = vshrl.u32 %v109, 7
  %v111 = vsub.s32 0, %v110
  %v112 = vrot.slane %v107, %v111
  %v118 = vunpack.c.l.b16 %v103
  %v119 = vunpack.c.l.b16 %v104
  %v120 = vunpack.c.l.b16 %v105
  %v121 = vunpack.c.l.b16 %v106
  %v122 = vpack.c.b16 %v119, %v118
  %v123 = vpack.c.b16 %v121, %v120
  %v127 = vsel %vm57, %v102, 0
  %129 = vmatprep.subr.bf16.mxu0 0
  %130 = vmatpush1.bf16.msra.mxu0 %v122
  %131 = vmatprep.subr.bf16.mxu0 0
  %132 = vmatpush1.bf16.msra.mxu0 %v123
  %133 = vmatprep.subr.bf16.mxu0 0
  %134 = vmatpush1.bf16.msra.mxu0 0
  %135 = vmatprep.subr.bf16.mxu0 0
  %136 = vmatpush1.bf16.msra.mxu0 0
  %137 = vmatprep.subr.bf16.mxu0 0
  %138 = vmatpush1.bf16.msra.mxu0 0
  %139 = vmatprep.subr.bf16.mxu0 0
  %140 = vmatpush1.bf16.msra.mxu0 0
  %141 = vmatprep.subr.bf16.mxu0 0
  %142 = vmatpush1.bf16.msra.mxu0 0
  %143 = vmatprep.subr.bf16.mxu0 0
  %144 = vmatpush1.bf16.msra.mxu0 0
  %145 = vmatprep.subr.bf16.mxu0 0
  %146 = vmatpush1.bf16.msra.mxu0 0
  %147 = vmatprep.subr.bf16.mxu0 0
  %148 = vmatpush1.bf16.msra.mxu0 0
  %149 = vmatprep.subr.bf16.mxu0 0
  %150 = vmatpush1.bf16.msra.mxu0 0
  %151 = vmatprep.subr.bf16.mxu0 0
  %152 = vmatpush1.bf16.msra.mxu0 0
  %153 = vmatprep.subr.bf16.mxu0 0
  %154 = vmatpush1.bf16.msra.mxu0 0
  %155 = vmatprep.subr.bf16.mxu0 0
  %156 = vmatpush1.bf16.msra.mxu0 0
  %157 = vmatprep.subr.bf16.mxu0 0
  %158 = vmatpush1.bf16.msra.mxu0 0
  %159 = vmatprep.subr.bf16.mxu0 0
  %160 = vmatpush1.bf16.msra.mxu0 0
  %161 = vmatprep.mubr.bf16.mxu0 0
  %162 = vmatmul.mubr.bf16.gmra.mrb[0].mxu0 %v127
  %v163 = vpop.f32.mrb[0].mxu0
  %v164 = vadd.f32 %v112, %v163
  %v165 = vpop.f32.mrb[0].mxu0
  %v166 = vpop.f32.mrb[0].mxu0
  %v167 = vadd.f32 %v112, %v166
  %v168 = vpop.f32.mrb[0].mxu0
  %169 = vdwg.mxu0
  %v170 = vpack.c.bf16 %v99, %v96
  %v172 = vunpack.c.l.b16 %v170
  %v173 = vunpack.c.h.b16 %v170
  %v174 = vpack.c.b16 %v172, %v172
  %v175 = vpack.c.b16 %v173, %v173
  %vm178 = vcmask 257024
  %179 = vst.msk [vmem:[%s6] sm:$0xf] %vm178, %v174
  %180 = vst.msk [vmem:[%s6 + $0x4] sm:$0xf] %vm178, %v175
  %181 = vrot.lane.b32.xlu0 %v174, 96
  %v182 = vpop.permute.xlu0 %181
  %183 = vrot.lane.b32.xlu0 %v175, 96
  %v184 = vpop.permute.xlu0 %183
  %187 = vst.msk [vmem:[%s7] sm:$0xf] %vm178, %v182
  %188 = vst.msk [vmem:[%s7 + $0x4] sm:$0xf] %vm178, %v184
  %v189 = vpack.c.bf16 %v167, %v164
  %v191 = vunpack.c.l.b16 %v189
  %v192 = vunpack.c.h.b16 %v189
  %v193 = vpack.c.b16 %v191, %v191
  %v194 = vpack.c.b16 %v192, %v192
  %197 = vst.msk [vmem:[%s8] sm:$0xf] %vm178, %v193
  %198 = vst.msk [vmem:[%s8 + $0x4] sm:$0xf] %vm178, %v194
  // Predicated region
  $region26: #{transformer_encoder_layer.4} parent=0 // pred_check
    _
  $region27: #{transformer_encoder_layer.4} parent=0 // pred_check_branch
    %200 = sbr.rel (0) target = $region29
  $region28: #{transformer_encoder_layer.4} parent=0 // pred_region
    _
  $region29: #{transformer_encoder_layer.4} parent=0 // pred_fallthru
    _
  // Predicated region
  $region30: #{transformer_encoder_layer.4} parent=0 // pred_check
    _
  $region31: #{transformer_encoder_layer.4} parent=0 // pred_check_branch
    %202 = sbr.rel (0) target = $region33
  $region32: #{transformer_encoder_layer.4} parent=0 // pred_region
    _
  $region33: #{transformer_encoder_layer.4} parent=0 // pred_fallthru
    _
  // Predicated region
  $region34: #{transformer_encoder_layer.4} parent=0 // pred_check
    _
  $region35: #{transformer_encoder_layer.4} parent=0 // pred_check_branch
    %204 = sbr.rel (0) target = $region37
  $region36: #{transformer_encoder_layer.4} parent=0 // pred_region
    _
  $region37: #{transformer_encoder_layer.4} parent=0 // pred_fallthru
    _
  // Predicated region
  $region38: #{transformer_encoder_layer.4} parent=0 // pred_check
    _
  $region39: #{transformer_encoder_layer.4} parent=0 // pred_check_branch
    %206 = sbr.rel (0) target = $region41
  $region40: #{transformer_encoder_layer.4} parent=0 // pred_region
    _
  $region41: #{transformer_encoder_layer.4} parent=0 // pred_fallthru
    _
  // Predicated region
  $region42: #{transformer_encoder_layer.4} parent=0 // pred_check
    _
  $region43: #{transformer_encoder_layer.4} parent=0 // pred_check_branch
    %208 = sbr.rel (0) target = $region45
  $region44: #{transformer_encoder_layer.4} parent=0 // pred_region
    _
  $region45: #{transformer_encoder_layer.4} parent=0 // pred_fallthru
    _
  // Predicated region
  $region46: #{transformer_encoder_layer.4} parent=0 // pred_check
    _
  $region47: #{transformer_encoder_layer.4} parent=0 // pred_check_branch
    %210 = sbr.rel (0) target = $region49
  $region48: #{transformer_encoder_layer.4} parent=0 // pred_region
    _
  $region49: #{transformer_encoder_layer.4} parent=0 // pred_fallthru
    _

// kernel: transformer_encoder_layer.6
$region0: #{transformer_encoder_layer.6}
  #allocation0 [shape = 'u32[]', space=smem, size = 0x4, offset = 0x4, fixed_abs, tag = 'smem constant byte address 0x4 - core index']
  #allocation1 [shape = 'u32[144,128]{1,0:T(1,128)}', space=vmem, size = 0x12000, scoped, tag = 'internal scratch']
  %s0 = inlined_call_operand.vmem [shape: bf16[16,32], index: 0, kind: input, shape index: {}]
  %s1 = inlined_call_operand.vmem [shape: f32[16,32], index: 1, kind: input, shape index: {}]
  %s2 = inlined_call_operand.vmem [shape: bf16[32,32], index: 2, kind: input, shape index: {}]
  %s3 = inlined_call_operand.vmem [shape: f32[1,32], index: 3, kind: input, shape index: {}]
  %s4 = inlined_call_operand.vmem [shape: f32[1,32], index: 4, kind: input, shape index: {}]
  %s5 = inlined_call_operand.vmem [shape: f32[1,32], index: 5, kind: input, shape index: {}]
  %s6 = inlined_call_operand.vmem [shape: bf16[16,32], index: 6, kind: output, shape index: {}]
  %s7 = sld [smem:[#allocation0]]
  $region34: #{transformer_encoder_layer.6} parent=0
    _
  %s9 = ssub.s32 1, %s7
  %s10 = scalar_select 0, %s9, %s7
  // Predicated region
  $region2: #{transformer_encoder_layer.6} parent=0 // pred_check
    _
  $region3: #{transformer_encoder_layer.6} parent=0 // pred_check_branch
    %12 = sbr.rel (0) target = $region5
  $region4: #{transformer_encoder_layer.6} parent=0 // pred_region
    _
  $region5: #{transformer_encoder_layer.6} parent=0 // pred_fallthru
    _
  // Predicated region
  $region6: #{transformer_encoder_layer.6} parent=0 // pred_check
    _
  $region7: #{transformer_encoder_layer.6} parent=0 // pred_check_branch
    %14 = sbr.rel (0) target = $region9
  $region8: #{transformer_encoder_layer.6} parent=0 // pred_region
    _
  $region9: #{transformer_encoder_layer.6} parent=0 // pred_fallthru
    _
  // Predicated region
  $region10: #{transformer_encoder_layer.6} parent=0 // pred_check
    _
  $region11: #{transformer_encoder_layer.6} parent=0 // pred_check_branch
    %16 = sbr.rel (0) target = $region13
  $region12: #{transformer_encoder_layer.6} parent=0 // pred_region
    _
  $region13: #{transformer_encoder_layer.6} parent=0 // pred_fallthru
    _
  // Predicated region
  $region14: #{transformer_encoder_layer.6} parent=0 // pred_check
    _
  $region15: #{transformer_encoder_layer.6} parent=0 // pred_check_branch
    %18 = sbr.rel (0) target = $region17
  $region16: #{transformer_encoder_layer.6} parent=0 // pred_region
    _
  $region17: #{transformer_encoder_layer.6} parent=0 // pred_fallthru
    _
  // Predicated region
  $region18: #{transformer_encoder_layer.6} parent=0 // pred_check
    _
  $region19: #{transformer_encoder_layer.6} parent=0 // pred_check_branch
    %20 = sbr.rel (0) target = $region21
  $region20: #{transformer_encoder_layer.6} parent=0 // pred_region
    _
  $region21: #{transformer_encoder_layer.6} parent=0 // pred_fallthru
    _
  // Predicated region
  $region22: #{transformer_encoder_layer.6} parent=0 // pred_check
    _
  $region23: #{transformer_encoder_layer.6} parent=0 // pred_check_branch
    %22 = sbr.rel (0) target = $region25
  $region24: #{transformer_encoder_layer.6} parent=0 // pred_region
    _
  $region25: #{transformer_encoder_layer.6} parent=0 // pred_fallthru
    _
  %v24 = vld [vmem:[%s0] sm:$0xf]
  %v25 = vld [vmem:[%s0 + $0x4] sm:$0xf]
  %v26 = vld [vmem:[%s2] sm:$0xf]
  %v27 = vld [vmem:[%s2 + $0x4] sm:$0xf]
  %v28 = vld [vmem:[%s2 + $0x8] sm:$0xf]
  %v29 = vld [vmem:[%s2 + $0xc] sm:$0xf]
  %v30 = vld [vmem:[%s3] sm:$0x1]
  %v32 = vlaneseq
  %v33 = vshrl.u32 %v32, 7
  %v34 = vsub.s32 0, %v33
  %v35 = vrot.slane %v30, %v34
  %v39 = vunpack.c.l.b16 %v24
  %v40 = vunpack.c.l.b16 %v25
  %v41 = vpack.c.b16 %v40, %v39
  %v46 = vunpack.c.l.b16 %v26
  %v47 = vunpack.c.l.b16 %v27
  %v48 = vunpack.c.l.b16 %v28
  %v49 = vunpack.c.l.b16 %v29
  %v50 = vpack.c.b16 %v47, %v46
  %v51 = vpack.c.b16 %v49, %v48
  %vm54 = vcmask 261120
  %v56 = vsel %vm54, %v41, 0
  %58 = vmatprep.subr.bf16.mxu0 0
  %59 = vmatpush1.bf16.msra.mxu0 %v50
  %60 = vmatprep.subr.bf16.mxu0 0
  %61 = vmatpush1.bf16.msra.mxu0 %v51
  %62 = vmatprep.subr.bf16.mxu0 0
  %63 = vmatpush1.bf16.msra.mxu0 0
  %64 = vmatprep.subr.bf16.mxu0 0
  %65 = vmatpush1.bf16.msra.mxu0 0
  %66 = vmatprep.subr.bf16.mxu0 0
  %67 = vmatpush1.bf16.msra.mxu0 0
  %68 = vmatprep.subr.bf16.mxu0 0
  %69 = vmatpush1.bf16.msra.mxu0 0
  %70 = vmatprep.subr.bf16.mxu0 0
  %71 = vmatpush1.bf16.msra.mxu0 0
  %72 = vmatprep.subr.bf16.mxu0 0
  %73 = vmatpush1.bf16.msra.mxu0 0
  %74 = vmatprep.subr.bf16.mxu0 0
  %75 = vmatpush1.bf16.msra.mxu0 0
  %76 = vmatprep.subr.bf16.mxu0 0
  %77 = vmatpush1.bf16.msra.mxu0 0
  %78 = vmatprep.subr.bf16.mxu0 0
  %79 = vmatpush1.bf16.msra.mxu0 0
  %80 = vmatprep.subr.bf16.mxu0 0
  %81 = vmatpush1.bf16.msra.mxu0 0
  %82 = vmatprep.subr.bf16.mxu0 0
  %83 = vmatpush1.bf16.msra.mxu0 0
  %84 = vmatprep.subr.bf16.mxu0 0
  %85 = vmatpush1.bf16.msra.mxu0 0
  %86 = vmatprep.subr.bf16.mxu0 0
  %87 = vmatpush1.bf16.msra.mxu0 0
  %88 = vmatprep.subr.bf16.mxu0 0
  %89 = vmatpush1.bf16.msra.mxu0 0
  %90 = vmatprep.mubr.bf16.mxu0 0
  %91 = vmatmul.mubr.bf16.gmra.mrb[0].mxu0 %v56
  %v92 = vpop.f32.mrb[0].mxu0
  %v93 = vadd.f32 %v35, %v92
  %v94 = vpop.f32.mrb[0].mxu0
  %v95 = vpop.f32.mrb[0].mxu0
  %v96 = vadd.f32 %v35, %v95
  %v97 = vpop.f32.mrb[0].mxu0
  %98 = vdwg.mxu0
  %v99 = vld [vmem:[%s1] sm:$0xff]
  %v100 = vld [vmem:[%s1 + $0x8] sm:$0xff]
  %v101 = vadd.f32 %v99, %v93
  %v102 = vadd.f32 %v100, %v96
  %v103 = vsel %vm54, %v101, 0.0
  %104 = vadd.xlane.f32.xlu0 %v103
  %v105 = vpop.xlane.xlu0 %104
  %v106 = vsel %vm54, %v102, 0.0
  %107 = vadd.xlane.f32.xlu0 %v106
  %v108 = vpop.xlane.xlu0 %107
  %v109 = vrcp.pop 32.0
  %v110 = vmul.f32 %v105, %v109
  %v111 = vmul.f32 %v108, %v109
  %v112 = vsub.f32 %v101, %v110
  %v113 = vsub.f32 %v102, %v111
  %v114 = vmul.f32 %v112, %v112
  %v115 = vmul.f32 %v113, %v113
  %v116 = vsel %vm54, %v114, 0.0
  %117 = vadd.xlane.f32.xlu0 %v116
  %v118 = vpop.xlane.xlu0 %117
  %v119 = vsel %vm54, %v115, 0.0
  %120 = vadd.xlane.f32.xlu0 %v119
  %v121 = vpop.xlane.xlu0 %120
  %v122 = vmul.f32 %v118, %v109
  %v123 = vmul.f32 %v121, %v109
  %v124 = vadd.f32 %v122, 1e-05
  %v125 = vadd.f32 %v123, 1e-05
  %v126 = vrsqrt.pop %v124
  %v127 = vrsqrt.pop %v125
  %v128 = vmul.f32 %v112, %v126
  %v129 = vmul.f32 %v113, %v127
  %v130 = vld [vmem:[%s4] sm:$0x1]
  %v132 = vlaneseq
  %v133 = vshrl.u32 %v132, 7
  %v134 = vsub.s32 0, %v133
  %v135 = vrot.slane %v130, %v134
  %v137 = vmul.f32 %v128, %v135
  %v138 = vmul.f32 %v129, %v135
  %v139 = vld [vmem:[%s5] sm:$0x1]
  %v141 = vlaneseq
  %v142 = vshrl.u32 %v141, 7
  %v143 = vsub.s32 0, %v142
  %v144 = vrot.slane %v139, %v143
  %v146 = vadd.f32 %v137, %v144
  %v147 = vadd.f32 %v138, %v144
  %v148 = vpack.c.bf16 %v147, %v146
  %v150 = vunpack.c.l.b16 %v148
  %v151 = vunpack.c.h.b16 %v148
  %v152 = vpack.c.b16 %v150, %v150
  %v153 = vpack.c.b16 %v151, %v151
  %vm156 = vcmask 257024
  %157 = vst.msk [vmem:[%s6] sm:$0xf] %vm156, %v152
  %158 = vst.msk [vmem:[%s6 + $0x4] sm:$0xf] %vm156, %v153
  // Predicated region
  $region26: #{transformer_encoder_layer.6} parent=0 // pred_check
    _
  $region27: #{transformer_encoder_layer.6} parent=0 // pred_check_branch
    %160 = sbr.rel (0) target = $region29
  $region28: #{transformer_encoder_layer.6} parent=0 // pred_region
    _
  $region29: #{transformer_encoder_layer.6} parent=0 // pred_fallthru
    _
  // Predicated region
  $region30: #{transformer_encoder_layer.6} parent=0 // pred_check
    _
  $region31: #{transformer_encoder_layer.6} parent=0 // pred_check_branch
    %162 = sbr.rel (0) target = $region33
  $region32: #{transformer_encoder_layer.6} parent=0 // pred_region
    _
  $region33: #{transformer_encoder_layer.6} parent=0 // pred_fallthru
    _

// kernel: transformer_encoder_layer.7
$region0: #{transformer_encoder_layer.7}
  #allocation0 [shape = 'u32[]', space=smem, size = 0x4, offset = 0x4, fixed_abs, tag = 'smem constant byte address 0x4 - core index']
  #allocation1 [shape = 'u32[144,128]{1,0:T(1,128)}', space=vmem, size = 0x12000, scoped, tag = 'internal scratch']
  #allocation2 [shape = 'f32[16,32]{1,0:T(8,128)}', space=vmem, size = 0x2000, scoped, tag = 'scratch operand']
  %s0 = inlined_call_operand.vmem [shape: bf16[16,32], index: 0, kind: input, shape index: {}]
  %s1 = inlined_call_operand.vmem [shape: bf16[32,64], index: 1, kind: input, shape index: {}]
  %s2 = inlined_call_operand.vmem [shape: f32[1,64], index: 2, kind: input, shape index: {}]
  %s3 = inlined_call_operand.vmem [shape: bf16[64,32], index: 3, kind: input, shape index: {}]
  %s4 = inlined_call_operand.vmem [shape: f32[1,32], index: 4, kind: input, shape index: {}]
  %s5 = inlined_call_operand.vmem [shape: f32[1,32], index: 5, kind: input, shape index: {}]
  %s6 = inlined_call_operand.vmem [shape: f32[1,32], index: 6, kind: input, shape index: {}]
  %s7 = inlined_call_operand.vmem [shape: f32[16,32], index: 7, kind: output, shape index: {}]
  %s8 = sld [smem:[#allocation0]]
  $region46: #{transformer_encoder_layer.7} parent=0
    _
  %s10 = ssub.s32 1, %s8
  %s11 = scalar_select 0, %s10, %s8
  // Predicated region
  $region2: #{transformer_encoder_layer.7} parent=0 // pred_check
    _
  $region3: #{transformer_encoder_layer.7} parent=0 // pred_check_branch
    %13 = sbr.rel (0) target = $region5
  $region4: #{transformer_encoder_layer.7} parent=0 // pred_region
    _
  $region5: #{transformer_encoder_layer.7} parent=0 // pred_fallthru
    _
  // Predicated region
  $region6: #{transformer_encoder_layer.7} parent=0 // pred_check
    _
  $region7: #{transformer_encoder_layer.7} parent=0 // pred_check_branch
    %15 = sbr.rel (0) target = $region9
  $region8: #{transformer_encoder_layer.7} parent=0 // pred_region
    _
  $region9: #{transformer_encoder_layer.7} parent=0 // pred_fallthru
    _
  // Predicated region
  $region10: #{transformer_encoder_layer.7} parent=0 // pred_check
    _
  $region11: #{transformer_encoder_layer.7} parent=0 // pred_check_branch
    %17 = sbr.rel (0) target = $region13
  $region12: #{transformer_encoder_layer.7} parent=0 // pred_region
    _
  $region13: #{transformer_encoder_layer.7} parent=0 // pred_fallthru
    _
  // Predicated region
  $region14: #{transformer_encoder_layer.7} parent=0 // pred_check
    _
  $region15: #{transformer_encoder_layer.7} parent=0 // pred_check_branch
    %19 = sbr.rel (0) target = $region17
  $region16: #{transformer_encoder_layer.7} parent=0 // pred_region
    _
  $region17: #{transformer_encoder_layer.7} parent=0 // pred_fallthru
    _
  // Predicated region
  $region18: #{transformer_encoder_layer.7} parent=0 // pred_check
    _
  $region19: #{transformer_encoder_layer.7} parent=0 // pred_check_branch
    %21 = sbr.rel (0) target = $region21
  $region20: #{transformer_encoder_layer.7} parent=0 // pred_region
    _
  $region21: #{transformer_encoder_layer.7} parent=0 // pred_fallthru
    _
  // Predicated region
  $region22: #{transformer_encoder_layer.7} parent=0 // pred_check
    _
  $region23: #{transformer_encoder_layer.7} parent=0 // pred_check_branch
    %23 = sbr.rel (0) target = $region25
  $region24: #{transformer_encoder_layer.7} parent=0 // pred_region
    _
  $region25: #{transformer_encoder_layer.7} parent=0 // pred_fallthru
    _
  // Predicated region
  $region26: #{transformer_encoder_layer.7} parent=0 // pred_check
    _
  $region27: #{transformer_encoder_layer.7} parent=0 // pred_check_branch
    %25 = sbr.rel (0) target = $region29
  $region28: #{transformer_encoder_layer.7} parent=0 // pred_region
    _
  $region29: #{transformer_encoder_layer.7} parent=0 // pred_fallthru
    _
  %p27 = scmp.eq.s32.totalorder 0, 0
  // Predicated region
  $region30: #{transformer_encoder_layer.7} parent=0 // pred_check
    %p28 = pneg %p27
  $region31: #{transformer_encoder_layer.7} parent=0 // pred_check_branch
    %30 = sbr.rel (%p28) target = $region33
  $region32: #{transformer_encoder_layer.7} parent=0 // pred_region
    %vm31 = vcmask 261120
    %32 = vst.msk [vmem:[#allocation2] sm:$0xff] %vm31, 0.0
    %33 = vst.msk [vmem:[#allocation2 + $0x8] sm:$0xff] %vm31, 0.0
  $region33: #{transformer_encoder_layer.7} parent=0 // pred_fallthru
    _
  %v34 = vld [vmem:[%s0] sm:$0xf]
  %v35 = vld [vmem:[%s0 + $0x4] sm:$0xf]
  %v36 = vld [vmem:[%s1] sm:$0xf]
  %v37 = vld [vmem:[%s1 + $0x4] sm:$0xf]
  %v38 = vld [vmem:[%s1 + $0x8] sm:$0xf]
  %v39 = vld [vmem:[%s1 + $0xc] sm:$0xf]
  %v40 = vld [vmem:[%s2] sm:$0x1]
  %v42 = vlaneseq
  %v43 = vshrl.u32 %v42, 7
  %v44 = vsub.s32 0, %v43
  %v45 = vrot.slane %v40, %v44
  %v49 = vunpack.c.l.b16 %v34
  %v50 = vunpack.c.l.b16 %v35
  %v51 = vpack.c.b16 %v50, %v49
  %v56 = vunpack.c.l.b16 %v36
  %v57 = vunpack.c.l.b16 %v37
  %v58 = vunpack.c.l.b16 %v38
  %v59 = vunpack.c.l.b16 %v39
  %v60 = vpack.c.b16 %v57, %v56
  %v61 = vpack.c.b16 %v59, %v58
  %vm64 = vcmask 261120
  %v66 = vsel %vm64, %v51, 0
  %68 = vmatprep.subr.bf16.mxu0 0
  %69 = vmatpush1.bf16.msra.mxu0 %v60
  %70 = vmatprep.subr.bf16.mxu0 0
  %71 = vmatpush1.bf16.msra.mxu0 %v61
  %72 = vmatprep.subr.bf16.mxu0 0
  %73 = vmatpush1.bf16.msra.mxu0 0
  %74 = vmatprep.subr.bf16.mxu0 0
  %75 = vmatpush1.bf16.msra.mxu0 0
  %76 = vmatprep.subr.bf16.mxu0 0
  %77 = vmatpush1.bf16.msra.mxu0 0
  %78 = vmatprep.subr.bf16.mxu0 0
  %79 = vmatpush1.bf16.msra.mxu0 0
  %80 = vmatprep.subr.bf16.mxu0 0
  %81 = vmatpush1.bf16.msra.mxu0 0
  %82 = vmatprep.subr.bf16.mxu0 0
  %83 = vmatpush1.bf16.msra.mxu0 0
  %84 = vmatprep.subr.bf16.mxu0 0
  %85 = vmatpush1.bf16.msra.mxu0 0
  %86 = vmatprep.subr.bf16.mxu0 0
  %87 = vmatpush1.bf16.msra.mxu0 0
  %88 = vmatprep.subr.bf16.mxu0 0
  %89 = vmatpush1.bf16.msra.mxu0 0
  %90 = vmatprep.subr.bf16.mxu0 0
  %91 = vmatpush1.bf16.msra.mxu0 0
  %92 = vmatprep.subr.bf16.mxu0 0
  %93 = vmatpush1.bf16.msra.mxu0 0
  %94 = vmatprep.subr.bf16.mxu0 0
  %95 = vmatpush1.bf16.msra.mxu0 0
  %96 = vmatprep.subr.bf16.mxu0 0
  %97 = vmatpush1.bf16.msra.mxu0 0
  %98 = vmatprep.subr.bf16.mxu0 0
  %99 = vmatpush1.bf16.msra.mxu0 0
  %100 = vmatprep.mubr.bf16.mxu0 0
  %101 = vmatmul.mubr.bf16.gmra.mrb[0].mxu0 %v66
  %v102 = vpop.f32.mrb[0].mxu0
  %v103 = vadd.f32 %v45, %v102
  %v104 = vpop.f32.mrb[0].mxu0
  %v105 = vpop.f32.mrb[0].mxu0
  %v106 = vadd.f32 %v45, %v105
  %v107 = vpop.f32.mrb[0].mxu0
  %108 = vdwg.mxu0
  %v109 = vmax.f32 %v103, 0.0
  %v110 = vmax.f32 %v106, 0.0
  %v111 = vld [vmem:[#allocation2] sm:$0xff]
  %v112 = vld [vmem:[#allocation2 + $0x8] sm:$0xff]
  %v113 = vpack.c.bf16 %v110, %v109
  %v114 = vld [vmem:[%s3] sm:$0xf]
  %v115 = vld [vmem:[%s3 + $0x4] sm:$0xf]
  %v116 = vld [vmem:[%s3 + $0x8] sm:$0xf]
  %v117 = vld [vmem:[%s3 + $0xc] sm:$0xf]
  %v118 = vld [vmem:[%s3 + $0x10] sm:$0xf]
  %v119 = vld [vmem:[%s3 + $0x14] sm:$0xf]
  %v120 = vld [vmem:[%s3 + $0x18] sm:$0xf]
  %v121 = vld [vmem:[%s3 + $0x1c] sm:$0xf]
  %v130 = vunpack.c.l.b16 %v114
  %v131 = vunpack.c.l.b16 %v115
  %v132 = vunpack.c.l.b16 %v116
  %v133 = vunpack.c.l.b16 %v117
  %v134 = vunpack.c.l.b16 %v118
  %v135 = vunpack.c.l.b16 %v119
  %v136 = vunpack.c.l.b16 %v120
  %v137 = vunpack.c.l.b16 %v121
  %v138 = vpack.c.b16 %v131, %v130
  %v139 = vpack.c.b16 %v133, %v132
  %v140 = vpack.c.b16 %v135, %v134
  %v141 = vpack.c.b16 %v137, %v136
  %vm146 = vcmask 523264
  %v148 = vsel %vm146, %v113, 0
  %150 = vmatprep.subr.bf16.mxu0 0
  %151 = vmatpush1.bf16.msra.mxu0 %v138
  %152 = vmatprep.subr.bf16.mxu0 0
  %153 = vmatpush1.bf16.msra.mxu0 %v139
  %154 = vmatprep.subr.bf16.mxu0 0
  %155 = vmatpush1.bf16.msra.mxu0 %v140
  %156 = vmatprep.subr.bf16.mxu0 0
  %157 = vmatpush1.bf16.msra.mxu0 %v141
  %158 = vmatprep.subr.bf16.mxu0 0
  %159 = vmatpush1.bf16.msra.mxu0 0
  %160 = vmatprep.subr.bf16.mxu0 0
  %161 = vmatpush1.bf16.msra.mxu0 0
  %162 = vmatprep.subr.bf16.mxu0 0
  %163 = vmatpush1.bf16.msra.mxu0 0
  %164 = vmatprep.subr.bf16.mxu0 0
  %165 = vmatpush1.bf16.msra.mxu0 0
  %166 = vmatprep.subr.bf16.mxu0 0
  %167 = vmatpush1.bf16.msra.mxu0 0
  %168 = vmatprep.subr.bf16.mxu0 0
  %169 = vmatpush1.bf16.msra.mxu0 0
  %170 = vmatprep.subr.bf16.mxu0 0
  %171 = vmatpush1.bf16.msra.mxu0 0
  %172 = vmatprep.subr.bf16.mxu0 0
  %173 = vmatpush1.bf16.msra.mxu0 0
  %174 = vmatprep.subr.bf16.mxu0 0
  %175 = vmatpush1.bf16.msra.mxu0 0
  %176 = vmatprep.subr.bf16.mxu0 0
  %177 = vmatpush1.bf16.msra.mxu0 0
  %178 = vmatprep.subr.bf16.mxu0 0
  %179 = vmatpush1.bf16.msra.mxu0 0
  %180 = vmatprep.subr.bf16.mxu0 0
  %181 = vmatpush1.bf16.msra.mxu0 0
  %182 = vmatprep.mubr.bf16.mxu0 0
  %183 = vmatmul.mubr.bf16.gmra.mrb[0].mxu0 %v148
  %v184 = vpop.f32.mrb[0].mxu0
  %v185 = vadd.f32 0.0, %v184
  %v186 = vpop.f32.mrb[0].mxu0
  %v187 = vpop.f32.mrb[0].mxu0
  %v188 = vadd.f32 0.0, %v187
  %v189 = vpop.f32.mrb[0].mxu0
  %190 = vdwg.mxu0
  %v191 = vadd.f32 %v111, %v185
  %v192 = vadd.f32 %v112, %v188
  %193 = vst.msk [vmem:[#allocation2] sm:$0xff] %vm64, %v191
  %194 = vst.msk [vmem:[#allocation2 + $0x8] sm:$0xff] %vm64, %v192
  // Predicated region
  $region34: #{transformer_encoder_layer.7} parent=0 // pred_check
    %p195 = pneg %p27
  $region35: #{transformer_encoder_layer.7} parent=0 // pred_check_branch
    %197 = sbr.rel (%p195) target = $region37
  $region36: #{transformer_encoder_layer.7} parent=0 // pred_region
    %v198 = vunpack.c.l.bf16 %v34
    %v199 = vunpack.c.l.bf16 %v35
    %v200 = vld [vmem:[#allocation2] sm:$0xff]
    %v201 = vld [vmem:[#allocation2 + $0x8] sm:$0xff]
    %v202 = vadd.f32 %v198, %v200
    %v203 = vadd.f32 %v199, %v201
    %v204 = vld [vmem:[%s4] sm:$0x1]
    %v206 = vlaneseq
    %v207 = vshrl.u32 %v206, 7
    %v208 = vsub.s32 0, %v207
    %v209 = vrot.slane %v204, %v208
    %v211 = vadd.f32 %v202, %v209
    %v212 = vadd.f32 %v203, %v209
    %v213 = vsel %vm64, %v211, 0.0
    %214 = vadd.xlane.f32.xlu0 %v213
    %v215 = vpop.xlane.xlu0 %214
    %v216 = vsel %vm64, %v212, 0.0
    %217 = vadd.xlane.f32.xlu0 %v216
    %v218 = vpop.xlane.xlu0 %217
    %v219 = vrcp.pop 32.0
    %v220 = vmul.f32 %v215, %v219
    %v221 = vmul.f32 %v218, %v219
    %v222 = vsub.f32 %v211, %v220
    %v223 = vsub.f32 %v212, %v221
    %v224 = vmul.f32 %v222, %v222
    %v225 = vmul.f32 %v223, %v223
    %v226 = vsel %vm64, %v224, 0.0
    %227 = vadd.xlane.f32.xlu0 %v226
    %v228 = vpop.xlane.xlu0 %227
    %v229 = vsel %vm64, %v225, 0.0
    %230 = vadd.xlane.f32.xlu0 %v229
    %v231 = vpop.xlane.xlu0 %230
    %v232 = vmul.f32 %v228, %v219
    %v233 = vmul.f32 %v231, %v219
    %v234 = vadd.f32 %v232, 1e-05
    %v235 = vadd.f32 %v233, 1e-05
    %v236 = vrsqrt.pop %v234
    %v237 = vrsqrt.pop %v235
    %v238 = vmul.f32 %v222, %v236
    %v239 = vmul.f32 %v223, %v237
    %v240 = vld [vmem:[%s5] sm:$0x1]
    %v242 = vlaneseq
    %v243 = vshrl.u32 %v242, 7
    %v244 = vsub.s32 0, %v243
    %v245 = vrot.slane %v240, %v244
    %v247 = vmul.f32 %v238, %v245
    %v248 = vmul.f32 %v239, %v245
    %v249 = vld [vmem:[%s6] sm:$0x1]
    %v251 = vlaneseq
    %v252 = vshrl.u32 %v251, 7
    %v253 = vsub.s32 0, %v252
    %v254 = vrot.slane %v249, %v253
    %v256 = vadd.f32 %v247, %v254
    %v257 = vadd.f32 %v248, %v254
    %258 = vst.msk [vmem:[%s7] sm:$0xff] %vm64, %v256
    %259 = vst.msk [vmem:[%s7 + $0x8] sm:$0xff] %vm64, %v257
  $region37: #{transformer_encoder_layer.7} parent=0 // pred_fallthru
    _
  // Predicated region
  $region38: #{transformer_encoder_layer.7} parent=0 // pred_check
    _
  $region39: #{transformer_encoder_layer.7} parent=0 // pred_check_branch
    %261 = sbr.rel (0) target = $region41
  $region40: #{transformer_encoder_layer.7} parent=0 // pred_region
    _
  $region41: #{transformer_encoder_layer.7} parent=0 // pred_fallthru
    _
  // Predicated region
  $region42: #{transformer_encoder_layer.7} parent=0 // pred_check
    _
  $region43: #{transformer_encoder_layer.7} parent=0 // pred_check_branch
    %263 = sbr.rel (0) target = $region45
  $region44: #{transformer_encoder_layer.7} parent=0 // pred_region
    _
  $region45: #{transformer_encoder_layer.7} parent=0 // pred_fallthru
    _

// kernel: transformer_encoder_layer.5
$region0: #{transformer_encoder_layer.5}
  #allocation0 [shape = 'u32[]', space=smem, size = 0x4, offset = 0x4, fixed_abs, tag = 'smem constant byte address 0x4 - core index']
  #allocation1 [shape = 'u32[144,128]{1,0:T(1,128)}', space=vmem, size = 0x12000, scoped, tag = 'internal scratch']
  #allocation2 [shape = 'f32[4,8,1]{2,1,0:T(8,128)}', space=vmem, size = 0x4000, scoped, tag = 'scratch operand']
  #allocation3 [shape = 'f32[4,8,1]{2,1,0:T(8,128)}', space=vmem, size = 0x4000, scoped, tag = 'scratch operand']
  #allocation4 [shape = 'f32[4,8,8]{2,1,0:T(8,128)}', space=vmem, size = 0x4000, scoped, tag = 'scratch operand']
  %s0 = inlined_call_operand.vmem [shape: f32[8,8], index: 0, kind: input, shape index: {}]
  %s1 = inlined_call_operand.vmem [shape: f32[2,1,8], index: 1, kind: input, shape index: {}]
  %s2 = inlined_call_operand.vmem [shape: bf16[2,8,32], index: 2, kind: input, shape index: {}]
  %s3 = inlined_call_operand.vmem [shape: bf16[2,8,32], index: 3, kind: input, shape index: {}]
  %s4 = inlined_call_operand.vmem [shape: bf16[2,8,32], index: 4, kind: input, shape index: {}]
  %s5 = inlined_call_operand.vmem [shape: bf16[2,8,32], index: 5, kind: output, shape index: {}]
  %s6 = sld [smem:[#allocation0]]
  $region61: #{transformer_encoder_layer.5} parent=0
    _
  %s8 = ssub.s32 1, %s6
  %s9 = scalar_select 0, %s8, %s6
  loop: start=0, step=1, limit=4
  $region2: #{transformer_encoder_layer.5} parent=0 // loop_pre_header
    _
  $region3: #{transformer_encoder_layer.5} parent=0 // loop_header
    %s11 = sphi 0, %s15
    %p12 = scmp.ge.s32.totalorder %s11, 4
    %s18 = sphi 0, %s37
    %s19 = sphi 0, %s33
    %s20 = sphi 0, %s29
    %s21 = sphi 0, %s18
    %s22 = sphi 0, %s19
    %s23 = sphi 0, %s20
    %s24 = sphi 0, %s21
    %s25 = sphi 0, %s22
    %s26 = sphi 0, %s23
    %s42 = sphi 0, %s44
    %s45 = sphi 0, %s42
    %s46 = sphi 0, %s45
    %s62 = sphi 0, %s46
    %s70 = sphi 0, %s72
    %s73 = sphi 0, %s70
    %s74 = sphi 0, %s73
    %s90 = sphi 0, %s74
    %s98 = sphi 0, %s100
    %s101 = sphi 0, %s98
    %s102 = sphi 0, %s101
    %s118 = sphi 0, %s102
    %s126 = sphi 0, %s128
    %s129 = sphi 0, %s126
    %s130 = sphi 0, %s129
    %s146 = sphi 0, %s130
    %s154 = sphi 0, %s156
    %s157 = sphi 0, %s154
    %s158 = sphi 0, %s157
    %s174 = sphi 0, %s158
    %s182 = sphi 0, %s184
    %s185 = sphi 0, %s182
    %s186 = sphi 0, %s185
    %s202 = sphi 0, %s186
  $region4: #{transformer_encoder_layer.5} parent=0 // loop_header_branch
    %14 = sbr.rel (%p12) target = $region8
  $region5: #{transformer_encoder_layer.5} parent=0 // loop_body
    %s16 = ssub.s32 %s11, 1
    %s17 = ssub.s32 %s11, 2
    %s27 = sadd.s32 1, %s20
    %p28 = scmp.ge.s32.totalorder %s27, 1
    %s29 = scalar_select %p28, 0, %s27
    %s30 = sadd.s32 1, %s19
    %s31 = scalar_select %p28, %s30, %s19
    %p32 = scmp.ge.s32.totalorder %s31, 1
    %s33 = scalar_select %p32, 0, %s31
    %s34 = sadd.s32 1, %s18
    %s35 = scalar_select %p32, %s34, %s18
    %p36 = scmp.ge.s32.totalorder %s35, 2
    %s37 = scalar_select %p36, 0, %s35
    %s38 = ssub.s32 %s19, %s33
    %s39 = ssub.s32 %s20, %s29
    %s40 = sor.u32 %s38, %s39
    %p41 = scmp.eq.s32.totalorder %s40, 0
    %s43 = sadd.s32 %s42, 1
    %s44 = scalar_select %p41, %s42, %s43
    %p47 = pneg %p41
    %p48 = scmp.eq.s32.totalorder %s11, 1
    %p49 = por %p47, %p48
    %p50 = scmp.ne.s32.totalorder %s42, %s45
    %p51 = scmp.eq.s32.totalorder %s11, 0
    %p52 = por %p50, %p51
    %p53 = scmp.ne.s32.totalorder %s42, %s45
    %p54 = scmp.eq.s32.totalorder %s16, 1
    %p55 = por %p53, %p54
    %p56 = scmp.ne.s32.totalorder %s45, %s46
    %p57 = scmp.eq.s32.totalorder %s16, 0
    %p58 = por %p56, %p57
    %p59 = scmp.ne.s32.totalorder %s45, %s46
    %p60 = scmp.eq.s32.totalorder %s17, 1
    %p61 = por %p59, %p60
    %p63 = scmp.ne.s32.totalorder %s46, %s62
    %p64 = scmp.eq.s32.totalorder %s17, 0
    %p65 = por %p63, %p64
    %s66 = ssub.s32 %s18, %s37
    %s67 = ssub.s32 %s20, %s29
    %s68 = sor.u32 %s66, %s67
    %p69 = scmp.eq.s32.totalorder %s68, 0
    %s71 = sadd.s32 %s70, 1
    %s72 = scalar_select %p69, %s70, %s71
    %p75 = pneg %p69
    %p76 = scmp.eq.s32.totalorder %s11, 1
    %p77 = por %p75, %p76
    %p78 = scmp.ne.s32.totalorder %s70, %s73
    %p79 = scmp.eq.s32.totalorder %s11, 0
    %p80 = por %p78, %p79
    %p81 = scmp.ne.s32.totalorder %s70, %s73
    %p82 = scmp.eq.s32.totalorder %s16, 1
    %p83 = por %p81, %p82
    %p84 = scmp.ne.s32.totalorder %s73, %s74
    %p85 = scmp.eq.s32.totalorder %s16, 0
    %p86 = por %p84, %p85
    %p87 = scmp.ne.s32.totalorder %s73, %s74
    %p88 = scmp.eq.s32.totalorder %s17, 1
    %p89 = por %p87, %p88
    %p91 = scmp.ne.s32.totalorder %s74, %s90
    %p92 = scmp.eq.s32.totalorder %s17, 0
    %p93 = por %p91, %p92
    %s94 = ssub.s32 %s18, %s37
    %s95 = ssub.s32 %s19, %s33
    %s96 = sor.u32 %s94, %s95
    %p97 = scmp.eq.s32.totalorder %s96, 0
    %s99 = sadd.s32 %s98, 1
    %s100 = scalar_select %p97, %s98, %s99
    %p103 = pneg %p97
    %p104 = scmp.eq.s32.totalorder %s11, 1
    %p105 = por %p103, %p104
    %p106 = scmp.ne.s32.totalorder %s98, %s101
    %p107 = scmp.eq.s32.totalorder %s11, 0
    %p108 = por %p106, %p107
    %p109 = scmp.ne.s32.totalorder %s98, %s101
    %p110 = scmp.eq.s32.totalorder %s16, 1
    %p111 = por %p109, %p110
    %p112 = scmp.ne.s32.totalorder %s101, %s102
    %p113 = scmp.eq.s32.totalorder %s16, 0
    %p114 = por %p112, %p113
    %p115 = scmp.ne.s32.totalorder %s101, %s102
    %p116 = scmp.eq.s32.totalorder %s17, 1
    %p117 = por %p115, %p116
    %p119 = scmp.ne.s32.totalorder %s102, %s118
    %p120 = scmp.eq.s32.totalorder %s17, 0
    %p121 = por %p119, %p120
    %s122 = ssub.s32 %s18, %s37
    %s123 = ssub.s32 %s20, %s29
    %s124 = sor.u32 %s122, %s123
    %p125 = scmp.eq.s32.totalorder %s124, 0
    %s127 = sadd.s32 %s126, 1
    %s128 = scalar_select %p125, %s126, %s127
    %p131 = pneg %p125
    %p132 = scmp.eq.s32.totalorder %s11, 1
    %p133 = por %p131, %p132
    %p134 = scmp.ne.s32.totalorder %s126, %s129
    %p135 = scmp.eq.s32.totalorder %s11, 0
    %p136 = por %p134, %p135
    %p137 = scmp.ne.s32.totalorder %s126, %s129
    %p138 = scmp.eq.s32.totalorder %s16, 1
    %p139 = por %p137, %p138
    %p140 = scmp.ne.s32.totalorder %s129, %s130
    %p141 = scmp.eq.s32.totalorder %s16, 0
    %p142 = por %p140, %p141
    %p143 = scmp.ne.s32.totalorder %s129, %s130
    %p144 = scmp.eq.s32.totalorder %s17, 1
    %p145 = por %p143, %p144
    %p147 = scmp.ne.s32.totalorder %s130, %s146
    %p148 = scmp.eq.s32.totalorder %s17, 0
    %p149 = por %p147, %p148
    %s150 = ssub.s32 %s18, %s37
    %s151 = ssub.s32 %s20, %s29
    %s152 = sor.u32 %s150, %s151
    %p153 = scmp.eq.s32.totalorder %s152, 0
    %s155 = sadd.s32 %s154, 1
    %s156 = scalar_select %p153, %s154, %s155
    %p159 = pneg %p153
    %p160 = scmp.eq.s32.totalorder %s11, 1
    %p161 = por %p159, %p160
    %p162 = scmp.ne.s32.totalorder %s154, %s157
    %p163 = scmp.eq.s32.totalorder %s11, 0
    %p164 = por %p162, %p163
    %p165 = scmp.ne.s32.totalorder %s154, %s157
    %p166 = scmp.eq.s32.totalorder %s16, 1
    %p167 = por %p165, %p166
    %p168 = scmp.ne.s32.totalorder %s157, %s158
    %p169 = scmp.eq.s32.totalorder %s16, 0
    %p170 = por %p168, %p169
    %p171 = scmp.ne.s32.totalorder %s157, %s158
    %p172 = scmp.eq.s32.totalorder %s17, 1
    %p173 = por %p171, %p172
    %p175 = scmp.ne.s32.totalorder %s158, %s174
    %p176 = scmp.eq.s32.totalorder %s17, 0
    %p177 = por %p175, %p176
    %s178 = ssub.s32 %s18, %s37
    %s179 = ssub.s32 %s19, %s33
    %s180 = sor.u32 %s178, %s179
    %p181 = scmp.eq.s32.totalorder %s180, 0
    %s183 = sadd.s32 %s182, 1
    %s184 = scalar_select %p181, %s182, %s183
    %p187 = pneg %p181
    %p188 = scmp.eq.s32.totalorder %s11, 1
    %p189 = por %p187, %p188
    %p190 = scmp.ne.s32.totalorder %s182, %s185
    %p191 = scmp.eq.s32.totalorder %s11, 0
    %p192 = por %p190, %p191
    %p193 = scmp.ne.s32.totalorder %s182, %s185
    %p194 = scmp.eq.s32.totalorder %s16, 1
    %p195 = por %p193, %p194
    %p196 = scmp.ne.s32.totalorder %s185, %s186
    %p197 = scmp.eq.s32.totalorder %s16, 0
    %p198 = por %p196, %p197
    %p199 = scmp.ne.s32.totalorder %s185, %s186
    %p200 = scmp.eq.s32.totalorder %s17, 1
    %p201 = por %p199, %p200
    %p203 = scmp.ne.s32.totalorder %s186, %s202
    %p204 = scmp.eq.s32.totalorder %s17, 0
    %p205 = por %p203, %p204
    %p206 = scmp.le.s32.totalorder 1, %s11
    %p207 = scmp.lt.s32.totalorder %s11, 3
    %p208 = pnand %p206, %p207
    %p209 = pneg %p208
    // Predicated region
    $region9: #{transformer_encoder_layer.5} parent=5 // pred_check
      _
    $region10: #{transformer_encoder_layer.5} parent=5 // pred_check_branch
      %211 = sbr.rel (%p208) target = $region12
    $region11: #{transformer_encoder_layer.5} parent=5 // pred_region
      %s212 = ssub.s32 %s11, 1
      // Predicated region
      $region13: #{transformer_encoder_layer.5} parent=11 // pred_check
        %p213 = pneg %p58
      $region14: #{transformer_encoder_layer.5} parent=11 // pred_check_branch
        %215 = sbr.rel (%p213) target = $region16
      $region15: #{transformer_encoder_layer.5} parent=11 // pred_region
        %p216 = scmp.lt.s32.totalorder %s22, 0
        %s217 = scalar_select %p216, %s22, 0
        %p218 = scmp.lt.s32.totalorder %s23, 0
        %s219 = scalar_select %p218, %s23, 0
        %s220 = sadd.s32 %s219, %s217
        %s221 = smul.addr %s220, 8
        %s222 = scalar_lea.vmem %s0, %s221
      $region16: #{transformer_encoder_layer.5} parent=11 // pred_fallthru
        _
    $region12: #{transformer_encoder_layer.5} parent=5 // pred_fallthru
      _
    %p223 = scmp.lt.s32.totalorder %s11, 2
    // Predicated region
    $region17: #{transformer_encoder_layer.5} parent=5 // pred_check
      %p224 = pneg %p223
    $region18: #{transformer_encoder_layer.5} parent=5 // pred_check_branch
      %226 = sbr.rel (%p224) target = $region20
    $region19: #{transformer_encoder_layer.5} parent=5 // pred_region
      // Predicated region
      $region21: #{transformer_encoder_layer.5} parent=19 // pred_check
        %p227 = pneg %p80
      $region22: #{transformer_encoder_layer.5} parent=19 // pred_check_branch
        %229 = sbr.rel (%p227) target = $region24
      $region23: #{transformer_encoder_layer.5} parent=19 // pred_region
        %p230 = scmp.lt.s32.totalorder %s18, 1
        %s231 = scalar_select %p230, %s18, 1
        %p232 = scmp.lt.s32.totalorder %s20, 0
        %s233 = scalar_select %p232, %s20, 0
        %s234 = sadd.s32 %s233, %s231
        %s235 = scalar_lea.vmem %s1, %s234
      $region24: #{transformer_encoder_layer.5} parent=19 // pred_fallthru
        _
      // Predicated region
      $region25: #{transformer_encoder_layer.5} parent=19 // pred_check
        %p236 = pneg %p108
      $region26: #{transformer_encoder_layer.5} parent=19 // pred_check_branch
        %238 = sbr.rel (%p236) target = $region28
      $region27: #{transformer_encoder_layer.5} parent=19 // pred_region
        %p239 = scmp.lt.s32.totalorder %s18, 1
        %s240 = scalar_select %p239, %s18, 1
        %p241 = scmp.lt.s32.totalorder %s19, 0
        %s242 = scalar_select %p241, %s19, 0
        %s243 = sadd.s32 %s242, %s240
        %s244 = smul.addr %s243, 4
        %s245 = scalar_lea.vmem %s2, %s244
      $region28: #{transformer_encoder_layer.5} parent=19 // pred_fallthru
        _
      // Predicated region
      $region29: #{transformer_encoder_layer.5} parent=19 // pred_check
        %p246 = pneg %p136
      $region30: #{transformer_encoder_layer.5} parent=19 // pred_check_branch
        %248 = sbr.rel (%p246) target = $region32
      $region31: #{transformer_encoder_layer.5} parent=19 // pred_region
        %p249 = scmp.lt.s32.totalorder %s18, 1
        %s250 = scalar_select %p249, %s18, 1
        %p251 = scmp.lt.s32.totalorder %s20, 0
        %s252 = scalar_select %p251, %s20, 0
        %s253 = sadd.s32 %s252, %s250
        %s254 = smul.addr %s253, 4
        %s255 = scalar_lea.vmem %s3, %s254
      $region32: #{transformer_encoder_layer.5} parent=19 // pred_fallthru
        _
      // Predicated region
      $region33: #{transformer_encoder_layer.5} parent=19 // pred_check
        %p256 = pneg %p164
      $region34: #{transformer_encoder_layer.5} parent=19 // pred_check_branch
        %258 = sbr.rel (%p256) target = $region36
      $region35: #{transformer_encoder_layer.5} parent=19 // pred_region
        %p259 = scmp.lt.s32.totalorder %s18, 1
        %s260 = scalar_select %p259, %s18, 1
        %p261 = scmp.lt.s32.totalorder %s20, 0
        %s262 = scalar_select %p261, %s20, 0
        %s263 = sadd.s32 %s262, %s260
        %s264 = smul.addr %s263, 4
        %s265 = scalar_lea.vmem %s4, %s264
      $region36: #{transformer_encoder_layer.5} parent=19 // pred_fallthru
        _
    $region20: #{transformer_encoder_layer.5} parent=5 // pred_fallthru
      _
    %p266 = scmp.le.s32.totalorder 1, %s11
    %p267 = scmp.lt.s32.totalorder %s11, 3
    %p268 = pnand %p266, %p267
    %p269 = pneg %p268
    // Predicated region
    $region37: #{transformer_encoder_layer.5} parent=5 // pred_check
      _
    $region38: #{transformer_encoder_layer.5} parent=5 // pred_check_branch
      %271 = sbr.rel (%p268) target = $region40
    $region39: #{transformer_encoder_layer.5} parent=5 // pred_region
      %s272 = ssub.s32 %s11, 1
      %p273 = scmp.lt.s32.totalorder %s22, 0
      %s274 = scalar_select %p273, %s22, 0
      %p275 = scmp.lt.s32.totalorder %s23, 0
      %s276 = scalar_select %p275, %s23, 0
      %s277 = sadd.s32 %s276, %s274
      %s278 = smul.addr %s277, 8
      %s279 = scalar_lea.vmem %s0, %s278
      %p280 = pneg %p58
      %p281 = pneg %p55
      %p282 = scmp.lt.s32.totalorder %s21, 1
      %s283 = scalar_select %p282, %s21, 1
      %p284 = scmp.lt.s32.totalorder %s23, 0
      %s285 = scalar_select %p284, %s23, 0
      %s286 = sadd.s32 %s285, %s283
      %s287 = scalar_lea.vmem %s1, %s286
      %p288 = pneg %p86
      %p289 = pneg %p83
      %p290 = scmp.lt.s32.totalorder %s21, 1
      %s291 = scalar_select %p290, %s21, 1
      %p292 = scmp.lt.s32.totalorder %s22, 0
      %s293 = scalar_select %p292, %s22, 0
      %s294 = sadd.s32 %s293, %s291
      %s295 = smul.addr %s294, 4
      %s296 = scalar_lea.vmem %s2, %s295
      %p297 = pneg %p114
      %p298 = pneg %p111
      %p299 = scmp.lt.s32.totalorder %s21, 1
      %s300 = scalar_select %p299, %s21, 1
      %p301 = scmp.lt.s32.totalorder %s23, 0
      %s302 = scalar_select %p301, %s23, 0
      %s303 = sadd.s32 %s302, %s300
      %s304 = smul.addr %s303, 4
      %s305 = scalar_lea.vmem %s3, %s304
      %p306 = pneg %p142
      %p307 = pneg %p139
      %p308 = scmp.lt.s32.totalorder %s21, 1
      %s309 = scalar_select %p308, %s21, 1
      %p310 = scmp.lt.s32.totalorder %s23, 0
      %s311 = scalar_select %p310, %s23, 0
      %s312 = sadd.s32 %s311, %s309
      %s313 = smul.addr %s312, 4
      %s314 = scalar_lea.vmem %s4, %s313
      %p315 = pneg %p170
      %p316 = pneg %p167
      %p317 = pneg %p198
      %p318 = pneg %p195
      %p319 = scmp.lt.s32.totalorder %s21, 1
      %s320 = scalar_select %p319, %s21, 1
      %p321 = scmp.lt.s32.totalorder %s22, 0
      %s322 = scalar_select %p321, %s22, 0
      %s323 = sadd.s32 %s322, %s320
      %s324 = smul.addr %s323, 4
      %s325 = scalar_lea.vmem %s5, %s324
      %p326 = scmp.lt.s32.totalorder %s22, 0
      %s327 = scalar_select %p326, %s22, 0
      %p328 = scmp.lt.s32.totalorder %s23, 0
      %s329 = scalar_select %p328, %s23, 0
      %s330 = sadd.s32 %s329, %s327
      %s331 = smul.addr %s330, 8
      %s332 = scalar_lea.vmem %s0, %s331
      %p333 = scmp.lt.s32.totalorder %s21, 1
      %s334 = scalar_select %p333, %s21, 1
      %p335 = scmp.lt.s32.totalorder %s23, 0
      %s336 = scalar_select %p335, %s23, 0
      %s337 = sadd.s32 %s336, %s334
      %s338 = scalar_lea.vmem %s1, %s337
      %p339 = scmp.lt.s32.totalorder %s21, 1
      %s340 = scalar_select %p339, %s21, 1
      %p341 = scmp.lt.s32.totalorder %s22, 0
      %s342 = scalar_select %p341, %s22, 0
      %s343 = sadd.s32 %s342, %s340
      %s344 = smul.addr %s343, 4
      %s345 = scalar_lea.vmem %s2, %s344
      %p346 = scmp.lt.s32.totalorder %s21, 1
      %s347 = scalar_select %p346, %s21, 1
      %p348 = scmp.lt.s32.totalorder %s23, 0
      %s349 = scalar_select %p348, %s23, 0
      %s350 = sadd.s32 %s349, %s347
      %s351 = smul.addr %s350, 4
      %s352 = scalar_lea.vmem %s3, %s351
      %p353 = scmp.lt.s32.totalorder %s21, 1
      %s354 = scalar_select %p353, %s21, 1
      %p355 = scmp.lt.s32.totalorder %s23, 0
      %s356 = scalar_select %p355, %s23, 0
      %s357 = sadd.s32 %s356, %s354
      %s358 = smul.addr %s357, 4
      %s359 = scalar_lea.vmem %s4, %s358
      %p360 = scmp.lt.s32.totalorder %s21, 1
      %s361 = scalar_select %p360, %s21, 1
      %p362 = scmp.lt.s32.totalorder %s22, 0
      %s363 = scalar_select %p362, %s22, 0
      %s364 = sadd.s32 %s363, %s361
      %s365 = smul.addr %s364, 4
      %s366 = scalar_lea.vmem %s5, %s365
      %p368 = scmp.eq.s32.totalorder %s23, 0
      // Predicated region
      $region41: #{transformer_encoder_layer.5} parent=39 // pred_check
        %p369 = pneg %p368
      $region42: #{transformer_encoder_layer.5} parent=39 // pred_check_branch
        %371 = sbr.rel (%p369) target = $region44
      $region43: #{transformer_encoder_layer.5} parent=39 // pred_region
        %vm372 = vcmask 7168
        %373 = vst.msk [vmem:[#allocation2] sm:$0xff] %vm372, -inf
        %374 = vst.msk [vmem:[#allocation2 + $0x8] sm:$0xff] %vm372, -inf
        %375 = vst.msk [vmem:[#allocation2 + $0x10] sm:$0xff] %vm372, -inf
        %376 = vst.msk [vmem:[#allocation2 + $0x18] sm:$0xff] %vm372, -inf
        %377 = vst.msk [vmem:[#allocation3] sm:$0xff] %vm372, 0.0
        %378 = vst.msk [vmem:[#allocation3 + $0x8] sm:$0xff] %vm372, 0.0
        %379 = vst.msk [vmem:[#allocation3 + $0x10] sm:$0xff] %vm372, 0.0
        %380 = vst.msk [vmem:[#allocation3 + $0x18] sm:$0xff] %vm372, 0.0
        %vm381 = vcmask 64512
        %382 = vst.msk [vmem:[#allocation4] sm:$0xff] %vm381, 0.0
        %383 = vst.msk [vmem:[#allocation4 + $0x8] sm:$0xff] %vm381, 0.0
        %384 = vst.msk [vmem:[#allocation4 + $0x10] sm:$0xff] %vm381, 0.0
        %385 = vst.msk [vmem:[#allocation4 + $0x18] sm:$0xff] %vm381, 0.0
      $region44: #{transformer_encoder_layer.5} parent=39 // pred_fallthru
        _
      %v386 = vld [vmem:[%s345] sm:$0xf]
      %v387 = vld [vmem:[%s352] sm:$0xf]
      %v388 = vld [vmem:[%s359] sm:$0xf]
      %v389 = vld [vmem:[%s332] sm:$0xff]
      %v390 = vld [vmem:[%s338] sm:$0x1]
      %v392 = vlaneseq
      %v393 = vshrl.u32 %v392, 7
      %v394 = vsub.s32 0, %v393
      %v395 = vrot.slane %v390, %v394
      %v397 = vadd.f32 %v389, %v395
      %vm398 = vcmask 64512
      %v400 = vsel %vm398, %v386, 0
      %v403 = vsel %vm398, %v387, 0
      %405 = vmatprep.subr.bf16.mxu0 0
      %406 = vmatpush1.bf16.xpose.msra.mxu0 %v403
      %407 = vmatprep.subr.bf16.mxu0 0
      %408 = vmatpush1.bf16.xpose.msra.mxu0 0
      %409 = vmatprep.subr.bf16.mxu0 0
      %410 = vmatpush1.bf16.xpose.msra.mxu0 0
      %411 = vmatprep.subr.bf16.mxu0 0
      %412 = vmatpush1.bf16.xpose.msra.mxu0 0
      %413 = vmatprep.subr.bf16.mxu0 0
      %414 = vmatpush1.bf16.xpose.msra.mxu0 0
      %415 = vmatprep.subr.bf16.mxu0 0
      %416 = vmatpush1.bf16.xpose.msra.mxu0 0
      %417 = vmatprep.subr.bf16.mxu0 0
      %418 = vmatpush1.bf16.xpose.msra.mxu0 0
      %419 = vmatprep.subr.bf16.mxu0 0
      %420 = vmatpush1.bf16.xpose.msra.mxu0 0
      %421 = vmatprep.subr.bf16.mxu0 0
      %422 = vmatpush1.bf16.xpose.msra.mxu0 0
      %423 = vmatprep.subr.bf16.mxu0 0
      %424 = vmatpush1.bf16.xpose.msra.mxu0 0
      %425 = vmatprep.subr.bf16.mxu0 0
      %426 = vmatpush1.bf16.xpose.msra.mxu0 0
      %427 = vmatprep.subr.bf16.mxu0 0
      %428 = vmatpush1.bf16.xpose.msra.mxu0 0
      %429 = vmatprep.subr.bf16.mxu0 0
      %430 = vmatpush1.bf16.xpose.msra.mxu0 0
      %431 = vmatprep.subr.bf16.mxu0 0
      %432 = vmatpush1.bf16.xpose.msra.mxu0 0
      %433 = vmatprep.subr.bf16.mxu0 0
      %434 = vmatpush1.bf16.xpose.msra.mxu0 0
      %435 = vmatprep.subr.bf16.mxu0 0
      %436 = vmatpush1.bf16.xpose.msra.mxu0 0
      %437 = vmatprep.mubr.bf16.mxu0 0
      %438 = vmatmul.mubr.bf16.gmra.mrb[0].mxu0 %v400
      %v439 = vpop.f32.mrb[0].mxu0
      %v440 = vadd.f32 %v397, %v439
      %v441 = vpop.f32.mrb[0].mxu0
      %v442 = vpop.f32.mrb[0].mxu0
      %v443 = vpop.f32.mrb[0].mxu0
      %444 = vdwg.mxu0
      %v445 = vld [vmem:[#allocation2] sm:$0xff]
      %v446 = vsel %vm398, %v440, -inf
      %447 = vmax.xlane.f32.xlu0 %v446
      %v448 = vpop.xlane.xlu0 %447
      %v449 = vmax.f32 %v445, %v448
      %v450 = vsub.f32 %v445, %v449
      %v451 = vmul.f32 %v450, 1.442695
      %v452 = vpow.pop %v451
      %454 = vset.pattern.permute.xlu0 0
      %455 = vperm.xlu0 %454, %v449
      %v456 = vpop.permute.xlu0 %455
      %v458 = vsub.f32 %v440, %v456
      %v459 = vmul.f32 %v458, 1.442695
      %v460 = vpow.pop %v459
      %v461 = vld [vmem:[#allocation3] sm:$0xff]
      %v462 = vmul.f32 %v452, %v461
      %v463 = vsel %vm398, %v460, 0.0
      %464 = vadd.xlane.f32.xlu0 %v463
      %v465 = vpop.xlane.xlu0 %464
      %v466 = vadd.f32 %v462, %v465
      %vm467 = vcmask 7168
      %468 = vst.msk [vmem:[#allocation3] sm:$0xff] %vm467, %v466
      %v469 = vld [vmem:[#allocation4] sm:$0xff]
      %471 = vset.pattern.permute.xlu0 0
      %472 = vperm.xlu0 %471, %v452
      %v473 = vpop.permute.xlu0 %472
      %v475 = vmul.f32 %v473, %v469
      %v476 = vpack.c.bf16 %v460, %v460
      %v478 = vsel %vm398, %v476, 0
      %vm480 = vcmask 1043456
      %v482 = vsel %vm480, %v388, 0
      %484 = vmatprep.subr.bf16.mxu0 0
      %485 = vmatpush1.bf16.msra.mxu0 %v482
      %486 = vmatprep.subr.bf16.mxu0 0
      %487 = vmatpush1.bf16.msra.mxu0 0
      %488 = vmatprep.subr.bf16.mxu0 0
      %489 = vmatpush1.bf16.msra.mxu0 0
      %490 = vmatprep.subr.bf16.mxu0 0
      %491 = vmatpush1.bf16.msra.mxu0 0
      %492 = vmatprep.subr.bf16.mxu0 0
      %493 = vmatpush1.bf16.msra.mxu0 0
      %494 = vmatprep.subr.bf16.mxu0 0
      %495 = vmatpush1.bf16.msra.mxu0 0
      %496 = vmatprep.subr.bf16.mxu0 0
      %497 = vmatpush1.bf16.msra.mxu0 0
      %498 = vmatprep.subr.bf16.mxu0 0
      %499 = vmatpush1.bf16.msra.mxu0 0
      %500 = vmatprep.subr.bf16.mxu0 0
      %501 = vmatpush1.bf16.msra.mxu0 0
      %502 = vmatprep.subr.bf16.mxu0 0
      %503 = vmatpush1.bf16.msra.mxu0 0
      %504 = vmatprep.subr.bf16.mxu0 0
      %505 = vmatpush1.bf16.msra.mxu0 0
      %506 = vmatprep.subr.bf16.mxu0 0
      %507 = vmatpush1.bf16.msra.mxu0 0
      %508 = vmatprep.subr.bf16.mxu0 0
      %509 = vmatpush1.bf16.msra.mxu0 0
      %510 = vmatprep.subr.bf16.mxu0 0
      %511 = vmatpush1.bf16.msra.mxu0 0
      %512 = vmatprep.subr.bf16.mxu0 0
      %513 = vmatpush1.bf16.msra.mxu0 0
      %514 = vmatprep.subr.bf16.mxu0 0
      %515 = vmatpush1.bf16.msra.mxu0 0
      %516 = vmatprep.mubr.bf16.mxu0 0
      %517 = vmatmul.mubr.bf16.gmra.mrb[0].mxu0 %v478
      %v518 = vpop.f32.mrb[0].mxu0
      %v519 = vadd.f32 0.0, %v518
      %v520 = vpop.f32.mrb[0].mxu0
      %v521 = vpop.f32.mrb[0].mxu0
      %v522 = vpop.f32.mrb[0].mxu0
      %523 = vdwg.mxu0
      %v524 = vadd.f32 %v475, %v519
      %525 = vst.msk [vmem:[#allocation4] sm:$0xff] %vm398, %v524
      %526 = vst.msk [vmem:[#allocation2] sm:$0xff] %vm467, %v449
      %v528 = vunpack.c.l.b16 %v386
      %v529 = vpack.c.b16 %v528, %v528
      %530 = vrot.lane.b32.xlu0 %v529, 120
      %v531 = vpop.permute.xlu0 %530
      %v533 = vunpack.c.l.b16 %v387
      %v534 = vpack.c.b16 %v533, %v533
      %535 = vrot.lane.b32.xlu0 %v534, 120
      %v536 = vpop.permute.xlu0 %535
      %v538 = vsel %vm398, %v531, 0
      %v541 = vsel %vm398, %v536, 0
      %543 = vmatprep.subr.bf16.mxu0 0
      %544 = vmatpush1.bf16.xpose.msra.mxu0 %v541
      %545 = vmatprep.subr.bf16.mxu0 0
      %546 = vmatpush1.bf16.xpose.msra.mxu0 0
      %547 = vmatprep.subr.bf16.mxu0 0
      %548 = vmatpush1.bf16.xpose.msra.mxu0 0
      %549 = vmatprep.subr.bf16.mxu0 0
      %550 = vmatpush1.bf16.xpose.msra.mxu0 0
      %551 = vmatprep.subr.bf16.mxu0 0
      %552 = vmatpush1.bf16.xpose.msra.mxu0 0
      %553 = vmatprep.subr.bf16.mxu0 0
      %554 = vmatpush1.bf16.xpose.msra.mxu0 0
      %555 = vmatprep.subr.bf16.mxu0 0
      %556 = vmatpush1.bf16.xpose.msra.mxu0 0
      %557 = vmatprep.subr.bf16.mxu0 0
      %558 = vmatpush1.bf16.xpose.msra.mxu0 0
      %559 = vmatprep.subr.bf16.mxu0 0
      %560 = vmatpush1.bf16.xpose.msra.mxu0 0
      %561 = vmatprep.subr.bf16.mxu0 0
      %562 = vmatpush1.bf16.xpose.msra.mxu0 0
      %563 = vmatprep.subr.bf16.mxu0 0
      %564 = vmatpush1.bf16.xpose.msra.mxu0 0
      %565 = vmatprep.subr.bf16.mxu0 0
      %566 = vmatpush1.bf16.xpose.msra.mxu0 0
      %567 = vmatprep.subr.bf16.mxu0 0
      %568 = vmatpush1.bf16.xpose.msra.mxu0 0
      %569 = vmatprep.subr.bf16.mxu0 0
      %570 = vmatpush1.bf16.xpose.msra.mxu0 0
      %571 = vmatprep.subr.bf16.mxu0 0
      %572 = vmatpush1.bf16.xpose.msra.mxu0 0
      %573 = vmatprep.subr.bf16.mxu0 0
      %574 = vmatpush1.bf16.xpose.msra.mxu0 0
      %575 = vmatprep.mubr.bf16.mxu0 0
      %576 = vmatmul.mubr.bf16.gmra.mrb[0].mxu0 %v538
      %v577 = vpop.f32.mrb[0].mxu0
      %v578 = vadd.f32 %v397, %v577
      %v579 = vpop.f32.mrb[0].mxu0
      %v580 = vpop.f32.mrb[0].mxu0
      %v581 = vpop.f32.mrb[0].mxu0
      %582 = vdwg.mxu0
      %s583 = scalar_lea.vmem [#allocation2], 8
      %v584 = vld [vmem:[%s583] sm:$0xff]
      %v585 = vsel %vm398, %v578, -inf
      %586 = vmax.xlane.f32.xlu0 %v585
      %v587 = vpop.xlane.xlu0 %586
      %v588 = vmax.f32 %v584, %v587
      %v589 = vsub.f32 %v584, %v588
      %v590 = vmul.f32 %v589, 1.442695
      %v591 = vpow.pop %v590
      %593 = vset.pattern.permute.xlu0 0
      %594 = vperm.xlu0 %593, %v588
      %v595 = vpop.permute.xlu0 %594
      %v597 = vsub.f32 %v578, %v595
      %v598 = vmul.f32 %v597, 1.442695
      %v599 = vpow.pop %v598
      %s600 = scalar_lea.vmem [#allocation3], 8
      %v601 = vld [vmem:[%s600] sm:$0xff]
      %v602 = vmul.f32 %v591, %v601
      %v603 = vsel %vm398, %v599, 0.0
      %604 = vadd.xlane.f32.xlu0 %v603
      %v605 = vpop.xlane.xlu0 %604
      %v606 = vadd.f32 %v602, %v605
      %607 = vst.msk [vmem:[%s600] sm:$0xff] %vm467, %v606
      %s608 = scalar_lea.vmem [#allocation4], 8
      %v609 = vld [vmem:[%s608] sm:$0xff]
      %611 = vset.pattern.permute.xlu0 0
      %612 = vperm.xlu0 %611, %v591
      %v613 = vpop.permute.xlu0 %612
      %v615 = vmul.f32 %v613, %v609
      %v616 = vpack.c.bf16 %v599, %v599
      %v618 = vunpack.c.l.b16 %v388
      %v619 = vpack.c.b16 %v618, %v618
      %620 = vrot.lane.b32.xlu0 %v619, 120
      %v621 = vpop.permute.xlu0 %620
      %v623 = vsel %vm398, %v616, 0
      %v626 = vsel %vm480, %v621, 0
      %628 = vmatprep.subr.bf16.mxu0 0
      %629 = vmatpush1.bf16.msra.mxu0 %v626
      %630 = vmatprep.subr.bf16.mxu0 0
      %631 = vmatpush1.bf16.msra.mxu0 0
      %632 = vmatprep.subr.bf16.mxu0 0
      %633 = vmatpush1.bf16.msra.mxu0 0
      %634 = vmatprep.subr.bf16.mxu0 0
      %635 = vmatpush1.bf16.msra.mxu0 0
      %636 = vmatprep.subr.bf16.mxu0 0
      %637 = vmatpush1.bf16.msra.mxu0 0
      %638 = vmatprep.subr.bf16.mxu0 0
      %639 = vmatpush1.bf16.msra.mxu0 0
      %640 = vmatprep.subr.bf16.mxu0 0
      %641 = vmatpush1.bf16.msra.mxu0 0
      %642 = vmatprep.subr.bf16.mxu0 0
      %643 = vmatpush1.bf16.msra.mxu0 0
      %644 = vmatprep.subr.bf16.mxu0 0
      %645 = vmatpush1.bf16.msra.mxu0 0
      %646 = vmatprep.subr.bf16.mxu0 0
      %647 = vmatpush1.bf16.msra.mxu0 0
      %648 = vmatprep.subr.bf16.mxu0 0
      %649 = vmatpush1.bf16.msra.mxu0 0
      %650 = vmatprep.subr.bf16.mxu0 0
      %651 = vmatpush1.bf16.msra.mxu0 0
      %652 = vmatprep.subr.bf16.mxu0 0
      %653 = vmatpush1.bf16.msra.mxu0 0
      %654 = vmatprep.subr.bf16.mxu0 0
      %655 = vmatpush1.bf16.msra.mxu0 0
      %656 = vmatprep.subr.bf16.mxu0 0
      %657 = vmatpush1.bf16.msra.mxu0 0
      %658 = vmatprep.subr.bf16.mxu0 0
      %659 = vmatpush1.bf16.msra.mxu0 0
      %660 = vmatprep.mubr.bf16.mxu0 0
      %661 = vmatmul.mubr.bf16.gmra.mrb[0].mxu0 %v623
      %v662 = vpop.f32.mrb[0].mxu0
      %v663 = vadd.f32 0.0, %v662
      %v664 = vpop.f32.mrb[0].mxu0
      %v665 = vpop.f32.mrb[0].mxu0
      %v666 = vpop.f32.mrb[0].mxu0
      %667 = vdwg.mxu0
      %v668 = vadd.f32 %v615, %v663
      %669 = vst.msk [vmem:[%s608] sm:$0xff] %vm398, %v668
      %670 = vst.msk [vmem:[%s583] sm:$0xff] %vm467, %v588
      %671 = vrot.lane.b32.xlu0 %v529, 112
      %v672 = vpop.permute.xlu0 %671
      %673 = vrot.lane.b32.xlu0 %v534, 112
      %v674 = vpop.permute.xlu0 %673
      %v676 = vsel %vm398, %v672, 0
      %v679 = vsel %vm398, %v674, 0
      %681 = vmatprep.subr.bf16.mxu0 0
      %682 = vmatpush1.bf16.xpose.msra.mxu0 %v679
      %683 = vmatprep.subr.bf16.mxu0 0
      %684 = vmatpush1.bf16.xpose.msra.mxu0 0
      %685 = vmatprep.subr.bf16.mxu0 0
      %686 = vmatpush1.bf16.xpose.msra.mxu0 0
      %687 = vmatprep.subr.bf16.mxu0 0
      %688 = vmatpush1.bf16.xpose.msra.mxu0 0
      %689 = vmatprep.subr.bf16.mxu0 0
      %690 = vmatpush1.bf16.xpose.msra.mxu0 0
      %691 = vmatprep.subr.bf16.mxu0 0
      %692 = vmatpush1.bf16.xpose.msra.mxu0 0
      %693 = vmatprep.subr.bf16.mxu0 0
      %694 = vmatpush1.bf16.xpose.msra.mxu0 0
      %695 = vmatprep.subr.bf16.mxu0 0
      %696 = vmatpush1.bf16.xpose.msra.mxu0 0
      %697 = vmatprep.subr.bf16.mxu0 0
      %698 = vmatpush1.bf16.xpose.msra.mxu0 0
      %699 = vmatprep.subr.bf16.mxu0 0
      %700 = vmatpush1.bf16.xpose.msra.mxu0 0
      %701 = vmatprep.subr.bf16.mxu0 0
      %702 = vmatpush1.bf16.xpose.msra.mxu0 0
      %703 = vmatprep.subr.bf16.mxu0 0
      %704 = vmatpush1.bf16.xpose.msra.mxu0 0
      %705 = vmatprep.subr.bf16.mxu0 0
      %706 = vmatpush1.bf16.xpose.msra.mxu0 0
      %707 = vmatprep.subr.bf16.mxu0 0
      %708 = vmatpush1.bf16.xpose.msra.mxu0 0
      %709 = vmatprep.subr.bf16.mxu0 0
      %710 = vmatpush1.bf16.xpose.msra.mxu0 0
      %711 = vmatprep.subr.bf16.mxu0 0
      %712 = vmatpush1.bf16.xpose.msra.mxu0 0
      %713 = vmatprep.mubr.bf16.mxu0 0
      %714 = vmatmul.mubr.bf16.gmra.mrb[0].mxu0 %v676
      %v715 = vpop.f32.mrb[0].mxu0
      %v716 = vadd.f32 %v397, %v715
      %v717 = vpop.f32.mrb[0].mxu0
      %v718 = vpop.f32.mrb[0].mxu0
      %v719 = vpop.f32.mrb[0].mxu0
      %720 = vdwg.mxu0
      %s721 = scalar_lea.vmem [#allocation2], 16
      %v722 = vld [vmem:[%s721] sm:$0xff]
      %v723 = vsel %vm398, %v716, -inf
      %724 = vmax.xlane.f32.xlu0 %v723
      %v725 = vpop.xlane.xlu0 %724
      %v726 = vmax.f32 %v722, %v725
      %v727 = vsub.f32 %v722, %v726
      %v728 = vmul.f32 %v727, 1.442695
      %v729 = vpow.pop %v728
      %731 = vset.pattern.permute.xlu0 0
      %732 = vperm.xlu0 %731, %v726
      %v733 = vpop.permute.xlu0 %732
      %v735 = vsub.f32 %v716, %v733
      %v736 = vmul.f32 %v735, 1.442695
      %v737 = vpow.pop %v736
      %s738 = scalar_lea.vmem [#allocation3], 16
      %v739 = vld [vmem:[%s738] sm:$0xff]
      %v740 = vmul.f32 %v729, %v739
      %v741 = vsel %vm398, %v737, 0.0
      %742 = vadd.xlane.f32.xlu0 %v741
      %v743 = vpop.xlane.xlu0 %742
      %v744 = vadd.f32 %v740, %v743
      %745 = vst.msk [vmem:[%s738] sm:$0xff] %vm467, %v744
      %s746 = scalar_lea.vmem [#allocation4], 16
      %v747 = vld [vmem:[%s746] sm:$0xff]
      %749 = vset.pattern.permute.xlu0 0
      %750 = vperm.xlu0 %749, %v729
      %v751 = vpop.permute.xlu0 %750
      %v753 = vmul.f32 %v751, %v747
      %v754 = vpack.c.bf16 %v737, %v737
      %755 = vrot.lane.b32.xlu0 %v619, 112
      %v756 = vpop.permute.xlu0 %755
      %v758 = vsel %vm398, %v754, 0
      %v761 = vsel %vm480, %v756, 0
      %763 = vmatprep.subr.bf16.mxu0 0
      %764 = vmatpush1.bf16.msra.mxu0 %v761
      %765 = vmatprep.subr.bf16.mxu0 0
      %766 = vmatpush1.bf16.msra.mxu0 0
      %767 = vmatprep.subr.bf16.mxu0 0
      %768 = vmatpush1.bf16.msra.mxu0 0
      %769 = vmatprep.subr.bf16.mxu0 0
      %770 = vmatpush1.bf16.msra.mxu0 0
      %771 = vmatprep.subr.bf16.mxu0 0
      %772 = vmatpush1.bf16.msra.mxu0 0
      %773 = vmatprep.subr.bf16.mxu0 0
      %774 = vmatpush1.bf16.msra.mxu0 0
      %775 = vmatprep.subr.bf16.mxu0 0
      %776 = vmatpush1.bf16.msra.mxu0 0
      %777 = vmatprep.subr.bf16.mxu0 0
      %778 = vmatpush1.bf16.msra.mxu0 0
      %779 = vmatprep.subr.bf16.mxu0 0
      %780 = vmatpush1.bf16.msra.mxu0 0
      %781 = vmatprep.subr.bf16.mxu0 0
      %782 = vmatpush1.bf16.msra.mxu0 0
      %783 = vmatprep.subr.bf16.mxu0 0
      %784 = vmatpush1.bf16.msra.mxu0 0
      %785 = vmatprep.subr.bf16.mxu0 0
      %786 = vmatpush1.bf16.msra.mxu0 0
      %787 = vmatprep.subr.bf16.mxu0 0
      %788 = vmatpush1.bf16.msra.mxu0 0
      %789 = vmatprep.subr.bf16.mxu0 0
      %790 = vmatpush1.bf16.msra.mxu0 0
      %791 = vmatprep.subr.bf16.mxu0 0
      %792 = vmatpush1.bf16.msra.mxu0 0
      %793 = vmatprep.subr.bf16.mxu0 0
      %794 = vmatpush1.bf16.msra.mxu0 0
      %795 = vmatprep.mubr.bf16.mxu0 0
      %796 = vmatmul.mubr.bf16.gmra.mrb[0].mxu0 %v758
      %v797 = vpop.f32.mrb[0].mxu0
      %v798 = vadd.f32 0.0, %v797
      %v799 = vpop.f32.mrb[0].mxu0
      %v800 = vpop.f32.mrb[0].mxu0
      %v801 = vpop.f32.mrb[0].mxu0
      %802 = vdwg.mxu0
      %v803 = vadd.f32 %v753, %v798
      %804 = vst.msk [vmem:[%s746] sm:$0xff] %vm398, %v803
      %805 = vst.msk [vmem:[%s721] sm:$0xff] %vm467, %v726
      %806 = vrot.lane.b32.xlu0 %v529, 104
      %v807 = vpop.permute.xlu0 %806
      %808 = vrot.lane.b32.xlu0 %v534, 104
      %v809 = vpop.permute.xlu0 %808
      %v811 = vsel %vm398, %v807, 0
      %v814 = vsel %vm398, %v809, 0
      %816 = vmatprep.subr.bf16.mxu0 0
      %817 = vmatpush1.bf16.xpose.msra.mxu0 %v814
      %818 = vmatprep.subr.bf16.mxu0 0
      %819 = vmatpush1.bf16.xpose.msra.mxu0 0
      %820 = vmatprep.subr.bf16.mxu0 0
      %821 = vmatpush1.bf16.xpose.msra.mxu0 0
      %822 = vmatprep.subr.bf16.mxu0 0
      %823 = vmatpush1.bf16.xpose.msra.mxu0 0
      %824 = vmatprep.subr.bf16.mxu0 0
      %825 = vmatpush1.bf16.xpose.msra.mxu0 0
      %826 = vmatprep.subr.bf16.mxu0 0
      %827 = vmatpush1.bf16.xpose.msra.mxu0 0
      %828 = vmatprep.subr.bf16.mxu0 0
      %829 = vmatpush1.bf16.xpose.msra.mxu0 0
      %830 = vmatprep.subr.bf16.mxu0 0
      %831 = vmatpush1.bf16.xpose.msra.mxu0 0
      %832 = vmatprep.subr.bf16.mxu0 0
      %833 = vmatpush1.bf16.xpose.msra.mxu0 0
      %834 = vmatprep.subr.bf16.mxu0 0
      %835 = vmatpush1.bf16.xpose.msra.mxu0 0
      %836 = vmatprep.subr.bf16.mxu0 0
      %837 = vmatpush1.bf16.xpose.msra.mxu0 0
      %838 = vmatprep.subr.bf16.mxu0 0
      %839 = vmatpush1.bf16.xpose.msra.mxu0 0
      %840 = vmatprep.subr.bf16.mxu0 0
      %841 = vmatpush1.bf16.xpose.msra.mxu0 0
      %842 = vmatprep.subr.bf16.mxu0 0
      %843 = vmatpush1.bf16.xpose.msra.mxu0 0
      %844 = vmatprep.subr.bf16.mxu0 0
      %845 = vmatpush1.bf16.xpose.msra.mxu0 0
      %846 = vmatprep.subr.bf16.mxu0 0
      %847 = vmatpush1.bf16.xpose.msra.mxu0 0
      %848 = vmatprep.mubr.bf16.mxu0 0
      %849 = vmatmul.mubr.bf16.gmra.mrb[0].mxu0 %v811
      %v850 = vpop.f32.mrb[0].mxu0
      %v851 = vadd.f32 %v397, %v850
      %v852 = vpop.f32.mrb[0].mxu0
      %v853 = vpop.f32.mrb[0].mxu0
      %v854 = vpop.f32.mrb[0].mxu0
      %855 = vdwg.mxu0
      %s856 = scalar_lea.vmem [#allocation2], 24
      %v857 = vld [vmem:[%s856] sm:$0xff]
      %v858 = vsel %vm398, %v851, -inf
      %859 = vmax.xlane.f32.xlu0 %v858
      %v860 = vpop.xlane.xlu0 %859
      %v861 = vmax.f32 %v857, %v860
      %v862 = vsub.f32 %v857, %v861
      %v863 = vmul.f32 %v862, 1.442695
      %v864 = vpow.pop %v863
      %866 = vset.pattern.permute.xlu0 0
      %867 = vperm.xlu0 %866, %v861
      %v868 = vpop.permute.xlu0 %867
      %v870 = vsub.f32 %v851, %v868
      %v871 = vmul.f32 %v870, 1.442695
      %v872 = vpow.pop %v871
      %s873 = scalar_lea.vmem [#allocation3], 24
      %v874 = vld [vmem:[%s873] sm:$0xff]
      %v875 = vmul.f32 %v864, %v874
      %v876 = vsel %vm398, %v872, 0.0
      %877 = vadd.xlane.f32.xlu0 %v876
      %v878 = vpop.xlane.xlu0 %877
      %v879 = vadd.f32 %v875, %v878
      %880 = vst.msk [vmem:[%s873] sm:$0xff] %vm467, %v879
      %s881 = scalar_lea.vmem [#allocation4], 24
      %v882 = vld [vmem:[%s881] sm:$0xff]
      %884 = vset.pattern.permute.xlu0 0
      %885 = vperm.xlu0 %884, %v864
      %v886 = vpop.permute.xlu0 %885
      %v888 = vmul.f32 %v886, %v882
      %v889 = vpack.c.bf16 %v872, %v872
      %890 = vrot.lane.b32.xlu0 %v619, 104
      %v891 = vpop.permute.xlu0 %890
      %v893 = vsel %vm398, %v889, 0
      %v896 = vsel %vm480, %v891, 0
      %898 = vmatprep.subr.bf16.mxu0 0
      %899 = vmatpush1.bf16.msra.mxu0 %v896
      %900 = vmatprep.subr.bf16.mxu0 0
      %901 = vmatpush1.bf16.msra.mxu0 0
      %902 = vmatprep.subr.bf16.mxu0 0
      %903 = vmatpush1.bf16.msra.mxu0 0
      %904 = vmatprep.subr.bf16.mxu0 0
      %905 = vmatpush1.bf16.msra.mxu0 0
      %906 = vmatprep.subr.bf16.mxu0 0
      %907 = vmatpush1.bf16.msra.mxu0 0
      %908 = vmatprep.subr.bf16.mxu0 0
      %909 = vmatpush1.bf16.msra.mxu0 0
      %910 = vmatprep.subr.bf16.mxu0 0
      %911 = vmatpush1.bf16.msra.mxu0 0
      %912 = vmatprep.subr.bf16.mxu0 0
      %913 = vmatpush1.bf16.msra.mxu0 0
      %914 = vmatprep.subr.bf16.mxu0 0
      %915 = vmatpush1.bf16.msra.mxu0 0
      %916 = vmatprep.subr.bf16.mxu0 0
      %917 = vmatpush1.bf16.msra.mxu0 0
      %918 = vmatprep.subr.bf16.mxu0 0
      %919 = vmatpush1.bf16.msra.mxu0 0
      %920 = vmatprep.subr.bf16.mxu0 0
      %921 = vmatpush1.bf16.msra.mxu0 0
      %922 = vmatprep.subr.bf16.mxu0 0
      %923 = vmatpush1.bf16.msra.mxu0 0
      %924 = vmatprep.subr.bf16.mxu0 0
      %925 = vmatpush1.bf16.msra.mxu0 0
      %926 = vmatprep.subr.bf16.mxu0 0
      %927 = vmatpush1.bf16.msra.mxu0 0
      %928 = vmatprep.subr.bf16.mxu0 0
      %929 = vmatpush1.bf16.msra.mxu0 0
      %930 = vmatprep.mubr.bf16.mxu0 0
      %931 = vmatmul.mubr.bf16.gmra.mrb[0].mxu0 %v893
      %v932 = vpop.f32.mrb[0].mxu0
      %v933 = vadd.f32 0.0, %v932
      %v934 = vpop.f32.mrb[0].mxu0
      %v935 = vpop.f32.mrb[0].mxu0
      %v936 = vpop.f32.mrb[0].mxu0
      %937 = vdwg.mxu0
      %v938 = vadd.f32 %v888, %v933
      %939 = vst.msk [vmem:[%s881] sm:$0xff] %vm398, %v938
      %940 = vst.msk [vmem:[%s856] sm:$0xff] %vm467, %v861
      // Predicated region
      $region45: #{transformer_encoder_layer.5} parent=39 // pred_check
        %p941 = pneg %p368
      $region46: #{transformer_encoder_layer.5} parent=39 // pred_check_branch
        %943 = sbr.rel (%p941) target = $region48
      $region47: #{transformer_encoder_layer.5} parent=39 // pred_region
        %v944 = vld [vmem:[#allocation3] sm:$0xff]
        %v945 = vmax.f32 %v944, 1e-20
        %v946 = vrcp.pop %v945
        %v947 = vld [vmem:[#allocation4] sm:$0xff]
        %949 = vset.pattern.permute.xlu0 0
        %950 = vperm.xlu0 %949, %v946
        %v951 = vpop.permute.xlu0 %950
        %v953 = vmul.f32 %v947, %v951
        %v954 = vpack.c.bf16 %v953, %v953
        %vm955 = vcmask 60416
        %956 = vst.msk [vmem:[%s366] sm:$0xf] %vm955, %v954
        %v957 = vld [vmem:[%s600] sm:$0xff]
        %v958 = vmax.f32 %v957, 1e-20
        %v959 = vrcp.pop %v958
        %v960 = vld [vmem:[%s608] sm:$0xff]
        %962 = vset.pattern.permute.xlu0 0
        %963 = vperm.xlu0 %962, %v959
        %v964 = vpop.permute.xlu0 %963
        %v966 = vmul.f32 %v960, %v964
        %v967 = vpack.c.bf16 %v966, %v966
        %v969 = vunpack.c.l.b16 %v967
        %v970 = vpack.c.b16 %v969, %v969
        %971 = vrot.lane.b32.xlu0 %v970, 8
        %v972 = vpop.permute.xlu0 %971
        %vm974 = vcmask 126016
        %975 = vst.msk [vmem:[%s366] sm:$0xf] %vm974, %v972
        %v976 = vld [vmem:[%s738] sm:$0xff]
        %v977 = vmax.f32 %v976, 1e-20
        %v978 = vrcp.pop %v977
        %v979 = vld [vmem:[%s746] sm:$0xff]
        %981 = vset.pattern.permute.xlu0 0
        %982 = vperm.xlu0 %981, %v978
        %v983 = vpop.permute.xlu0 %982
        %v985 = vmul.f32 %v979, %v983
        %v986 = vpack.c.bf16 %v985, %v985
        %v988 = vunpack.c.l.b16 %v986
        %v989 = vpack.c.b16 %v988, %v988
        %990 = vrot.lane.b32.xlu0 %v989, 16
        %v991 = vpop.permute.xlu0 %990
        %vm993 = vcmask 191616
        %994 = vst.msk [vmem:[%s366] sm:$0xf] %vm993, %v991
        %v995 = vld [vmem:[%s873] sm:$0xff]
        %v996 = vmax.f32 %v995, 1e-20
        %v997 = vrcp.pop %v996
        %v998 = vld [vmem:[%s881] sm:$0xff]
        %1000 = vset.pattern.permute.xlu0 0
        %1001 = vperm.xlu0 %1000, %v997
        %v1002 = vpop.permute.xlu0 %1001
        %v1004 = vmul.f32 %v998, %v1002
        %v1005 = vpack.c.bf16 %v1004, %v1004
        %v1007 = vunpack.c.l.b16 %v1005
        %v1008 = vpack.c.b16 %v1007, %v1007
        %1009 = vrot.lane.b32.xlu0 %v1008, 24
        %v1010 = vpop.permute.xlu0 %1009
        %vm1012 = vcmask 257216
        %1013 = vst.msk [vmem:[%s366] sm:$0xf] %vm1012, %v1010
      $region48: #{transformer_encoder_layer.5} parent=39 // pred_fallthru
        _
      %p1014 = scmp.lt.s32.totalorder %s21, 1
      %s1015 = scalar_select %p1014, %s21, 1
      %p1016 = scmp.lt.s32.totalorder %s22, 0
      %s1017 = scalar_select %p1016, %s22, 0
      %s1018 = sadd.s32 %s1017, %s1015
      %s1019 = smul.addr %s1018, 4
      %s1020 = scalar_lea.vmem %s5, %s1019
      // Predicated region
      $region49: #{transformer_encoder_layer.5} parent=39 // pred_check
        %p1021 = pneg %p195
      $region50: #{transformer_encoder_layer.5} parent=39 // pred_check_branch
        %1023 = sbr.rel (%p1021) target = $region52
      $region51: #{transformer_encoder_layer.5} parent=39 // pred_region
        _
      $region52: #{transformer_encoder_layer.5} parent=39 // pred_fallthru
        _
    $region40: #{transformer_encoder_layer.5} parent=5 // pred_fallthru
      _
    %p1024 = scmp.le.s32.totalorder 2, %s11
    // Predicated region
    $region53: #{transformer_encoder_layer.5} parent=5 // pred_check
      %p1025 = pneg %p1024
    $region54: #{transformer_encoder_layer.5} parent=5 // pred_check_branch
      %1027 = sbr.rel (%p1025) target = $region56
    $region55: #{transformer_encoder_layer.5} parent=5 // pred_region
      %s1028 = ssub.s32 %s11, 2
      // Predicated region
      $region57: #{transformer_encoder_layer.5} parent=55 // pred_check
        %p1029 = pneg %p201
      $region58: #{transformer_encoder_layer.5} parent=55 // pred_check_branch
        %1031 = sbr.rel (%p1029) target = $region60
      $region59: #{transformer_encoder_layer.5} parent=55 // pred_region
        %p1032 = scmp.lt.s32.totalorder %s24, 1
        %s1033 = scalar_select %p1032, %s24, 1
        %p1034 = scmp.lt.s32.totalorder %s25, 0
        %s1035 = scalar_select %p1034, %s25, 0
        %s1036 = sadd.s32 %s1035, %s1033
        %s1037 = smul.addr %s1036, 4
        %s1038 = scalar_lea.vmem %s5, %s1037
      $region60: #{transformer_encoder_layer.5} parent=55 // pred_fallthru
        _
    $region56: #{transformer_encoder_layer.5} parent=5 // pred_fallthru
      _
  $region6: #{transformer_encoder_layer.5} parent=0 // loop_footer
    %s15 = sadd.s32 1, %s11
  $region7: #{transformer_encoder_layer.5} parent=0 // loop_footer_branch
    %10 = sbr.rel target = $region3
  $region8: #{transformer_encoder_layer.5} parent=0 // loop_exit
    _

</llo_original>
